<compile_context>
chip_gen: v5e
topology: v5e:2x2
jax: 0.10.0
libtpu: 0.0.40
codegen_flags: <defaults>
</compile_context>

<pallas_src>
import jax
import jax.numpy as jnp
from jax.experimental import pallas as pl
from jax.experimental.pallas import tpu as pltpu

KH = KW = 5
PAD = 2
EPS = 1e-3


def dwconv_bn_kernel(x_ref, w_ref, g_ref, b_ref, o_ref, xpw_ref, acc_ref):
    # x_ref  : [N, H, W, TC]        unpadded NHWC channel slab
    # w_ref  : [KH, KW, TC]         depthwise taps for this slab
    # g_ref  : [1, TC], b_ref: [1, TC]
    # o_ref  : [N, H, W, TC]
    # xpw_ref: VMEM scratch [N, H, W+4, TC] f32 (width-only zero-padded copy)
    # acc_ref: VMEM scratch [N, H, W, TC]   f32 (conv output, pre-BN)
    N, H, W, TC = x_ref.shape

    # Build the width-padded input in VMEM (tiny scratch write, no HBM pad).
    zcol = jnp.zeros((N, H, PAD, TC), jnp.float32)
    xpw_ref[:, :, pl.ds(0, PAD), :] = zcol
    xpw_ref[:, :, pl.ds(W + PAD, PAD), :] = zcol
    xpw_ref[:, :, pl.ds(PAD, W), :] = x_ref[...].astype(jnp.float32)

    # Hoist weight load + per-tap broadcasts out of the loops.
    w_full = w_ref[...].astype(jnp.float32)  # [5, 5, TC]
    taps = [[w_full[kh, kw][None, None, None, :] for kw in range(KW)]
            for kh in range(KH)]

    # Depthwise 5x5 conv, one output row at a time.  Each patch is a static
    # Ref-window read; channels stay on lanes.  Height border rows are handled
    # by statically dropping taps that fall outside [0, H).
    s1 = jnp.zeros((1, 1, 1, TC), jnp.float32)
    s2 = jnp.zeros((1, 1, 1, TC), jnp.float32)
    for h in range(H):
        row = jnp.zeros((N, 1, W, TC), jnp.float32)
        for kh in range(KH):
            sh = h + kh - PAD
            if sh < 0 or sh >= H:
                continue                      # zero-padded row: contributes 0
            for kw in range(KW):
                patch = xpw_ref[:, pl.ds(sh, 1), pl.ds(kw, W), :]
                row = row + patch * taps[kh][kw]
        acc_ref[:, pl.ds(h, 1), :, :] = row
        # BatchNorm batch statistics accumulated on the fly (f32).
        s1 = s1 + jnp.sum(row, axis=(0, 1, 2), keepdims=True)
        s2 = s2 + jnp.sum(row * row, axis=(0, 1, 2), keepdims=True)

    # BatchNorm2d (training-mode biased batch stats over N,H,W) folded into a
    # single per-channel scale + shift: y = conv * scale + shift.
    cnt = jnp.float32(N * H * W)
    mean = s1 / cnt
    var = jnp.maximum(s2 / cnt - mean * mean, 0.0)
    inv = jax.lax.rsqrt(var + EPS)

    gamma = g_ref[...].astype(jnp.float32).reshape(1, 1, 1, TC)
    beta = b_ref[...].astype(jnp.float32).reshape(1, 1, 1, TC)
    scale = gamma * inv
    shift = beta - mean * scale
    o_ref[...] = (acc_ref[...] * scale + shift).astype(o_ref.dtype)


def _pick_channel_tile(C):
    """Largest channel tile (multiple of 128) giving an even tile count
    (v7x megacore), else fewest tiles, else the whole channel axis."""
    if C % 128 == 0:
        for nt in (2, 4, 8, 3, 6, 9):
            if C % nt == 0 and (C // nt) % 128 == 0:
                return C // nt
    return C


def conv_bn_forward(x_nchw, w_conv, gamma, beta):
    """x_nchw: [N,C,H,W]; w_conv: [C,1,5,5] (PyTorch depthwise layout)."""
    N, C, H, W = x_nchw.shape

    # NCHW -> NHWC with C landing on the lane axis ([N,C,HW] -> [N,HW,C]).
    x_nhwc = jnp.transpose(x_nchw.reshape(N, C, H * W), (0, 2, 1)).reshape(N, H, W, C)
    w_hwc = jnp.transpose(w_conv[:, 0, :, :], (1, 2, 0))  # [5,5,C]

    tc = _pick_channel_tile(C)
    num_tiles = C // tc

    out_nhwc = pl.pallas_call(
        dwconv_bn_kernel,
        out_shape=jax.ShapeDtypeStruct((N, H, W, C), x_nchw.dtype),
        grid=(num_tiles,),
        in_specs=[
            pl.BlockSpec((N, H, W, tc), lambda i: (0, 0, 0, i)),
            pl.BlockSpec((KH, KW, tc), lambda i: (0, 0, i)),
            pl.BlockSpec((1, tc), lambda i: (0, i)),
            pl.BlockSpec((1, tc), lambda i: (0, i)),
        ],
        out_specs=pl.BlockSpec((N, H, W, tc), lambda i: (0, 0, 0, i)),
        scratch_shapes=[
            pltpu.VMEM((N, H, W + 2 * PAD, tc), jnp.float32),
            pltpu.VMEM((N, H, W, tc), jnp.float32),
        ],
        compiler_params=pltpu.CompilerParams(dimension_semantics=("parallel",)),
    )(x_nhwc, w_hwc, gamma.reshape(1, C), beta.reshape(1, C))

    # TODO(synk): BatchNorm2d running_mean/running_var (momentum=0.01) buffer
    # updates are not emitted; only the module's forward output is produced.

    # NHWC -> NCHW (lane-dense transpose via [N,HW,C] -> [N,C,HW]).
    return jnp.transpose(out_nhwc.reshape(N, H * W, C), (0, 2, 1)).reshape(N, C, H, W)


def reference_forward(x_nchw, w_conv, gamma, beta):
    """Pure-JAX reference (not Pallas) for correctness checking."""
    N, C, H, W = x_nchw.shape
    y = jax.lax.conv_general_dilated(
        x_nchw, w_conv,
        window_strides=(1, 1), padding=((PAD, PAD), (PAD, PAD)),
        dimension_numbers=("NCHW", "OIHW", "NCHW"),
        feature_group_count=C,
    )
    mean = jnp.mean(y, axis=(0, 2, 3), keepdims=True)
    var = jnp.mean((y - mean) ** 2, axis=(0, 2, 3), keepdims=True)
    yn = (y - mean) * jax.lax.rsqrt(var + EPS)
    return yn * gamma.reshape(1, C, 1, 1) + beta.reshape(1, C, 1, 1)


if __name__ == "__main__":
    # Small shapes consistent with the module (original: [1, 2304, 7, 7]).
    N, C, H, W = 2, 256, 7, 7
    key = jax.random.PRNGKey(0)
    kx, kw = jax.random.split(key)

    x = jax.random.normal(kx, (N, C, H, W), dtype=jnp.float32)
    w_conv = jax.random.normal(kw, (C, 1, KH, KW), dtype=jnp.float32) * 0.1
    gamma = jnp.ones((C,), jnp.float32)   # BatchNorm2d default affine init
    beta = jnp.zeros((C,), jnp.float32)

    out = conv_bn_forward(x, w_conv, gamma, beta)
    out = jax.block_until_ready(out)

    ref = reference_forward(x, w_conv, gamma, beta)
    assert out.shape == (N, C, H, W)
    assert jnp.allclose(out, ref, atol=1e-4, rtol=1e-4), "mismatch vs reference"

    print("KERNEL_OK")
</pallas_src>

<mosaic_0001>
module attributes {stable_mosaic.version = 11 : i64} {
  func.func @dwconv_bn_kernel(%arg0: i32, %arg1: memref<2x7x7x128xf32, #tpu.memory_space<vmem>>, %arg2: memref<5x5x128xf32, #tpu.memory_space<vmem>>, %arg3: memref<1x128xf32, #tpu.memory_space<vmem>>, %arg4: memref<1x128xf32, #tpu.memory_space<vmem>>, %arg5: memref<2x7x7x128xf32, #tpu.memory_space<vmem>>, %arg6: memref<2x7x11x128xf32, #tpu.memory_space<vmem>>, %arg7: memref<2x7x7x128xf32, #tpu.memory_space<vmem>>) attributes {dimension_semantics = [#tpu.dimension_semantics<parallel>], iteration_bounds = array<i64: 2>, scalar_prefetch = 0 : i64, scratch_operands = 2 : i64, tpu.core_type = #tpu.core_type<tc>, window_params = [{transform_indices = @transform_0, window_bounds = array<i64: 2, 7, 7, 128>}, {transform_indices = @transform_1, window_bounds = array<i64: 5, 5, 128>}, {transform_indices = @transform_2, window_bounds = array<i64: 1, 128>}, {transform_indices = @transform_3, window_bounds = array<i64: 1, 128>}, {transform_indices = @transform_4, window_bounds = array<i64: 2, 7, 7, 128>}]} {
    %cst = arith.constant 0.000000e+00 : f32
    %0 = vector.broadcast %cst : f32 to vector<2x7x2x128xf32>
    %c0 = arith.constant 0 : index
    %c0_0 = arith.constant 0 : index
    %c0_1 = arith.constant 0 : index
    %c0_2 = arith.constant 0 : index
    %1 = vector.load %arg6[%c0, %c0_0, %c0_1, %c0_2] : memref<2x7x11x128xf32, #tpu.memory_space<vmem>>, vector<2x7x2x128xf32>
    tpu.vector_store %arg6[%c0, %c0_0, %c0_1, %c0_2], %0 {strides = array<i32>} : memref<2x7x11x128xf32, #tpu.memory_space<vmem>>, vector<2x7x2x128xf32>,
    %c0_3 = arith.constant 0 : index
    %c0_4 = arith.constant 0 : index
    %c9 = arith.constant 9 : index
    %c0_5 = arith.constant 0 : index
    %2 = vector.load %arg6[%c0_3, %c0_4, %c9, %c0_5] : memref<2x7x11x128xf32, #tpu.memory_space<vmem>>, vector<2x7x2x128xf32>
    tpu.vector_store %arg6[%c0_3, %c0_4, %c9, %c0_5], %0 {strides = array<i32>} : memref<2x7x11x128xf32, #tpu.memory_space<vmem>>, vector<2x7x2x128xf32>,
    %c0_6 = arith.constant 0 : index
    %c0_7 = arith.constant 0 : index
    %c0_8 = arith.constant 0 : index
    %c0_9 = arith.constant 0 : index
    %3 = vector.load %arg1[%c0_6, %c0_7, %c0_8, %c0_9] : memref<2x7x7x128xf32, #tpu.memory_space<vmem>>, vector<2x7x7x128xf32>
    %c0_10 = arith.constant 0 : index
    %c0_11 = arith.constant 0 : index
    %c2 = arith.constant 2 : index
    %c0_12 = arith.constant 0 : index
    %4 = vector.load %arg6[%c0_10, %c0_11, %c2, %c0_12] : memref<2x7x11x128xf32, #tpu.memory_space<vmem>>, vector<2x7x7x128xf32>
    tpu.vector_store %arg6[%c0_10, %c0_11, %c2, %c0_12], %3 {strides = array<i32>} : memref<2x7x11x128xf32, #tpu.memory_space<vmem>>, vector<2x7x7x128xf32>,
    %c0_13 = arith.constant 0 : index
    %c0_14 = arith.constant 0 : index
    %c0_15 = arith.constant 0 : index
    %5 = vector.load %arg2[%c0_13, %c0_14, %c0_15] : memref<5x5x128xf32, #tpu.memory_space<vmem>>, vector<5x5x128xf32>
    %6 = vector.extract_strided_slice %5 {offsets = [0, 0, 0], sizes = [1, 1, 128], strides = [1, 1, 1]} : vector<5x5x128xf32> to vector<1x1x128xf32>
    %7 = vector.shape_cast %6 : vector<1x1x128xf32> to vector<128xf32>
    %8 = vector.shape_cast %7 : vector<128xf32> to vector<1x1x1x128xf32>
    %9 = vector.extract_strided_slice %5 {offsets = [0, 1, 0], sizes = [1, 1, 128], strides = [1, 1, 1]} : vector<5x5x128xf32> to vector<1x1x128xf32>
    %10 = vector.shape_cast %9 : vector<1x1x128xf32> to vector<128xf32>
    %11 = vector.shape_cast %10 : vector<128xf32> to vector<1x1x1x128xf32>
    %12 = vector.extract_strided_slice %5 {offsets = [0, 2, 0], sizes = [1, 1, 128], strides = [1, 1, 1]} : vector<5x5x128xf32> to vector<1x1x128xf32>
    %13 = vector.shape_cast %12 : vector<1x1x128xf32> to vector<128xf32>
    %14 = vector.shape_cast %13 : vector<128xf32> to vector<1x1x1x128xf32>
    %15 = vector.extract_strided_slice %5 {offsets = [0, 3, 0], sizes = [1, 1, 128], strides = [1, 1, 1]} : vector<5x5x128xf32> to vector<1x1x128xf32>
    %16 = vector.shape_cast %15 : vector<1x1x128xf32> to vector<128xf32>
    %17 = vector.shape_cast %16 : vector<128xf32> to vector<1x1x1x128xf32>
    %18 = vector.extract_strided_slice %5 {offsets = [0, 4, 0], sizes = [1, 1, 128], strides = [1, 1, 1]} : vector<5x5x128xf32> to vector<1x1x128xf32>
    %19 = vector.shape_cast %18 : vector<1x1x128xf32> to vector<128xf32>
    %20 = vector.shape_cast %19 : vector<128xf32> to vector<1x1x1x128xf32>
    %21 = vector.extract_strided_slice %5 {offsets = [1, 0, 0], sizes = [1, 1, 128], strides = [1, 1, 1]} : vector<5x5x128xf32> to vector<1x1x128xf32>
    %22 = vector.shape_cast %21 : vector<1x1x128xf32> to vector<128xf32>
    %23 = vector.shape_cast %22 : vector<128xf32> to vector<1x1x1x128xf32>
    %24 = vector.extract_strided_slice %5 {offsets = [1, 1, 0], sizes = [1, 1, 128], strides = [1, 1, 1]} : vector<5x5x128xf32> to vector<1x1x128xf32>
    %25 = vector.shape_cast %24 : vector<1x1x128xf32> to vector<128xf32>
    %26 = vector.shape_cast %25 : vector<128xf32> to vector<1x1x1x128xf32>
    %27 = vector.extract_strided_slice %5 {offsets = [1, 2, 0], sizes = [1, 1, 128], strides = [1, 1, 1]} : vector<5x5x128xf32> to vector<1x1x128xf32>
    %28 = vector.shape_cast %27 : vector<1x1x128xf32> to vector<128xf32>
    %29 = vector.shape_cast %28 : vector<128xf32> to vector<1x1x1x128xf32>
    %30 = vector.extract_strided_slice %5 {offsets = [1, 3, 0], sizes = [1, 1, 128], strides = [1, 1, 1]} : vector<5x5x128xf32> to vector<1x1x128xf32>
    %31 = vector.shape_cast %30 : vector<1x1x128xf32> to vector<128xf32>
    %32 = vector.shape_cast %31 : vector<128xf32> to vector<1x1x1x128xf32>
    %33 = vector.extract_strided_slice %5 {offsets = [1, 4, 0], sizes = [1, 1, 128], strides = [1, 1, 1]} : vector<5x5x128xf32> to vector<1x1x128xf32>
    %34 = vector.shape_cast %33 : vector<1x1x128xf32> to vector<128xf32>
    %35 = vector.shape_cast %34 : vector<128xf32> to vector<1x1x1x128xf32>
    %36 = vector.extract_strided_slice %5 {offsets = [2, 0, 0], sizes = [1, 1, 128], strides = [1, 1, 1]} : vector<5x5x128xf32> to vector<1x1x128xf32>
    %37 = vector.shape_cast %36 : vector<1x1x128xf32> to vector<128xf32>
    %38 = vector.shape_cast %37 : vector<128xf32> to vector<1x1x1x128xf32>
    %39 = vector.extract_strided_slice %5 {offsets = [2, 1, 0], sizes = [1, 1, 128], strides = [1, 1, 1]} : vector<5x5x128xf32> to vector<1x1x128xf32>
    %40 = vector.shape_cast %39 : vector<1x1x128xf32> to vector<128xf32>
    %41 = vector.shape_cast %40 : vector<128xf32> to vector<1x1x1x128xf32>
    %42 = vector.extract_strided_slice %5 {offsets = [2, 2, 0], sizes = [1, 1, 128], strides = [1, 1, 1]} : vector<5x5x128xf32> to vector<1x1x128xf32>
    %43 = vector.shape_cast %42 : vector<1x1x128xf32> to vector<128xf32>
    %44 = vector.shape_cast %43 : vector<128xf32> to vector<1x1x1x128xf32>
    %45 = vector.extract_strided_slice %5 {offsets = [2, 3, 0], sizes = [1, 1, 128], strides = [1, 1, 1]} : vector<5x5x128xf32> to vector<1x1x128xf32>
    %46 = vector.shape_cast %45 : vector<1x1x128xf32> to vector<128xf32>
    %47 = vector.shape_cast %46 : vector<128xf32> to vector<1x1x1x128xf32>
    %48 = vector.extract_strided_slice %5 {offsets = [2, 4, 0], sizes = [1, 1, 128], strides = [1, 1, 1]} : vector<5x5x128xf32> to vector<1x1x128xf32>
    %49 = vector.shape_cast %48 : vector<1x1x128xf32> to vector<128xf32>
    %50 = vector.shape_cast %49 : vector<128xf32> to vector<1x1x1x128xf32>
    %51 = vector.extract_strided_slice %5 {offsets = [3, 0, 0], sizes = [1, 1, 128], strides = [1, 1, 1]} : vector<5x5x128xf32> to vector<1x1x128xf32>
    %52 = vector.shape_cast %51 : vector<1x1x128xf32> to vector<128xf32>
    %53 = vector.shape_cast %52 : vector<128xf32> to vector<1x1x1x128xf32>
    %54 = vector.extract_strided_slice %5 {offsets = [3, 1, 0], sizes = [1, 1, 128], strides = [1, 1, 1]} : vector<5x5x128xf32> to vector<1x1x128xf32>
    %55 = vector.shape_cast %54 : vector<1x1x128xf32> to vector<128xf32>
    %56 = vector.shape_cast %55 : vector<128xf32> to vector<1x1x1x128xf32>
    %57 = vector.extract_strided_slice %5 {offsets = [3, 2, 0], sizes = [1, 1, 128], strides = [1, 1, 1]} : vector<5x5x128xf32> to vector<1x1x128xf32>
    %58 = vector.shape_cast %57 : vector<1x1x128xf32> to vector<128xf32>
    %59 = vector.shape_cast %58 : vector<128xf32> to vector<1x1x1x128xf32>
    %60 = vector.extract_strided_slice %5 {offsets = [3, 3, 0], sizes = [1, 1, 128], strides = [1, 1, 1]} : vector<5x5x128xf32> to vector<1x1x128xf32>
    %61 = vector.shape_cast %60 : vector<1x1x128xf32> to vector<128xf32>
    %62 = vector.shape_cast %61 : vector<128xf32> to vector<1x1x1x128xf32>
    %63 = vector.extract_strided_slice %5 {offsets = [3, 4, 0], sizes = [1, 1, 128], strides = [1, 1, 1]} : vector<5x5x128xf32> to vector<1x1x128xf32>
    %64 = vector.shape_cast %63 : vector<1x1x128xf32> to vector<128xf32>
    %65 = vector.shape_cast %64 : vector<128xf32> to vector<1x1x1x128xf32>
    %66 = vector.extract_strided_slice %5 {offsets = [4, 0, 0], sizes = [1, 1, 128], strides = [1, 1, 1]} : vector<5x5x128xf32> to vector<1x1x128xf32>
    %67 = vector.shape_cast %66 : vector<1x1x128xf32> to vector<128xf32>
    %68 = vector.shape_cast %67 : vector<128xf32> to vector<1x1x1x128xf32>
    %69 = vector.extract_strided_slice %5 {offsets = [4, 1, 0], sizes = [1, 1, 128], strides = [1, 1, 1]} : vector<5x5x128xf32> to vector<1x1x128xf32>
    %70 = vector.shape_cast %69 : vector<1x1x128xf32> to vector<128xf32>
    %71 = vector.shape_cast %70 : vector<128xf32> to vector<1x1x1x128xf32>
    %72 = vector.extract_strided_slice %5 {offsets = [4, 2, 0], sizes = [1, 1, 128], strides = [1, 1, 1]} : vector<5x5x128xf32> to vector<1x1x128xf32>
    %73 = vector.shape_cast %72 : vector<1x1x128xf32> to vector<128xf32>
    %74 = vector.shape_cast %73 : vector<128xf32> to vector<1x1x1x128xf32>
    %75 = vector.extract_strided_slice %5 {offsets = [4, 3, 0], sizes = [1, 1, 128], strides = [1, 1, 1]} : vector<5x5x128xf32> to vector<1x1x128xf32>
    %76 = vector.shape_cast %75 : vector<1x1x128xf32> to vector<128xf32>
    %77 = vector.shape_cast %76 : vector<128xf32> to vector<1x1x1x128xf32>
    %78 = vector.extract_strided_slice %5 {offsets = [4, 4, 0], sizes = [1, 1, 128], strides = [1, 1, 1]} : vector<5x5x128xf32> to vector<1x1x128xf32>
    %79 = vector.shape_cast %78 : vector<1x1x128xf32> to vector<128xf32>
    %80 = vector.shape_cast %79 : vector<128xf32> to vector<1x1x1x128xf32>
    %cst_16 = arith.constant 0.000000e+00 : f32
    %81 = vector.broadcast %cst_16 : f32 to vector<1x1x1x128xf32>
    %cst_17 = arith.constant 0.000000e+00 : f32
    %82 = vector.broadcast %cst_17 : f32 to vector<1x1x1x128xf32>
    %cst_18 = arith.constant 0.000000e+00 : f32
    %83 = vector.broadcast %cst_18 : f32 to vector<2x1x7x128xf32>
    %c0_19 = arith.constant 0 : index
    %c0_20 = arith.constant 0 : index
    %c0_21 = arith.constant 0 : index
    %c0_22 = arith.constant 0 : index
    %84 = vector.load %arg6[%c0_19, %c0_20, %c0_21, %c0_22] : memref<2x7x11x128xf32, #tpu.memory_space<vmem>>, vector<2x1x7x128xf32>
    %85 = vector.broadcast %38 : vector<1x1x1x128xf32> to vector<2x1x7x128xf32>
    %86 = arith.mulf %84, %85 : vector<2x1x7x128xf32>
    %87 = arith.addf %83, %86 : vector<2x1x7x128xf32>
    %c0_23 = arith.constant 0 : index
    %c0_24 = arith.constant 0 : index
    %c1 = arith.constant 1 : index
    %c0_25 = arith.constant 0 : index
    %88 = vector.load %arg6[%c0_23, %c0_24, %c1, %c0_25] : memref<2x7x11x128xf32, #tpu.memory_space<vmem>>, vector<2x1x7x128xf32>
    %89 = vector.broadcast %41 : vector<1x1x1x128xf32> to vector<2x1x7x128xf32>
    %90 = arith.mulf %88, %89 : vector<2x1x7x128xf32>
    %91 = arith.addf %87, %90 : vector<2x1x7x128xf32>
    %c0_26 = arith.constant 0 : index
    %c0_27 = arith.constant 0 : index
    %c2_28 = arith.constant 2 : index
    %c0_29 = arith.constant 0 : index
    %92 = vector.load %arg6[%c0_26, %c0_27, %c2_28, %c0_29] : memref<2x7x11x128xf32, #tpu.memory_space<vmem>>, vector<2x1x7x128xf32>
    %93 = vector.broadcast %44 : vector<1x1x1x128xf32> to vector<2x1x7x128xf32>
    %94 = arith.mulf %92, %93 : vector<2x1x7x128xf32>
    %95 = arith.addf %91, %94 : vector<2x1x7x128xf32>
    %c0_30 = arith.constant 0 : index
    %c0_31 = arith.constant 0 : index
    %c3 = arith.constant 3 : index
    %c0_32 = arith.constant 0 : index
    %96 = vector.load %arg6[%c0_30, %c0_31, %c3, %c0_32] : memref<2x7x11x128xf32, #tpu.memory_space<vmem>>, vector<2x1x7x128xf32>
    %97 = vector.broadcast %47 : vector<1x1x1x128xf32> to vector<2x1x7x128xf32>
    %98 = arith.mulf %96, %97 : vector<2x1x7x128xf32>
    %99 = arith.addf %95, %98 : vector<2x1x7x128xf32>
    %c0_33 = arith.constant 0 : index
    %c0_34 = arith.constant 0 : index
    %c4 = arith.constant 4 : index
    %c0_35 = arith.constant 0 : index
    %100 = vector.load %arg6[%c0_33, %c0_34, %c4, %c0_35] : memref<2x7x11x128xf32, #tpu.memory_space<vmem>>, vector<2x1x7x128xf32>
    %101 = vector.broadcast %50 : vector<1x1x1x128xf32> to vector<2x1x7x128xf32>
    %102 = arith.mulf %100, %101 : vector<2x1x7x128xf32>
    %103 = arith.addf %99, %102 : vector<2x1x7x128xf32>
    %c0_36 = arith.constant 0 : index
    %c1_37 = arith.constant 1 : index
    %c0_38 = arith.constant 0 : index
    %c0_39 = arith.constant 0 : index
    %104 = vector.load %arg6[%c0_36, %c1_37, %c0_38, %c0_39] : memref<2x7x11x128xf32, #tpu.memory_space<vmem>>, vector<2x1x7x128xf32>
    %105 = vector.broadcast %53 : vector<1x1x1x128xf32> to vector<2x1x7x128xf32>
    %106 = arith.mulf %104, %105 : vector<2x1x7x128xf32>
    %107 = arith.addf %103, %106 : vector<2x1x7x128xf32>
    %c0_40 = arith.constant 0 : index
    %c1_41 = arith.constant 1 : index
    %c1_42 = arith.constant 1 : index
    %c0_43 = arith.constant 0 : index
    %108 = vector.load %arg6[%c0_40, %c1_41, %c1_42, %c0_43] : memref<2x7x11x128xf32, #tpu.memory_space<vmem>>, vector<2x1x7x128xf32>
    %109 = vector.broadcast %56 : vector<1x1x1x128xf32> to vector<2x1x7x128xf32>
    %110 = arith.mulf %108, %109 : vector<2x1x7x128xf32>
    %111 = arith.addf %107, %110 : vector<2x1x7x128xf32>
    %c0_44 = arith.constant 0 : index
    %c1_45 = arith.constant 1 : index
    %c2_46 = arith.constant 2 : index
    %c0_47 = arith.constant 0 : index
    %112 = vector.load %arg6[%c0_44, %c1_45, %c2_46, %c0_47] : memref<2x7x11x128xf32, #tpu.memory_space<vmem>>, vector<2x1x7x128xf32>
    %113 = vector.broadcast %59 : vector<1x1x1x128xf32> to vector<2x1x7x128xf32>
    %114 = arith.mulf %112, %113 : vector<2x1x7x128xf32>
    %115 = arith.addf %111, %114 : vector<2x1x7x128xf32>
    %c0_48 = arith.constant 0 : index
    %c1_49 = arith.constant 1 : index
    %c3_50 = arith.constant 3 : index
    %c0_51 = arith.constant 0 : index
    %116 = vector.load %arg6[%c0_48, %c1_49, %c3_50, %c0_51] : memref<2x7x11x128xf32, #tpu.memory_space<vmem>>, vector<2x1x7x128xf32>
    %117 = vector.broadcast %62 : vector<1x1x1x128xf32> to vector<2x1x7x128xf32>
    %118 = arith.mulf %116, %117 : vector<2x1x7x128xf32>
    %119 = arith.addf %115, %118 : vector<2x1x7x128xf32>
    %c0_52 = arith.constant 0 : index
    %c1_53 = arith.constant 1 : index
    %c4_54 = arith.constant 4 : index
    %c0_55 = arith.constant 0 : index
    %120 = vector.load %arg6[%c0_52, %c1_53, %c4_54, %c0_55] : memref<2x7x11x128xf32, #tpu.memory_space<vmem>>, vector<2x1x7x128xf32>
    %121 = vector.broadcast %65 : vector<1x1x1x128xf32> to vector<2x1x7x128xf32>
    %122 = arith.mulf %120, %121 : vector<2x1x7x128xf32>
    %123 = arith.addf %119, %122 : vector<2x1x7x128xf32>
    %c0_56 = arith.constant 0 : index
    %c2_57 = arith.constant 2 : index
    %c0_58 = arith.constant 0 : index
    %c0_59 = arith.constant 0 : index
    %124 = vector.load %arg6[%c0_56, %c2_57, %c0_58, %c0_59] : memref<2x7x11x128xf32, #tpu.memory_space<vmem>>, vector<2x1x7x128xf32>
    %125 = vector.broadcast %68 : vector<1x1x1x128xf32> to vector<2x1x7x128xf32>
    %126 = arith.mulf %124, %125 : vector<2x1x7x128xf32>
    %127 = arith.addf %123, %126 : vector<2x1x7x128xf32>
    %c0_60 = arith.constant 0 : index
    %c2_61 = arith.constant 2 : index
    %c1_62 = arith.constant 1 : index
    %c0_63 = arith.constant 0 : index
    %128 = vector.load %arg6[%c0_60, %c2_61, %c1_62, %c0_63] : memref<2x7x11x128xf32, #tpu.memory_space<vmem>>, vector<2x1x7x128xf32>
    %129 = vector.broadcast %71 : vector<1x1x1x128xf32> to vector<2x1x7x128xf32>
    %130 = arith.mulf %128, %129 : vector<2x1x7x128xf32>
    %131 = arith.addf %127, %130 : vector<2x1x7x128xf32>
    %c0_64 = arith.constant 0 : index
    %c2_65 = arith.constant 2 : index
    %c2_66 = arith.constant 2 : index
    %c0_67 = arith.constant 0 : index
    %132 = vector.load %arg6[%c0_64, %c2_65, %c2_66, %c0_67] : memref<2x7x11x128xf32, #tpu.memory_space<vmem>>, vector<2x1x7x128xf32>
    %133 = vector.broadcast %74 : vector<1x1x1x128xf32> to vector<2x1x7x128xf32>
    %134 = arith.mulf %132, %133 : vector<2x1x7x128xf32>
    %135 = arith.addf %131, %134 : vector<2x1x7x128xf32>
    %c0_68 = arith.constant 0 : index
    %c2_69 = arith.constant 2 : index
    %c3_70 = arith.constant 3 : index
    %c0_71 = arith.constant 0 : index
    %136 = vector.load %arg6[%c0_68, %c2_69, %c3_70, %c0_71] : memref<2x7x11x128xf32, #tpu.memory_space<vmem>>, vector<2x1x7x128xf32>
    %137 = vector.broadcast %77 : vector<1x1x1x128xf32> to vector<2x1x7x128xf32>
    %138 = arith.mulf %136, %137 : vector<2x1x7x128xf32>
    %139 = arith.addf %135, %138 : vector<2x1x7x128xf32>
    %c0_72 = arith.constant 0 : index
    %c2_73 = arith.constant 2 : index
    %c4_74 = arith.constant 4 : index
    %c0_75 = arith.constant 0 : index
    %140 = vector.load %arg6[%c0_72, %c2_73, %c4_74, %c0_75] : memref<2x7x11x128xf32, #tpu.memory_space<vmem>>, vector<2x1x7x128xf32>
    %141 = vector.broadcast %80 : vector<1x1x1x128xf32> to vector<2x1x7x128xf32>
    %142 = arith.mulf %140, %141 : vector<2x1x7x128xf32>
    %143 = arith.addf %139, %142 : vector<2x1x7x128xf32>
    %c0_76 = arith.constant 0 : index
    %c0_77 = arith.constant 0 : index
    %c0_78 = arith.constant 0 : index
    %c0_79 = arith.constant 0 : index
    %144 = vector.load %arg7[%c0_76, %c0_77, %c0_78, %c0_79] : memref<2x7x7x128xf32, #tpu.memory_space<vmem>>, vector<2x1x7x128xf32>
    tpu.vector_store %arg7[%c0_76, %c0_77, %c0_78, %c0_79], %143 {strides = array<i32>} : memref<2x7x7x128xf32, #tpu.memory_space<vmem>>, vector<2x1x7x128xf32>,
    %cst_80 = arith.constant dense<0.000000e+00> : vector<128xf32>
    %145 = vector.multi_reduction <add>, %143, %cst_80 [0, 1, 2] : vector<2x1x7x128xf32> to vector<128xf32>
    %146 = vector.shape_cast %145 : vector<128xf32> to vector<1x1x1x128xf32>
    %147 = arith.addf %81, %146 : vector<1x1x1x128xf32>
    %148 = arith.mulf %143, %143 : vector<2x1x7x128xf32>
    %cst_81 = arith.constant dense<0.000000e+00> : vector<128xf32>
    %149 = vector.multi_reduction <add>, %148, %cst_81 [0, 1, 2] : vector<2x1x7x128xf32> to vector<128xf32>
    %150 = vector.shape_cast %149 : vector<128xf32> to vector<1x1x1x128xf32>
    %151 = arith.addf %82, %150 : vector<1x1x1x128xf32>
    %cst_82 = arith.constant 0.000000e+00 : f32
    %152 = vector.broadcast %cst_82 : f32 to vector<2x1x7x128xf32>
    %c0_83 = arith.constant 0 : index
    %c0_84 = arith.constant 0 : index
    %c0_85 = arith.constant 0 : index
    %c0_86 = arith.constant 0 : index
    %153 = vector.load %arg6[%c0_83, %c0_84, %c0_85, %c0_86] : memref<2x7x11x128xf32, #tpu.memory_space<vmem>>, vector<2x1x7x128xf32>
    %154 = vector.broadcast %23 : vector<1x1x1x128xf32> to vector<2x1x7x128xf32>
    %155 = arith.mulf %153, %154 : vector<2x1x7x128xf32>
    %156 = arith.addf %152, %155 : vector<2x1x7x128xf32>
    %c0_87 = arith.constant 0 : index
    %c0_88 = arith.constant 0 : index
    %c1_89 = arith.constant 1 : index
    %c0_90 = arith.constant 0 : index
    %157 = vector.load %arg6[%c0_87, %c0_88, %c1_89, %c0_90] : memref<2x7x11x128xf32, #tpu.memory_space<vmem>>, vector<2x1x7x128xf32>
    %158 = vector.broadcast %26 : vector<1x1x1x128xf32> to vector<2x1x7x128xf32>
    %159 = arith.mulf %157, %158 : vector<2x1x7x128xf32>
    %160 = arith.addf %156, %159 : vector<2x1x7x128xf32>
    %c0_91 = arith.constant 0 : index
    %c0_92 = arith.constant 0 : index
    %c2_93 = arith.constant 2 : index
    %c0_94 = arith.constant 0 : index
    %161 = vector.load %arg6[%c0_91, %c0_92, %c2_93, %c0_94] : memref<2x7x11x128xf32, #tpu.memory_space<vmem>>, vector<2x1x7x128xf32>
    %162 = vector.broadcast %29 : vector<1x1x1x128xf32> to vector<2x1x7x128xf32>
    %163 = arith.mulf %161, %162 : vector<2x1x7x128xf32>
    %164 = arith.addf %160, %163 : vector<2x1x7x128xf32>
    %c0_95 = arith.constant 0 : index
    %c0_96 = arith.constant 0 : index
    %c3_97 = arith.constant 3 : index
    %c0_98 = arith.constant 0 : index
    %165 = vector.load %arg6[%c0_95, %c0_96, %c3_97, %c0_98] : memref<2x7x11x128xf32, #tpu.memory_space<vmem>>, vector<2x1x7x128xf32>
    %166 = vector.broadcast %32 : vector<1x1x1x128xf32> to vector<2x1x7x128xf32>
    %167 = arith.mulf %165, %166 : vector<2x1x7x128xf32>
    %168 = arith.addf %164, %167 : vector<2x1x7x128xf32>
    %c0_99 = arith.constant 0 : index
    %c0_100 = arith.constant 0 : index
    %c4_101 = arith.constant 4 : index
    %c0_102 = arith.constant 0 : index
    %169 = vector.load %arg6[%c0_99, %c0_100, %c4_101, %c0_102] : memref<2x7x11x128xf32, #tpu.memory_space<vmem>>, vector<2x1x7x128xf32>
    %170 = vector.broadcast %35 : vector<1x1x1x128xf32> to vector<2x1x7x128xf32>
    %171 = arith.mulf %169, %170 : vector<2x1x7x128xf32>
    %172 = arith.addf %168, %171 : vector<2x1x7x128xf32>
    %c0_103 = arith.constant 0 : index
    %c1_104 = arith.constant 1 : index
    %c0_105 = arith.constant 0 : index
    %c0_106 = arith.constant 0 : index
    %173 = vector.load %arg6[%c0_103, %c1_104, %c0_105, %c0_106] : memref<2x7x11x128xf32, #tpu.memory_space<vmem>>, vector<2x1x7x128xf32>
    %174 = vector.broadcast %38 : vector<1x1x1x128xf32> to vector<2x1x7x128xf32>
    %175 = arith.mulf %173, %174 : vector<2x1x7x128xf32>
    %176 = arith.addf %172, %175 : vector<2x1x7x128xf32>
    %c0_107 = arith.constant 0 : index
    %c1_108 = arith.constant 1 : index
    %c1_109 = arith.constant 1 : index
    %c0_110 = arith.constant 0 : index
    %177 = vector.load %arg6[%c0_107, %c1_108, %c1_109, %c0_110] : memref<2x7x11x128xf32, #tpu.memory_space<vmem>>, vector<2x1x7x128xf32>
    %178 = vector.broadcast %41 : vector<1x1x1x128xf32> to vector<2x1x7x128xf32>
    %179 = arith.mulf %177, %178 : vector<2x1x7x128xf32>
    %180 = arith.addf %176, %179 : vector<2x1x7x128xf32>
    %c0_111 = arith.constant 0 : index
    %c1_112 = arith.constant 1 : index
    %c2_113 = arith.constant 2 : index
    %c0_114 = arith.constant 0 : index
    %181 = vector.load %arg6[%c0_111, %c1_112, %c2_113, %c0_114] : memref<2x7x11x128xf32, #tpu.memory_space<vmem>>, vector<2x1x7x128xf32>
    %182 = vector.broadcast %44 : vector<1x1x1x128xf32> to vector<2x1x7x128xf32>
    %183 = arith.mulf %181, %182 : vector<2x1x7x128xf32>
    %184 = arith.addf %180, %183 : vector<2x1x7x128xf32>
    %c0_115 = arith.constant 0 : index
    %c1_116 = arith.constant 1 : index
    %c3_117 = arith.constant 3 : index
    %c0_118 = arith.constant 0 : index
    %185 = vector.load %arg6[%c0_115, %c1_116, %c3_117, %c0_118] : memref<2x7x11x128xf32, #tpu.memory_space<vmem>>, vector<2x1x7x128xf32>
    %186 = vector.broadcast %47 : vector<1x1x1x128xf32> to vector<2x1x7x128xf32>
    %187 = arith.mulf %185, %186 : vector<2x1x7x128xf32>
    %188 = arith.addf %184, %187 : vector<2x1x7x128xf32>
    %c0_119 = arith.constant 0 : index
    %c1_120 = arith.constant 1 : index
    %c4_121 = arith.constant 4 : index
    %c0_122 = arith.constant 0 : index
    %189 = vector.load %arg6[%c0_119, %c1_120, %c4_121, %c0_122] : memref<2x7x11x128xf32, #tpu.memory_space<vmem>>, vector<2x1x7x128xf32>
    %190 = vector.broadcast %50 : vector<1x1x1x128xf32> to vector<2x1x7x128xf32>
    %191 = arith.mulf %189, %190 : vector<2x1x7x128xf32>
    %192 = arith.addf %188, %191 : vector<2x1x7x128xf32>
    %c0_123 = arith.constant 0 : index
    %c2_124 = arith.constant 2 : index
    %c0_125 = arith.constant 0 : index
    %c0_126 = arith.constant 0 : index
    %193 = vector.load %arg6[%c0_123, %c2_124, %c0_125, %c0_126] : memref<2x7x11x128xf32, #tpu.memory_space<vmem>>, vector<2x1x7x128xf32>
    %194 = vector.broadcast %53 : vector<1x1x1x128xf32> to vector<2x1x7x128xf32>
    %195 = arith.mulf %193, %194 : vector<2x1x7x128xf32>
    %196 = arith.addf %192, %195 : vector<2x1x7x128xf32>
    %c0_127 = arith.constant 0 : index
    %c2_128 = arith.constant 2 : index
    %c1_129 = arith.constant 1 : index
    %c0_130 = arith.constant 0 : index
    %197 = vector.load %arg6[%c0_127, %c2_128, %c1_129, %c0_130] : memref<2x7x11x128xf32, #tpu.memory_space<vmem>>, vector<2x1x7x128xf32>
    %198 = vector.broadcast %56 : vector<1x1x1x128xf32> to vector<2x1x7x128xf32>
    %199 = arith.mulf %197, %198 : vector<2x1x7x128xf32>
    %200 = arith.addf %196, %199 : vector<2x1x7x128xf32>
    %c0_131 = arith.constant 0 : index
    %c2_132 = arith.constant 2 : index
    %c2_133 = arith.constant 2 : index
    %c0_134 = arith.constant 0 : index
    %201 = vector.load %arg6[%c0_131, %c2_132, %c2_133, %c0_134] : memref<2x7x11x128xf32, #tpu.memory_space<vmem>>, vector<2x1x7x128xf32>
    %202 = vector.broadcast %59 : vector<1x1x1x128xf32> to vector<2x1x7x128xf32>
    %203 = arith.mulf %201, %202 : vector<2x1x7x128xf32>
    %204 = arith.addf %200, %203 : vector<2x1x7x128xf32>
    %c0_135 = arith.constant 0 : index
    %c2_136 = arith.constant 2 : index
    %c3_137 = arith.constant 3 : index
    %c0_138 = arith.constant 0 : index
    %205 = vector.load %arg6[%c0_135, %c2_136, %c3_137, %c0_138] : memref<2x7x11x128xf32, #tpu.memory_space<vmem>>, vector<2x1x7x128xf32>
    %206 = vector.broadcast %62 : vector<1x1x1x128xf32> to vector<2x1x7x128xf32>
    %207 = arith.mulf %205, %206 : vector<2x1x7x128xf32>
    %208 = arith.addf %204, %207 : vector<2x1x7x128xf32>
    %c0_139 = arith.constant 0 : index
    %c2_140 = arith.constant 2 : index
    %c4_141 = arith.constant 4 : index
    %c0_142 = arith.constant 0 : index
    %209 = vector.load %arg6[%c0_139, %c2_140, %c4_141, %c0_142] : memref<2x7x11x128xf32, #tpu.memory_space<vmem>>, vector<2x1x7x128xf32>
    %210 = vector.broadcast %65 : vector<1x1x1x128xf32> to vector<2x1x7x128xf32>
    %211 = arith.mulf %209, %210 : vector<2x1x7x128xf32>
    %212 = arith.addf %208, %211 : vector<2x1x7x128xf32>
    %c0_143 = arith.constant 0 : index
    %c3_144 = arith.constant 3 : index
    %c0_145 = arith.constant 0 : index
    %c0_146 = arith.constant 0 : index
    %213 = vector.load %arg6[%c0_143, %c3_144, %c0_145, %c0_146] : memref<2x7x11x128xf32, #tpu.memory_space<vmem>>, vector<2x1x7x128xf32>
    %214 = vector.broadcast %68 : vector<1x1x1x128xf32> to vector<2x1x7x128xf32>
    %215 = arith.mulf %213, %214 : vector<2x1x7x128xf32>
    %216 = arith.addf %212, %215 : vector<2x1x7x128xf32>
    %c0_147 = arith.constant 0 : index
    %c3_148 = arith.constant 3 : index
    %c1_149 = arith.constant 1 : index
    %c0_150 = arith.constant 0 : index
    %217 = vector.load %arg6[%c0_147, %c3_148, %c1_149, %c0_150] : memref<2x7x11x128xf32, #tpu.memory_space<vmem>>, vector<2x1x7x128xf32>
    %218 = vector.broadcast %71 : vector<1x1x1x128xf32> to vector<2x1x7x128xf32>
    %219 = arith.mulf %217, %218 : vector<2x1x7x128xf32>
    %220 = arith.addf %216, %219 : vector<2x1x7x128xf32>
    %c0_151 = arith.constant 0 : index
    %c3_152 = arith.constant 3 : index
    %c2_153 = arith.constant 2 : index
    %c0_154 = arith.constant 0 : index
    %221 = vector.load %arg6[%c0_151, %c3_152, %c2_153, %c0_154] : memref<2x7x11x128xf32, #tpu.memory_space<vmem>>, vector<2x1x7x128xf32>
    %222 = vector.broadcast %74 : vector<1x1x1x128xf32> to vector<2x1x7x128xf32>
    %223 = arith.mulf %221, %222 : vector<2x1x7x128xf32>
    %224 = arith.addf %220, %223 : vector<2x1x7x128xf32>
    %c0_155 = arith.constant 0 : index
    %c3_156 = arith.constant 3 : index
    %c3_157 = arith.constant 3 : index
    %c0_158 = arith.constant 0 : index
    %225 = vector.load %arg6[%c0_155, %c3_156, %c3_157, %c0_158] : memref<2x7x11x128xf32, #tpu.memory_space<vmem>>, vector<2x1x7x128xf32>
    %226 = vector.broadcast %77 : vector<1x1x1x128xf32> to vector<2x1x7x128xf32>
    %227 = arith.mulf %225, %226 : vector<2x1x7x128xf32>
    %228 = arith.addf %224, %227 : vector<2x1x7x128xf32>
    %c0_159 = arith.constant 0 : index
    %c3_160 = arith.constant 3 : index
    %c4_161 = arith.constant 4 : index
    %c0_162 = arith.constant 0 : index
    %229 = vector.load %arg6[%c0_159, %c3_160, %c4_161, %c0_162] : memref<2x7x11x128xf32, #tpu.memory_space<vmem>>, vector<2x1x7x128xf32>
    %230 = vector.broadcast %80 : vector<1x1x1x128xf32> to vector<2x1x7x128xf32>
    %231 = arith.mulf %229, %230 : vector<2x1x7x128xf32>
    %232 = arith.addf %228, %231 : vector<2x1x7x128xf32>
    %c0_163 = arith.constant 0 : index
    %c1_164 = arith.constant 1 : index
    %c0_165 = arith.constant 0 : index
    %c0_166 = arith.constant 0 : index
    %233 = vector.load %arg7[%c0_163, %c1_164, %c0_165, %c0_166] : memref<2x7x7x128xf32, #tpu.memory_space<vmem>>, vector<2x1x7x128xf32>
    tpu.vector_store %arg7[%c0_163, %c1_164, %c0_165, %c0_166], %232 {strides = array<i32>} : memref<2x7x7x128xf32, #tpu.memory_space<vmem>>, vector<2x1x7x128xf32>,
    %cst_167 = arith.constant dense<0.000000e+00> : vector<128xf32>
    %234 = vector.multi_reduction <add>, %232, %cst_167 [0, 1, 2] : vector<2x1x7x128xf32> to vector<128xf32>
    %235 = vector.shape_cast %234 : vector<128xf32> to vector<1x1x1x128xf32>
    %236 = arith.addf %147, %235 : vector<1x1x1x128xf32>
    %237 = arith.mulf %232, %232 : vector<2x1x7x128xf32>
    %cst_168 = arith.constant dense<0.000000e+00> : vector<128xf32>
    %238 = vector.multi_reduction <add>, %237, %cst_168 [0, 1, 2] : vector<2x1x7x128xf32> to vector<128xf32>
    %239 = vector.shape_cast %238 : vector<128xf32> to vector<1x1x1x128xf32>
    %240 = arith.addf %151, %239 : vector<1x1x1x128xf32>
    %cst_169 = arith.constant 0.000000e+00 : f32
    %241 = vector.broadcast %cst_169 : f32 to vector<2x1x7x128xf32>
    %c0_170 = arith.constant 0 : index
    %c0_171 = arith.constant 0 : index
    %c0_172 = arith.constant 0 : index
    %c0_173 = arith.constant 0 : index
    %242 = vector.load %arg6[%c0_170, %c0_171, %c0_172, %c0_173] : memref<2x7x11x128xf32, #tpu.memory_space<vmem>>, vector<2x1x7x128xf32>
    %243 = vector.broadcast %8 : vector<1x1x1x128xf32> to vector<2x1x7x128xf32>
    %244 = arith.mulf %242, %243 : vector<2x1x7x128xf32>
    %245 = arith.addf %241, %244 : vector<2x1x7x128xf32>
    %c0_174 = arith.constant 0 : index
    %c0_175 = arith.constant 0 : index
    %c1_176 = arith.constant 1 : index
    %c0_177 = arith.constant 0 : index
    %246 = vector.load %arg6[%c0_174, %c0_175, %c1_176, %c0_177] : memref<2x7x11x128xf32, #tpu.memory_space<vmem>>, vector<2x1x7x128xf32>
    %247 = vector.broadcast %11 : vector<1x1x1x128xf32> to vector<2x1x7x128xf32>
    %248 = arith.mulf %246, %247 : vector<2x1x7x128xf32>
    %249 = arith.addf %245, %248 : vector<2x1x7x128xf32>
    %c0_178 = arith.constant 0 : index
    %c0_179 = arith.constant 0 : index
    %c2_180 = arith.constant 2 : index
    %c0_181 = arith.constant 0 : index
    %250 = vector.load %arg6[%c0_178, %c0_179, %c2_180, %c0_181] : memref<2x7x11x128xf32, #tpu.memory_space<vmem>>, vector<2x1x7x128xf32>
    %251 = vector.broadcast %14 : vector<1x1x1x128xf32> to vector<2x1x7x128xf32>
    %252 = arith.mulf %250, %251 : vector<2x1x7x128xf32>
    %253 = arith.addf %249, %252 : vector<2x1x7x128xf32>
    %c0_182 = arith.constant 0 : index
    %c0_183 = arith.constant 0 : index
    %c3_184 = arith.constant 3 : index
    %c0_185 = arith.constant 0 : index
    %254 = vector.load %arg6[%c0_182, %c0_183, %c3_184, %c0_185] : memref<2x7x11x128xf32, #tpu.memory_space<vmem>>, vector<2x1x7x128xf32>
    %255 = vector.broadcast %17 : vector<1x1x1x128xf32> to vector<2x1x7x128xf32>
    %256 = arith.mulf %254, %255 : vector<2x1x7x128xf32>
    %257 = arith.addf %253, %256 : vector<2x1x7x128xf32>
    %c0_186 = arith.constant 0 : index
    %c0_187 = arith.constant 0 : index
    %c4_188 = arith.constant 4 : index
    %c0_189 = arith.constant 0 : index
    %258 = vector.load %arg6[%c0_186, %c0_187, %c4_188, %c0_189] : memref<2x7x11x128xf32, #tpu.memory_space<vmem>>, vector<2x1x7x128xf32>
    %259 = vector.broadcast %20 : vector<1x1x1x128xf32> to vector<2x1x7x128xf32>
    %260 = arith.mulf %258, %259 : vector<2x1x7x128xf32>
    %261 = arith.addf %257, %260 : vector<2x1x7x128xf32>
    %c0_190 = arith.constant 0 : index
    %c1_191 = arith.constant 1 : index
    %c0_192 = arith.constant 0 : index
    %c0_193 = arith.constant 0 : index
    %262 = vector.load %arg6[%c0_190, %c1_191, %c0_192, %c0_193] : memref<2x7x11x128xf32, #tpu.memory_space<vmem>>, vector<2x1x7x128xf32>
    %263 = vector.broadcast %23 : vector<1x1x1x128xf32> to vector<2x1x7x128xf32>
    %264 = arith.mulf %262, %263 : vector<2x1x7x128xf32>
    %265 = arith.addf %261, %264 : vector<2x1x7x128xf32>
    %c0_194 = arith.constant 0 : index
    %c1_195 = arith.constant 1 : index
    %c1_196 = arith.constant 1 : index
    %c0_197 = arith.constant 0 : index
    %266 = vector.load %arg6[%c0_194, %c1_195, %c1_196, %c0_197] : memref<2x7x11x128xf32, #tpu.memory_space<vmem>>, vector<2x1x7x128xf32>
    %267 = vector.broadcast %26 : vector<1x1x1x128xf32> to vector<2x1x7x128xf32>
    %268 = arith.mulf %266, %267 : vector<2x1x7x128xf32>
    %269 = arith.addf %265, %268 : vector<2x1x7x128xf32>
    %c0_198 = arith.constant 0 : index
    %c1_199 = arith.constant 1 : index
    %c2_200 = arith.constant 2 : index
    %c0_201 = arith.constant 0 : index
    %270 = vector.load %arg6[%c0_198, %c1_199, %c2_200, %c0_201] : memref<2x7x11x128xf32, #tpu.memory_space<vmem>>, vector<2x1x7x128xf32>
    %271 = vector.broadcast %29 : vector<1x1x1x128xf32> to vector<2x1x7x128xf32>
    %272 = arith.mulf %270, %271 : vector<2x1x7x128xf32>
    %273 = arith.addf %269, %272 : vector<2x1x7x128xf32>
    %c0_202 = arith.constant 0 : index
    %c1_203 = arith.constant 1 : index
    %c3_204 = arith.constant 3 : index
    %c0_205 = arith.constant 0 : index
    %274 = vector.load %arg6[%c0_202, %c1_203, %c3_204, %c0_205] : memref<2x7x11x128xf32, #tpu.memory_space<vmem>>, vector<2x1x7x128xf32>
    %275 = vector.broadcast %32 : vector<1x1x1x128xf32> to vector<2x1x7x128xf32>
    %276 = arith.mulf %274, %275 : vector<2x1x7x128xf32>
    %277 = arith.addf %273, %276 : vector<2x1x7x128xf32>
    %c0_206 = arith.constant 0 : index
    %c1_207 = arith.constant 1 : index
    %c4_208 = arith.constant 4 : index
    %c0_209 = arith.constant 0 : index
    %278 = vector.load %arg6[%c0_206, %c1_207, %c4_208, %c0_209] : memref<2x7x11x128xf32, #tpu.memory_space<vmem>>, vector<2x1x7x128xf32>
    %279 = vector.broadcast %35 : vector<1x1x1x128xf32> to vector<2x1x7x128xf32>
    %280 = arith.mulf %278, %279 : vector<2x1x7x128xf32>
    %281 = arith.addf %277, %280 : vector<2x1x7x128xf32>
    %c0_210 = arith.constant 0 : index
    %c2_211 = arith.constant 2 : index
    %c0_212 = arith.constant 0 : index
    %c0_213 = arith.constant 0 : index
    %282 = vector.load %arg6[%c0_210, %c2_211, %c0_212, %c0_213] : memref<2x7x11x128xf32, #tpu.memory_space<vmem>>, vector<2x1x7x128xf32>
    %283 = vector.broadcast %38 : vector<1x1x1x128xf32> to vector<2x1x7x128xf32>
    %284 = arith.mulf %282, %283 : vector<2x1x7x128xf32>
    %285 = arith.addf %281, %284 : vector<2x1x7x128xf32>
    %c0_214 = arith.constant 0 : index
    %c2_215 = arith.constant 2 : index
    %c1_216 = arith.constant 1 : index
    %c0_217 = arith.constant 0 : index
    %286 = vector.load %arg6[%c0_214, %c2_215, %c1_216, %c0_217] : memref<2x7x11x128xf32, #tpu.memory_space<vmem>>, vector<2x1x7x128xf32>
    %287 = vector.broadcast %41 : vector<1x1x1x128xf32> to vector<2x1x7x128xf32>
    %288 = arith.mulf %286, %287 : vector<2x1x7x128xf32>
    %289 = arith.addf %285, %288 : vector<2x1x7x128xf32>
    %c0_218 = arith.constant 0 : index
    %c2_219 = arith.constant 2 : index
    %c2_220 = arith.constant 2 : index
    %c0_221 = arith.constant 0 : index
    %290 = vector.load %arg6[%c0_218, %c2_219, %c2_220, %c0_221] : memref<2x7x11x128xf32, #tpu.memory_space<vmem>>, vector<2x1x7x128xf32>
    %291 = vector.broadcast %44 : vector<1x1x1x128xf32> to vector<2x1x7x128xf32>
    %292 = arith.mulf %290, %291 : vector<2x1x7x128xf32>
    %293 = arith.addf %289, %292 : vector<2x1x7x128xf32>
    %c0_222 = arith.constant 0 : index
    %c2_223 = arith.constant 2 : index
    %c3_224 = arith.constant 3 : index
    %c0_225 = arith.constant 0 : index
    %294 = vector.load %arg6[%c0_222, %c2_223, %c3_224, %c0_225] : memref<2x7x11x128xf32, #tpu.memory_space<vmem>>, vector<2x1x7x128xf32>
    %295 = vector.broadcast %47 : vector<1x1x1x128xf32> to vector<2x1x7x128xf32>
    %296 = arith.mulf %294, %295 : vector<2x1x7x128xf32>
    %297 = arith.addf %293, %296 : vector<2x1x7x128xf32>
    %c0_226 = arith.constant 0 : index
    %c2_227 = arith.constant 2 : index
    %c4_228 = arith.constant 4 : index
    %c0_229 = arith.constant 0 : index
    %298 = vector.load %arg6[%c0_226, %c2_227, %c4_228, %c0_229] : memref<2x7x11x128xf32, #tpu.memory_space<vmem>>, vector<2x1x7x128xf32>
    %299 = vector.broadcast %50 : vector<1x1x1x128xf32> to vector<2x1x7x128xf32>
    %300 = arith.mulf %298, %299 : vector<2x1x7x128xf32>
    %301 = arith.addf %297, %300 : vector<2x1x7x128xf32>
    %c0_230 = arith.constant 0 : index
    %c3_231 = arith.constant 3 : index
    %c0_232 = arith.constant 0 : index
    %c0_233 = arith.constant 0 : index
    %302 = vector.load %arg6[%c0_230, %c3_231, %c0_232, %c0_233] : memref<2x7x11x128xf32, #tpu.memory_space<vmem>>, vector<2x1x7x128xf32>
    %303 = vector.broadcast %53 : vector<1x1x1x128xf32> to vector<2x1x7x128xf32>
    %304 = arith.mulf %302, %303 : vector<2x1x7x128xf32>
    %305 = arith.addf %301, %304 : vector<2x1x7x128xf32>
    %c0_234 = arith.constant 0 : index
    %c3_235 = arith.constant 3 : index
    %c1_236 = arith.constant 1 : index
    %c0_237 = arith.constant 0 : index
    %306 = vector.load %arg6[%c0_234, %c3_235, %c1_236, %c0_237] : memref<2x7x11x128xf32, #tpu.memory_space<vmem>>, vector<2x1x7x128xf32>
    %307 = vector.broadcast %56 : vector<1x1x1x128xf32> to vector<2x1x7x128xf32>
    %308 = arith.mulf %306, %307 : vector<2x1x7x128xf32>
    %309 = arith.addf %305, %308 : vector<2x1x7x128xf32>
    %c0_238 = arith.constant 0 : index
    %c3_239 = arith.constant 3 : index
    %c2_240 = arith.constant 2 : index
    %c0_241 = arith.constant 0 : index
    %310 = vector.load %arg6[%c0_238, %c3_239, %c2_240, %c0_241] : memref<2x7x11x128xf32, #tpu.memory_space<vmem>>, vector<2x1x7x128xf32>
    %311 = vector.broadcast %59 : vector<1x1x1x128xf32> to vector<2x1x7x128xf32>
    %312 = arith.mulf %310, %311 : vector<2x1x7x128xf32>
    %313 = arith.addf %309, %312 : vector<2x1x7x128xf32>
    %c0_242 = arith.constant 0 : index
    %c3_243 = arith.constant 3 : index
    %c3_244 = arith.constant 3 : index
    %c0_245 = arith.constant 0 : index
    %314 = vector.load %arg6[%c0_242, %c3_243, %c3_244, %c0_245] : memref<2x7x11x128xf32, #tpu.memory_space<vmem>>, vector<2x1x7x128xf32>
    %315 = vector.broadcast %62 : vector<1x1x1x128xf32> to vector<2x1x7x128xf32>
    %316 = arith.mulf %314, %315 : vector<2x1x7x128xf32>
    %317 = arith.addf %313, %316 : vector<2x1x7x128xf32>
    %c0_246 = arith.constant 0 : index
    %c3_247 = arith.constant 3 : index
    %c4_248 = arith.constant 4 : index
    %c0_249 = arith.constant 0 : index
    %318 = vector.load %arg6[%c0_246, %c3_247, %c4_248, %c0_249] : memref<2x7x11x128xf32, #tpu.memory_space<vmem>>, vector<2x1x7x128xf32>
    %319 = vector.broadcast %65 : vector<1x1x1x128xf32> to vector<2x1x7x128xf32>
    %320 = arith.mulf %318, %319 : vector<2x1x7x128xf32>
    %321 = arith.addf %317, %320 : vector<2x1x7x128xf32>
    %c0_250 = arith.constant 0 : index
    %c4_251 = arith.constant 4 : index
    %c0_252 = arith.constant 0 : index
    %c0_253 = arith.constant 0 : index
    %322 = vector.load %arg6[%c0_250, %c4_251, %c0_252, %c0_253] : memref<2x7x11x128xf32, #tpu.memory_space<vmem>>, vector<2x1x7x128xf32>
    %323 = vector.broadcast %68 : vector<1x1x1x128xf32> to vector<2x1x7x128xf32>
    %324 = arith.mulf %322, %323 : vector<2x1x7x128xf32>
    %325 = arith.addf %321, %324 : vector<2x1x7x128xf32>
    %c0_254 = arith.constant 0 : index
    %c4_255 = arith.constant 4 : index
    %c1_256 = arith.constant 1 : index
    %c0_257 = arith.constant 0 : index
    %326 = vector.load %arg6[%c0_254, %c4_255, %c1_256, %c0_257] : memref<2x7x11x128xf32, #tpu.memory_space<vmem>>, vector<2x1x7x128xf32>
    %327 = vector.broadcast %71 : vector<1x1x1x128xf32> to vector<2x1x7x128xf32>
    %328 = arith.mulf %326, %327 : vector<2x1x7x128xf32>
    %329 = arith.addf %325, %328 : vector<2x1x7x128xf32>
    %c0_258 = arith.constant 0 : index
    %c4_259 = arith.constant 4 : index
    %c2_260 = arith.constant 2 : index
    %c0_261 = arith.constant 0 : index
    %330 = vector.load %arg6[%c0_258, %c4_259, %c2_260, %c0_261] : memref<2x7x11x128xf32, #tpu.memory_space<vmem>>, vector<2x1x7x128xf32>
    %331 = vector.broadcast %74 : vector<1x1x1x128xf32> to vector<2x1x7x128xf32>
    %332 = arith.mulf %330, %331 : vector<2x1x7x128xf32>
    %333 = arith.addf %329, %332 : vector<2x1x7x128xf32>
    %c0_262 = arith.constant 0 : index
    %c4_263 = arith.constant 4 : index
    %c3_264 = arith.constant 3 : index
    %c0_265 = arith.constant 0 : index
    %334 = vector.load %arg6[%c0_262, %c4_263, %c3_264, %c0_265] : memref<2x7x11x128xf32, #tpu.memory_space<vmem>>, vector<2x1x7x128xf32>
    %335 = vector.broadcast %77 : vector<1x1x1x128xf32> to vector<2x1x7x128xf32>
    %336 = arith.mulf %334, %335 : vector<2x1x7x128xf32>
    %337 = arith.addf %333, %336 : vector<2x1x7x128xf32>
    %c0_266 = arith.constant 0 : index
    %c4_267 = arith.constant 4 : index
    %c4_268 = arith.constant 4 : index
    %c0_269 = arith.constant 0 : index
    %338 = vector.load %arg6[%c0_266, %c4_267, %c4_268, %c0_269] : memref<2x7x11x128xf32, #tpu.memory_space<vmem>>, vector<2x1x7x128xf32>
    %339 = vector.broadcast %80 : vector<1x1x1x128xf32> to vector<2x1x7x128xf32>
    %340 = arith.mulf %338, %339 : vector<2x1x7x128xf32>
    %341 = arith.addf %337, %340 : vector<2x1x7x128xf32>
    %c0_270 = arith.constant 0 : index
    %c2_271 = arith.constant 2 : index
    %c0_272 = arith.constant 0 : index
    %c0_273 = arith.constant 0 : index
    %342 = vector.load %arg7[%c0_270, %c2_271, %c0_272, %c0_273] : memref<2x7x7x128xf32, #tpu.memory_space<vmem>>, vector<2x1x7x128xf32>
    tpu.vector_store %arg7[%c0_270, %c2_271, %c0_272, %c0_273], %341 {strides = array<i32>} : memref<2x7x7x128xf32, #tpu.memory_space<vmem>>, vector<2x1x7x128xf32>,
    %cst_274 = arith.constant dense<0.000000e+00> : vector<128xf32>
    %343 = vector.multi_reduction <add>, %341, %cst_274 [0, 1, 2] : vector<2x1x7x128xf32> to vector<128xf32>
    %344 = vector.shape_cast %343 : vector<128xf32> to vector<1x1x1x128xf32>
    %345 = arith.addf %236, %344 : vector<1x1x1x128xf32>
    %346 = arith.mulf %341, %341 : vector<2x1x7x128xf32>
    %cst_275 = arith.constant dense<0.000000e+00> : vector<128xf32>
    %347 = vector.multi_reduction <add>, %346, %cst_275 [0, 1, 2] : vector<2x1x7x128xf32> to vector<128xf32>
    %348 = vector.shape_cast %347 : vector<128xf32> to vector<1x1x1x128xf32>
    %349 = arith.addf %240, %348 : vector<1x1x1x128xf32>
    %cst_276 = arith.constant 0.000000e+00 : f32
    %350 = vector.broadcast %cst_276 : f32 to vector<2x1x7x128xf32>
    %c0_277 = arith.constant 0 : index
    %c1_278 = arith.constant 1 : index
    %c0_279 = arith.constant 0 : index
    %c0_280 = arith.constant 0 : index
    %351 = vector.load %arg6[%c0_277, %c1_278, %c0_279, %c0_280] : memref<2x7x11x128xf32, #tpu.memory_space<vmem>>, vector<2x1x7x128xf32>
    %352 = vector.broadcast %8 : vector<1x1x1x128xf32> to vector<2x1x7x128xf32>
    %353 = arith.mulf %351, %352 : vector<2x1x7x128xf32>
    %354 = arith.addf %350, %353 : vector<2x1x7x128xf32>
    %c0_281 = arith.constant 0 : index
    %c1_282 = arith.constant 1 : index
    %c1_283 = arith.constant 1 : index
    %c0_284 = arith.constant 0 : index
    %355 = vector.load %arg6[%c0_281, %c1_282, %c1_283, %c0_284] : memref<2x7x11x128xf32, #tpu.memory_space<vmem>>, vector<2x1x7x128xf32>
    %356 = vector.broadcast %11 : vector<1x1x1x128xf32> to vector<2x1x7x128xf32>
    %357 = arith.mulf %355, %356 : vector<2x1x7x128xf32>
    %358 = arith.addf %354, %357 : vector<2x1x7x128xf32>
    %c0_285 = arith.constant 0 : index
    %c1_286 = arith.constant 1 : index
    %c2_287 = arith.constant 2 : index
    %c0_288 = arith.constant 0 : index
    %359 = vector.load %arg6[%c0_285, %c1_286, %c2_287, %c0_288] : memref<2x7x11x128xf32, #tpu.memory_space<vmem>>, vector<2x1x7x128xf32>
    %360 = vector.broadcast %14 : vector<1x1x1x128xf32> to vector<2x1x7x128xf32>
    %361 = arith.mulf %359, %360 : vector<2x1x7x128xf32>
    %362 = arith.addf %358, %361 : vector<2x1x7x128xf32>
    %c0_289 = arith.constant 0 : index
    %c1_290 = arith.constant 1 : index
    %c3_291 = arith.constant 3 : index
    %c0_292 = arith.constant 0 : index
    %363 = vector.load %arg6[%c0_289, %c1_290, %c3_291, %c0_292] : memref<2x7x11x128xf32, #tpu.memory_space<vmem>>, vector<2x1x7x128xf32>
    %364 = vector.broadcast %17 : vector<1x1x1x128xf32> to vector<2x1x7x128xf32>
    %365 = arith.mulf %363, %364 : vector<2x1x7x128xf32>
    %366 = arith.addf %362, %365 : vector<2x1x7x128xf32>
    %c0_293 = arith.constant 0 : index
    %c1_294 = arith.constant 1 : index
    %c4_295 = arith.constant 4 : index
    %c0_296 = arith.constant 0 : index
    %367 = vector.load %arg6[%c0_293, %c1_294, %c4_295, %c0_296] : memref<2x7x11x128xf32, #tpu.memory_space<vmem>>, vector<2x1x7x128xf32>
    %368 = vector.broadcast %20 : vector<1x1x1x128xf32> to vector<2x1x7x128xf32>
    %369 = arith.mulf %367, %368 : vector<2x1x7x128xf32>
    %370 = arith.addf %366, %369 : vector<2x1x7x128xf32>
    %c0_297 = arith.constant 0 : index
    %c2_298 = arith.constant 2 : index
    %c0_299 = arith.constant 0 : index
    %c0_300 = arith.constant 0 : index
    %371 = vector.load %arg6[%c0_297, %c2_298, %c0_299, %c0_300] : memref<2x7x11x128xf32, #tpu.memory_space<vmem>>, vector<2x1x7x128xf32>
    %372 = vector.broadcast %23 : vector<1x1x1x128xf32> to vector<2x1x7x128xf32>
    %373 = arith.mulf %371, %372 : vector<2x1x7x128xf32>
    %374 = arith.addf %370, %373 : vector<2x1x7x128xf32>
    %c0_301 = arith.constant 0 : index
    %c2_302 = arith.constant 2 : index
    %c1_303 = arith.constant 1 : index
    %c0_304 = arith.constant 0 : index
    %375 = vector.load %arg6[%c0_301, %c2_302, %c1_303, %c0_304] : memref<2x7x11x128xf32, #tpu.memory_space<vmem>>, vector<2x1x7x128xf32>
    %376 = vector.broadcast %26 : vector<1x1x1x128xf32> to vector<2x1x7x128xf32>
    %377 = arith.mulf %375, %376 : vector<2x1x7x128xf32>
    %378 = arith.addf %374, %377 : vector<2x1x7x128xf32>
    %c0_305 = arith.constant 0 : index
    %c2_306 = arith.constant 2 : index
    %c2_307 = arith.constant 2 : index
    %c0_308 = arith.constant 0 : index
    %379 = vector.load %arg6[%c0_305, %c2_306, %c2_307, %c0_308] : memref<2x7x11x128xf32, #tpu.memory_space<vmem>>, vector<2x1x7x128xf32>
    %380 = vector.broadcast %29 : vector<1x1x1x128xf32> to vector<2x1x7x128xf32>
    %381 = arith.mulf %379, %380 : vector<2x1x7x128xf32>
    %382 = arith.addf %378, %381 : vector<2x1x7x128xf32>
    %c0_309 = arith.constant 0 : index
    %c2_310 = arith.constant 2 : index
    %c3_311 = arith.constant 3 : index
    %c0_312 = arith.constant 0 : index
    %383 = vector.load %arg6[%c0_309, %c2_310, %c3_311, %c0_312] : memref<2x7x11x128xf32, #tpu.memory_space<vmem>>, vector<2x1x7x128xf32>
    %384 = vector.broadcast %32 : vector<1x1x1x128xf32> to vector<2x1x7x128xf32>
    %385 = arith.mulf %383, %384 : vector<2x1x7x128xf32>
    %386 = arith.addf %382, %385 : vector<2x1x7x128xf32>
    %c0_313 = arith.constant 0 : index
    %c2_314 = arith.constant 2 : index
    %c4_315 = arith.constant 4 : index
    %c0_316 = arith.constant 0 : index
    %387 = vector.load %arg6[%c0_313, %c2_314, %c4_315, %c0_316] : memref<2x7x11x128xf32, #tpu.memory_space<vmem>>, vector<2x1x7x128xf32>
    %388 = vector.broadcast %35 : vector<1x1x1x128xf32> to vector<2x1x7x128xf32>
    %389 = arith.mulf %387, %388 : vector<2x1x7x128xf32>
    %390 = arith.addf %386, %389 : vector<2x1x7x128xf32>
    %c0_317 = arith.constant 0 : index
    %c3_318 = arith.constant 3 : index
    %c0_319 = arith.constant 0 : index
    %c0_320 = arith.constant 0 : index
    %391 = vector.load %arg6[%c0_317, %c3_318, %c0_319, %c0_320] : memref<2x7x11x128xf32, #tpu.memory_space<vmem>>, vector<2x1x7x128xf32>
    %392 = vector.broadcast %38 : vector<1x1x1x128xf32> to vector<2x1x7x128xf32>
    %393 = arith.mulf %391, %392 : vector<2x1x7x128xf32>
    %394 = arith.addf %390, %393 : vector<2x1x7x128xf32>
    %c0_321 = arith.constant 0 : index
    %c3_322 = arith.constant 3 : index
    %c1_323 = arith.constant 1 : index
    %c0_324 = arith.constant 0 : index
    %395 = vector.load %arg6[%c0_321, %c3_322, %c1_323, %c0_324] : memref<2x7x11x128xf32, #tpu.memory_space<vmem>>, vector<2x1x7x128xf32>
    %396 = vector.broadcast %41 : vector<1x1x1x128xf32> to vector<2x1x7x128xf32>
    %397 = arith.mulf %395, %396 : vector<2x1x7x128xf32>
    %398 = arith.addf %394, %397 : vector<2x1x7x128xf32>
    %c0_325 = arith.constant 0 : index
    %c3_326 = arith.constant 3 : index
    %c2_327 = arith.constant 2 : index
    %c0_328 = arith.constant 0 : index
    %399 = vector.load %arg6[%c0_325, %c3_326, %c2_327, %c0_328] : memref<2x7x11x128xf32, #tpu.memory_space<vmem>>, vector<2x1x7x128xf32>
    %400 = vector.broadcast %44 : vector<1x1x1x128xf32> to vector<2x1x7x128xf32>
    %401 = arith.mulf %399, %400 : vector<2x1x7x128xf32>
    %402 = arith.addf %398, %401 : vector<2x1x7x128xf32>
    %c0_329 = arith.constant 0 : index
    %c3_330 = arith.constant 3 : index
    %c3_331 = arith.constant 3 : index
    %c0_332 = arith.constant 0 : index
    %403 = vector.load %arg6[%c0_329, %c3_330, %c3_331, %c0_332] : memref<2x7x11x128xf32, #tpu.memory_space<vmem>>, vector<2x1x7x128xf32>
    %404 = vector.broadcast %47 : vector<1x1x1x128xf32> to vector<2x1x7x128xf32>
    %405 = arith.mulf %403, %404 : vector<2x1x7x128xf32>
    %406 = arith.addf %402, %405 : vector<2x1x7x128xf32>
    %c0_333 = arith.constant 0 : index
    %c3_334 = arith.constant 3 : index
    %c4_335 = arith.constant 4 : index
    %c0_336 = arith.constant 0 : index
    %407 = vector.load %arg6[%c0_333, %c3_334, %c4_335, %c0_336] : memref<2x7x11x128xf32, #tpu.memory_space<vmem>>, vector<2x1x7x128xf32>
    %408 = vector.broadcast %50 : vector<1x1x1x128xf32> to vector<2x1x7x128xf32>
    %409 = arith.mulf %407, %408 : vector<2x1x7x128xf32>
    %410 = arith.addf %406, %409 : vector<2x1x7x128xf32>
    %c0_337 = arith.constant 0 : index
    %c4_338 = arith.constant 4 : index
    %c0_339 = arith.constant 0 : index
    %c0_340 = arith.constant 0 : index
    %411 = vector.load %arg6[%c0_337, %c4_338, %c0_339, %c0_340] : memref<2x7x11x128xf32, #tpu.memory_space<vmem>>, vector<2x1x7x128xf32>
    %412 = vector.broadcast %53 : vector<1x1x1x128xf32> to vector<2x1x7x128xf32>
    %413 = arith.mulf %411, %412 : vector<2x1x7x128xf32>
    %414 = arith.addf %410, %413 : vector<2x1x7x128xf32>
    %c0_341 = arith.constant 0 : index
    %c4_342 = arith.constant 4 : index
    %c1_343 = arith.constant 1 : index
    %c0_344 = arith.constant 0 : index
    %415 = vector.load %arg6[%c0_341, %c4_342, %c1_343, %c0_344] : memref<2x7x11x128xf32, #tpu.memory_space<vmem>>, vector<2x1x7x128xf32>
    %416 = vector.broadcast %56 : vector<1x1x1x128xf32> to vector<2x1x7x128xf32>
    %417 = arith.mulf %415, %416 : vector<2x1x7x128xf32>
    %418 = arith.addf %414, %417 : vector<2x1x7x128xf32>
    %c0_345 = arith.constant 0 : index
    %c4_346 = arith.constant 4 : index
    %c2_347 = arith.constant 2 : index
    %c0_348 = arith.constant 0 : index
    %419 = vector.load %arg6[%c0_345, %c4_346, %c2_347, %c0_348] : memref<2x7x11x128xf32, #tpu.memory_space<vmem>>, vector<2x1x7x128xf32>
    %420 = vector.broadcast %59 : vector<1x1x1x128xf32> to vector<2x1x7x128xf32>
    %421 = arith.mulf %419, %420 : vector<2x1x7x128xf32>
    %422 = arith.addf %418, %421 : vector<2x1x7x128xf32>
    %c0_349 = arith.constant 0 : index
    %c4_350 = arith.constant 4 : index
    %c3_351 = arith.constant 3 : index
    %c0_352 = arith.constant 0 : index
    %423 = vector.load %arg6[%c0_349, %c4_350, %c3_351, %c0_352] : memref<2x7x11x128xf32, #tpu.memory_space<vmem>>, vector<2x1x7x128xf32>
    %424 = vector.broadcast %62 : vector<1x1x1x128xf32> to vector<2x1x7x128xf32>
    %425 = arith.mulf %423, %424 : vector<2x1x7x128xf32>
    %426 = arith.addf %422, %425 : vector<2x1x7x128xf32>
    %c0_353 = arith.constant 0 : index
    %c4_354 = arith.constant 4 : index
    %c4_355 = arith.constant 4 : index
    %c0_356 = arith.constant 0 : index
    %427 = vector.load %arg6[%c0_353, %c4_354, %c4_355, %c0_356] : memref<2x7x11x128xf32, #tpu.memory_space<vmem>>, vector<2x1x7x128xf32>
    %428 = vector.broadcast %65 : vector<1x1x1x128xf32> to vector<2x1x7x128xf32>
    %429 = arith.mulf %427, %428 : vector<2x1x7x128xf32>
    %430 = arith.addf %426, %429 : vector<2x1x7x128xf32>
    %c0_357 = arith.constant 0 : index
    %c5 = arith.constant 5 : index
    %c0_358 = arith.constant 0 : index
    %c0_359 = arith.constant 0 : index
    %431 = vector.load %arg6[%c0_357, %c5, %c0_358, %c0_359] : memref<2x7x11x128xf32, #tpu.memory_space<vmem>>, vector<2x1x7x128xf32>
    %432 = vector.broadcast %68 : vector<1x1x1x128xf32> to vector<2x1x7x128xf32>
    %433 = arith.mulf %431, %432 : vector<2x1x7x128xf32>
    %434 = arith.addf %430, %433 : vector<2x1x7x128xf32>
    %c0_360 = arith.constant 0 : index
    %c5_361 = arith.constant 5 : index
    %c1_362 = arith.constant 1 : index
    %c0_363 = arith.constant 0 : index
    %435 = vector.load %arg6[%c0_360, %c5_361, %c1_362, %c0_363] : memref<2x7x11x128xf32, #tpu.memory_space<vmem>>, vector<2x1x7x128xf32>
    %436 = vector.broadcast %71 : vector<1x1x1x128xf32> to vector<2x1x7x128xf32>
    %437 = arith.mulf %435, %436 : vector<2x1x7x128xf32>
    %438 = arith.addf %434, %437 : vector<2x1x7x128xf32>
    %c0_364 = arith.constant 0 : index
    %c5_365 = arith.constant 5 : index
    %c2_366 = arith.constant 2 : index
    %c0_367 = arith.constant 0 : index
    %439 = vector.load %arg6[%c0_364, %c5_365, %c2_366, %c0_367] : memref<2x7x11x128xf32, #tpu.memory_space<vmem>>, vector<2x1x7x128xf32>
    %440 = vector.broadcast %74 : vector<1x1x1x128xf32> to vector<2x1x7x128xf32>
    %441 = arith.mulf %439, %440 : vector<2x1x7x128xf32>
    %442 = arith.addf %438, %441 : vector<2x1x7x128xf32>
    %c0_368 = arith.constant 0 : index
    %c5_369 = arith.constant 5 : index
    %c3_370 = arith.constant 3 : index
    %c0_371 = arith.constant 0 : index
    %443 = vector.load %arg6[%c0_368, %c5_369, %c3_370, %c0_371] : memref<2x7x11x128xf32, #tpu.memory_space<vmem>>, vector<2x1x7x128xf32>
    %444 = vector.broadcast %77 : vector<1x1x1x128xf32> to vector<2x1x7x128xf32>
    %445 = arith.mulf %443, %444 : vector<2x1x7x128xf32>
    %446 = arith.addf %442, %445 : vector<2x1x7x128xf32>
    %c0_372 = arith.constant 0 : index
    %c5_373 = arith.constant 5 : index
    %c4_374 = arith.constant 4 : index
    %c0_375 = arith.constant 0 : index
    %447 = vector.load %arg6[%c0_372, %c5_373, %c4_374, %c0_375] : memref<2x7x11x128xf32, #tpu.memory_space<vmem>>, vector<2x1x7x128xf32>
    %448 = vector.broadcast %80 : vector<1x1x1x128xf32> to vector<2x1x7x128xf32>
    %449 = arith.mulf %447, %448 : vector<2x1x7x128xf32>
    %450 = arith.addf %446, %449 : vector<2x1x7x128xf32>
    %c0_376 = arith.constant 0 : index
    %c3_377 = arith.constant 3 : index
    %c0_378 = arith.constant 0 : index
    %c0_379 = arith.constant 0 : index
    %451 = vector.load %arg7[%c0_376, %c3_377, %c0_378, %c0_379] : memref<2x7x7x128xf32, #tpu.memory_space<vmem>>, vector<2x1x7x128xf32>
    tpu.vector_store %arg7[%c0_376, %c3_377, %c0_378, %c0_379], %450 {strides = array<i32>} : memref<2x7x7x128xf32, #tpu.memory_space<vmem>>, vector<2x1x7x128xf32>,
    %cst_380 = arith.constant dense<0.000000e+00> : vector<128xf32>
    %452 = vector.multi_reduction <add>, %450, %cst_380 [0, 1, 2] : vector<2x1x7x128xf32> to vector<128xf32>
    %453 = vector.shape_cast %452 : vector<128xf32> to vector<1x1x1x128xf32>
    %454 = arith.addf %345, %453 : vector<1x1x1x128xf32>
    %455 = arith.mulf %450, %450 : vector<2x1x7x128xf32>
    %cst_381 = arith.constant dense<0.000000e+00> : vector<128xf32>
    %456 = vector.multi_reduction <add>, %455, %cst_381 [0, 1, 2] : vector<2x1x7x128xf32> to vector<128xf32>
    %457 = vector.shape_cast %456 : vector<128xf32> to vector<1x1x1x128xf32>
    %458 = arith.addf %349, %457 : vector<1x1x1x128xf32>
    %cst_382 = arith.constant 0.000000e+00 : f32
    %459 = vector.broadcast %cst_382 : f32 to vector<2x1x7x128xf32>
    %c0_383 = arith.constant 0 : index
    %c2_384 = arith.constant 2 : index
    %c0_385 = arith.constant 0 : index
    %c0_386 = arith.constant 0 : index
    %460 = vector.load %arg6[%c0_383, %c2_384, %c0_385, %c0_386] : memref<2x7x11x128xf32, #tpu.memory_space<vmem>>, vector<2x1x7x128xf32>
    %461 = vector.broadcast %8 : vector<1x1x1x128xf32> to vector<2x1x7x128xf32>
    %462 = arith.mulf %460, %461 : vector<2x1x7x128xf32>
    %463 = arith.addf %459, %462 : vector<2x1x7x128xf32>
    %c0_387 = arith.constant 0 : index
    %c2_388 = arith.constant 2 : index
    %c1_389 = arith.constant 1 : index
    %c0_390 = arith.constant 0 : index
    %464 = vector.load %arg6[%c0_387, %c2_388, %c1_389, %c0_390] : memref<2x7x11x128xf32, #tpu.memory_space<vmem>>, vector<2x1x7x128xf32>
    %465 = vector.broadcast %11 : vector<1x1x1x128xf32> to vector<2x1x7x128xf32>
    %466 = arith.mulf %464, %465 : vector<2x1x7x128xf32>
    %467 = arith.addf %463, %466 : vector<2x1x7x128xf32>
    %c0_391 = arith.constant 0 : index
    %c2_392 = arith.constant 2 : index
    %c2_393 = arith.constant 2 : index
    %c0_394 = arith.constant 0 : index
    %468 = vector.load %arg6[%c0_391, %c2_392, %c2_393, %c0_394] : memref<2x7x11x128xf32, #tpu.memory_space<vmem>>, vector<2x1x7x128xf32>
    %469 = vector.broadcast %14 : vector<1x1x1x128xf32> to vector<2x1x7x128xf32>
    %470 = arith.mulf %468, %469 : vector<2x1x7x128xf32>
    %471 = arith.addf %467, %470 : vector<2x1x7x128xf32>
    %c0_395 = arith.constant 0 : index
    %c2_396 = arith.constant 2 : index
    %c3_397 = arith.constant 3 : index
    %c0_398 = arith.constant 0 : index
    %472 = vector.load %arg6[%c0_395, %c2_396, %c3_397, %c0_398] : memref<2x7x11x128xf32, #tpu.memory_space<vmem>>, vector<2x1x7x128xf32>
    %473 = vector.broadcast %17 : vector<1x1x1x128xf32> to vector<2x1x7x128xf32>
    %474 = arith.mulf %472, %473 : vector<2x1x7x128xf32>
    %475 = arith.addf %471, %474 : vector<2x1x7x128xf32>
    %c0_399 = arith.constant 0 : index
    %c2_400 = arith.constant 2 : index
    %c4_401 = arith.constant 4 : index
    %c0_402 = arith.constant 0 : index
    %476 = vector.load %arg6[%c0_399, %c2_400, %c4_401, %c0_402] : memref<2x7x11x128xf32, #tpu.memory_space<vmem>>, vector<2x1x7x128xf32>
    %477 = vector.broadcast %20 : vector<1x1x1x128xf32> to vector<2x1x7x128xf32>
    %478 = arith.mulf %476, %477 : vector<2x1x7x128xf32>
    %479 = arith.addf %475, %478 : vector<2x1x7x128xf32>
    %c0_403 = arith.constant 0 : index
    %c3_404 = arith.constant 3 : index
    %c0_405 = arith.constant 0 : index
    %c0_406 = arith.constant 0 : index
    %480 = vector.load %arg6[%c0_403, %c3_404, %c0_405, %c0_406] : memref<2x7x11x128xf32, #tpu.memory_space<vmem>>, vector<2x1x7x128xf32>
    %481 = vector.broadcast %23 : vector<1x1x1x128xf32> to vector<2x1x7x128xf32>
    %482 = arith.mulf %480, %481 : vector<2x1x7x128xf32>
    %483 = arith.addf %479, %482 : vector<2x1x7x128xf32>
    %c0_407 = arith.constant 0 : index
    %c3_408 = arith.constant 3 : index
    %c1_409 = arith.constant 1 : index
    %c0_410 = arith.constant 0 : index
    %484 = vector.load %arg6[%c0_407, %c3_408, %c1_409, %c0_410] : memref<2x7x11x128xf32, #tpu.memory_space<vmem>>, vector<2x1x7x128xf32>
    %485 = vector.broadcast %26 : vector<1x1x1x128xf32> to vector<2x1x7x128xf32>
    %486 = arith.mulf %484, %485 : vector<2x1x7x128xf32>
    %487 = arith.addf %483, %486 : vector<2x1x7x128xf32>
    %c0_411 = arith.constant 0 : index
    %c3_412 = arith.constant 3 : index
    %c2_413 = arith.constant 2 : index
    %c0_414 = arith.constant 0 : index
    %488 = vector.load %arg6[%c0_411, %c3_412, %c2_413, %c0_414] : memref<2x7x11x128xf32, #tpu.memory_space<vmem>>, vector<2x1x7x128xf32>
    %489 = vector.broadcast %29 : vector<1x1x1x128xf32> to vector<2x1x7x128xf32>
    %490 = arith.mulf %488, %489 : vector<2x1x7x128xf32>
    %491 = arith.addf %487, %490 : vector<2x1x7x128xf32>
    %c0_415 = arith.constant 0 : index
    %c3_416 = arith.constant 3 : index
    %c3_417 = arith.constant 3 : index
    %c0_418 = arith.constant 0 : index
    %492 = vector.load %arg6[%c0_415, %c3_416, %c3_417, %c0_418] : memref<2x7x11x128xf32, #tpu.memory_space<vmem>>, vector<2x1x7x128xf32>
    %493 = vector.broadcast %32 : vector<1x1x1x128xf32> to vector<2x1x7x128xf32>
    %494 = arith.mulf %492, %493 : vector<2x1x7x128xf32>
    %495 = arith.addf %491, %494 : vector<2x1x7x128xf32>
    %c0_419 = arith.constant 0 : index
    %c3_420 = arith.constant 3 : index
    %c4_421 = arith.constant 4 : index
    %c0_422 = arith.constant 0 : index
    %496 = vector.load %arg6[%c0_419, %c3_420, %c4_421, %c0_422] : memref<2x7x11x128xf32, #tpu.memory_space<vmem>>, vector<2x1x7x128xf32>
    %497 = vector.broadcast %35 : vector<1x1x1x128xf32> to vector<2x1x7x128xf32>
    %498 = arith.mulf %496, %497 : vector<2x1x7x128xf32>
    %499 = arith.addf %495, %498 : vector<2x1x7x128xf32>
    %c0_423 = arith.constant 0 : index
    %c4_424 = arith.constant 4 : index
    %c0_425 = arith.constant 0 : index
    %c0_426 = arith.constant 0 : index
    %500 = vector.load %arg6[%c0_423, %c4_424, %c0_425, %c0_426] : memref<2x7x11x128xf32, #tpu.memory_space<vmem>>, vector<2x1x7x128xf32>
    %501 = vector.broadcast %38 : vector<1x1x1x128xf32> to vector<2x1x7x128xf32>
    %502 = arith.mulf %500, %501 : vector<2x1x7x128xf32>
    %503 = arith.addf %499, %502 : vector<2x1x7x128xf32>
    %c0_427 = arith.constant 0 : index
    %c4_428 = arith.constant 4 : index
    %c1_429 = arith.constant 1 : index
    %c0_430 = arith.constant 0 : index
    %504 = vector.load %arg6[%c0_427, %c4_428, %c1_429, %c0_430] : memref<2x7x11x128xf32, #tpu.memory_space<vmem>>, vector<2x1x7x128xf32>
    %505 = vector.broadcast %41 : vector<1x1x1x128xf32> to vector<2x1x7x128xf32>
    %506 = arith.mulf %504, %505 : vector<2x1x7x128xf32>
    %507 = arith.addf %503, %506 : vector<2x1x7x128xf32>
    %c0_431 = arith.constant 0 : index
    %c4_432 = arith.constant 4 : index
    %c2_433 = arith.constant 2 : index
    %c0_434 = arith.constant 0 : index
    %508 = vector.load %arg6[%c0_431, %c4_432, %c2_433, %c0_434] : memref<2x7x11x128xf32, #tpu.memory_space<vmem>>, vector<2x1x7x128xf32>
    %509 = vector.broadcast %44 : vector<1x1x1x128xf32> to vector<2x1x7x128xf32>
    %510 = arith.mulf %508, %509 : vector<2x1x7x128xf32>
    %511 = arith.addf %507, %510 : vector<2x1x7x128xf32>
    %c0_435 = arith.constant 0 : index
    %c4_436 = arith.constant 4 : index
    %c3_437 = arith.constant 3 : index
    %c0_438 = arith.constant 0 : index
    %512 = vector.load %arg6[%c0_435, %c4_436, %c3_437, %c0_438] : memref<2x7x11x128xf32, #tpu.memory_space<vmem>>, vector<2x1x7x128xf32>
    %513 = vector.broadcast %47 : vector<1x1x1x128xf32> to vector<2x1x7x128xf32>
    %514 = arith.mulf %512, %513 : vector<2x1x7x128xf32>
    %515 = arith.addf %511, %514 : vector<2x1x7x128xf32>
    %c0_439 = arith.constant 0 : index
    %c4_440 = arith.constant 4 : index
    %c4_441 = arith.constant 4 : index
    %c0_442 = arith.constant 0 : index
    %516 = vector.load %arg6[%c0_439, %c4_440, %c4_441, %c0_442] : memref<2x7x11x128xf32, #tpu.memory_space<vmem>>, vector<2x1x7x128xf32>
    %517 = vector.broadcast %50 : vector<1x1x1x128xf32> to vector<2x1x7x128xf32>
    %518 = arith.mulf %516, %517 : vector<2x1x7x128xf32>
    %519 = arith.addf %515, %518 : vector<2x1x7x128xf32>
    %c0_443 = arith.constant 0 : index
    %c5_444 = arith.constant 5 : index
    %c0_445 = arith.constant 0 : index
    %c0_446 = arith.constant 0 : index
    %520 = vector.load %arg6[%c0_443, %c5_444, %c0_445, %c0_446] : memref<2x7x11x128xf32, #tpu.memory_space<vmem>>, vector<2x1x7x128xf32>
    %521 = vector.broadcast %53 : vector<1x1x1x128xf32> to vector<2x1x7x128xf32>
    %522 = arith.mulf %520, %521 : vector<2x1x7x128xf32>
    %523 = arith.addf %519, %522 : vector<2x1x7x128xf32>
    %c0_447 = arith.constant 0 : index
    %c5_448 = arith.constant 5 : index
    %c1_449 = arith.constant 1 : index
    %c0_450 = arith.constant 0 : index
    %524 = vector.load %arg6[%c0_447, %c5_448, %c1_449, %c0_450] : memref<2x7x11x128xf32, #tpu.memory_space<vmem>>, vector<2x1x7x128xf32>
    %525 = vector.broadcast %56 : vector<1x1x1x128xf32> to vector<2x1x7x128xf32>
    %526 = arith.mulf %524, %525 : vector<2x1x7x128xf32>
    %527 = arith.addf %523, %526 : vector<2x1x7x128xf32>
    %c0_451 = arith.constant 0 : index
    %c5_452 = arith.constant 5 : index
    %c2_453 = arith.constant 2 : index
    %c0_454 = arith.constant 0 : index
    %528 = vector.load %arg6[%c0_451, %c5_452, %c2_453, %c0_454] : memref<2x7x11x128xf32, #tpu.memory_space<vmem>>, vector<2x1x7x128xf32>
    %529 = vector.broadcast %59 : vector<1x1x1x128xf32> to vector<2x1x7x128xf32>
    %530 = arith.mulf %528, %529 : vector<2x1x7x128xf32>
    %531 = arith.addf %527, %530 : vector<2x1x7x128xf32>
    %c0_455 = arith.constant 0 : index
    %c5_456 = arith.constant 5 : index
    %c3_457 = arith.constant 3 : index
    %c0_458 = arith.constant 0 : index
    %532 = vector.load %arg6[%c0_455, %c5_456, %c3_457, %c0_458] : memref<2x7x11x128xf32, #tpu.memory_space<vmem>>, vector<2x1x7x128xf32>
    %533 = vector.broadcast %62 : vector<1x1x1x128xf32> to vector<2x1x7x128xf32>
    %534 = arith.mulf %532, %533 : vector<2x1x7x128xf32>
    %535 = arith.addf %531, %534 : vector<2x1x7x128xf32>
    %c0_459 = arith.constant 0 : index
    %c5_460 = arith.constant 5 : index
    %c4_461 = arith.constant 4 : index
    %c0_462 = arith.constant 0 : index
    %536 = vector.load %arg6[%c0_459, %c5_460, %c4_461, %c0_462] : memref<2x7x11x128xf32, #tpu.memory_space<vmem>>, vector<2x1x7x128xf32>
    %537 = vector.broadcast %65 : vector<1x1x1x128xf32> to vector<2x1x7x128xf32>
    %538 = arith.mulf %536, %537 : vector<2x1x7x128xf32>
    %539 = arith.addf %535, %538 : vector<2x1x7x128xf32>
    %c0_463 = arith.constant 0 : index
    %c6 = arith.constant 6 : index
    %c0_464 = arith.constant 0 : index
    %c0_465 = arith.constant 0 : index
    %540 = vector.load %arg6[%c0_463, %c6, %c0_464, %c0_465] : memref<2x7x11x128xf32, #tpu.memory_space<vmem>>, vector<2x1x7x128xf32>
    %541 = vector.broadcast %68 : vector<1x1x1x128xf32> to vector<2x1x7x128xf32>
    %542 = arith.mulf %540, %541 : vector<2x1x7x128xf32>
    %543 = arith.addf %539, %542 : vector<2x1x7x128xf32>
    %c0_466 = arith.constant 0 : index
    %c6_467 = arith.constant 6 : index
    %c1_468 = arith.constant 1 : index
    %c0_469 = arith.constant 0 : index
    %544 = vector.load %arg6[%c0_466, %c6_467, %c1_468, %c0_469] : memref<2x7x11x128xf32, #tpu.memory_space<vmem>>, vector<2x1x7x128xf32>
    %545 = vector.broadcast %71 : vector<1x1x1x128xf32> to vector<2x1x7x128xf32>
    %546 = arith.mulf %544, %545 : vector<2x1x7x128xf32>
    %547 = arith.addf %543, %546 : vector<2x1x7x128xf32>
    %c0_470 = arith.constant 0 : index
    %c6_471 = arith.constant 6 : index
    %c2_472 = arith.constant 2 : index
    %c0_473 = arith.constant 0 : index
    %548 = vector.load %arg6[%c0_470, %c6_471, %c2_472, %c0_473] : memref<2x7x11x128xf32, #tpu.memory_space<vmem>>, vector<2x1x7x128xf32>
    %549 = vector.broadcast %74 : vector<1x1x1x128xf32> to vector<2x1x7x128xf32>
    %550 = arith.mulf %548, %549 : vector<2x1x7x128xf32>
    %551 = arith.addf %547, %550 : vector<2x1x7x128xf32>
    %c0_474 = arith.constant 0 : index
    %c6_475 = arith.constant 6 : index
    %c3_476 = arith.constant 3 : index
    %c0_477 = arith.constant 0 : index
    %552 = vector.load %arg6[%c0_474, %c6_475, %c3_476, %c0_477] : memref<2x7x11x128xf32, #tpu.memory_space<vmem>>, vector<2x1x7x128xf32>
    %553 = vector.broadcast %77 : vector<1x1x1x128xf32> to vector<2x1x7x128xf32>
    %554 = arith.mulf %552, %553 : vector<2x1x7x128xf32>
    %555 = arith.addf %551, %554 : vector<2x1x7x128xf32>
    %c0_478 = arith.constant 0 : index
    %c6_479 = arith.constant 6 : index
    %c4_480 = arith.constant 4 : index
    %c0_481 = arith.constant 0 : index
    %556 = vector.load %arg6[%c0_478, %c6_479, %c4_480, %c0_481] : memref<2x7x11x128xf32, #tpu.memory_space<vmem>>, vector<2x1x7x128xf32>
    %557 = vector.broadcast %80 : vector<1x1x1x128xf32> to vector<2x1x7x128xf32>
    %558 = arith.mulf %556, %557 : vector<2x1x7x128xf32>
    %559 = arith.addf %555, %558 : vector<2x1x7x128xf32>
    %c0_482 = arith.constant 0 : index
    %c4_483 = arith.constant 4 : index
    %c0_484 = arith.constant 0 : index
    %c0_485 = arith.constant 0 : index
    %560 = vector.load %arg7[%c0_482, %c4_483, %c0_484, %c0_485] : memref<2x7x7x128xf32, #tpu.memory_space<vmem>>, vector<2x1x7x128xf32>
    tpu.vector_store %arg7[%c0_482, %c4_483, %c0_484, %c0_485], %559 {strides = array<i32>} : memref<2x7x7x128xf32, #tpu.memory_space<vmem>>, vector<2x1x7x128xf32>,
    %cst_486 = arith.constant dense<0.000000e+00> : vector<128xf32>
    %561 = vector.multi_reduction <add>, %559, %cst_486 [0, 1, 2] : vector<2x1x7x128xf32> to vector<128xf32>
    %562 = vector.shape_cast %561 : vector<128xf32> to vector<1x1x1x128xf32>
    %563 = arith.addf %454, %562 : vector<1x1x1x128xf32>
    %564 = arith.mulf %559, %559 : vector<2x1x7x128xf32>
    %cst_487 = arith.constant dense<0.000000e+00> : vector<128xf32>
    %565 = vector.multi_reduction <add>, %564, %cst_487 [0, 1, 2] : vector<2x1x7x128xf32> to vector<128xf32>
    %566 = vector.shape_cast %565 : vector<128xf32> to vector<1x1x1x128xf32>
    %567 = arith.addf %458, %566 : vector<1x1x1x128xf32>
    %cst_488 = arith.constant 0.000000e+00 : f32
    %568 = vector.broadcast %cst_488 : f32 to vector<2x1x7x128xf32>
    %c0_489 = arith.constant 0 : index
    %c3_490 = arith.constant 3 : index
    %c0_491 = arith.constant 0 : index
    %c0_492 = arith.constant 0 : index
    %569 = vector.load %arg6[%c0_489, %c3_490, %c0_491, %c0_492] : memref<2x7x11x128xf32, #tpu.memory_space<vmem>>, vector<2x1x7x128xf32>
    %570 = vector.broadcast %8 : vector<1x1x1x128xf32> to vector<2x1x7x128xf32>
    %571 = arith.mulf %569, %570 : vector<2x1x7x128xf32>
    %572 = arith.addf %568, %571 : vector<2x1x7x128xf32>
    %c0_493 = arith.constant 0 : index
    %c3_494 = arith.constant 3 : index
    %c1_495 = arith.constant 1 : index
    %c0_496 = arith.constant 0 : index
    %573 = vector.load %arg6[%c0_493, %c3_494, %c1_495, %c0_496] : memref<2x7x11x128xf32, #tpu.memory_space<vmem>>, vector<2x1x7x128xf32>
    %574 = vector.broadcast %11 : vector<1x1x1x128xf32> to vector<2x1x7x128xf32>
    %575 = arith.mulf %573, %574 : vector<2x1x7x128xf32>
    %576 = arith.addf %572, %575 : vector<2x1x7x128xf32>
    %c0_497 = arith.constant 0 : index
    %c3_498 = arith.constant 3 : index
    %c2_499 = arith.constant 2 : index
    %c0_500 = arith.constant 0 : index
    %577 = vector.load %arg6[%c0_497, %c3_498, %c2_499, %c0_500] : memref<2x7x11x128xf32, #tpu.memory_space<vmem>>, vector<2x1x7x128xf32>
    %578 = vector.broadcast %14 : vector<1x1x1x128xf32> to vector<2x1x7x128xf32>
    %579 = arith.mulf %577, %578 : vector<2x1x7x128xf32>
    %580 = arith.addf %576, %579 : vector<2x1x7x128xf32>
    %c0_501 = arith.constant 0 : index
    %c3_502 = arith.constant 3 : index
    %c3_503 = arith.constant 3 : index
    %c0_504 = arith.constant 0 : index
    %581 = vector.load %arg6[%c0_501, %c3_502, %c3_503, %c0_504] : memref<2x7x11x128xf32, #tpu.memory_space<vmem>>, vector<2x1x7x128xf32>
    %582 = vector.broadcast %17 : vector<1x1x1x128xf32> to vector<2x1x7x128xf32>
    %583 = arith.mulf %581, %582 : vector<2x1x7x128xf32>
    %584 = arith.addf %580, %583 : vector<2x1x7x128xf32>
    %c0_505 = arith.constant 0 : index
    %c3_506 = arith.constant 3 : index
    %c4_507 = arith.constant 4 : index
    %c0_508 = arith.constant 0 : index
    %585 = vector.load %arg6[%c0_505, %c3_506, %c4_507, %c0_508] : memref<2x7x11x128xf32, #tpu.memory_space<vmem>>, vector<2x1x7x128xf32>
    %586 = vector.broadcast %20 : vector<1x1x1x128xf32> to vector<2x1x7x128xf32>
    %587 = arith.mulf %585, %586 : vector<2x1x7x128xf32>
    %588 = arith.addf %584, %587 : vector<2x1x7x128xf32>
    %c0_509 = arith.constant 0 : index
    %c4_510 = arith.constant 4 : index
    %c0_511 = arith.constant 0 : index
    %c0_512 = arith.constant 0 : index
    %589 = vector.load %arg6[%c0_509, %c4_510, %c0_511, %c0_512] : memref<2x7x11x128xf32, #tpu.memory_space<vmem>>, vector<2x1x7x128xf32>
    %590 = vector.broadcast %23 : vector<1x1x1x128xf32> to vector<2x1x7x128xf32>
    %591 = arith.mulf %589, %590 : vector<2x1x7x128xf32>
    %592 = arith.addf %588, %591 : vector<2x1x7x128xf32>
    %c0_513 = arith.constant 0 : index
    %c4_514 = arith.constant 4 : index
    %c1_515 = arith.constant 1 : index
    %c0_516 = arith.constant 0 : index
    %593 = vector.load %arg6[%c0_513, %c4_514, %c1_515, %c0_516] : memref<2x7x11x128xf32, #tpu.memory_space<vmem>>, vector<2x1x7x128xf32>
    %594 = vector.broadcast %26 : vector<1x1x1x128xf32> to vector<2x1x7x128xf32>
    %595 = arith.mulf %593, %594 : vector<2x1x7x128xf32>
    %596 = arith.addf %592, %595 : vector<2x1x7x128xf32>
    %c0_517 = arith.constant 0 : index
    %c4_518 = arith.constant 4 : index
    %c2_519 = arith.constant 2 : index
    %c0_520 = arith.constant 0 : index
    %597 = vector.load %arg6[%c0_517, %c4_518, %c2_519, %c0_520] : memref<2x7x11x128xf32, #tpu.memory_space<vmem>>, vector<2x1x7x128xf32>
    %598 = vector.broadcast %29 : vector<1x1x1x128xf32> to vector<2x1x7x128xf32>
    %599 = arith.mulf %597, %598 : vector<2x1x7x128xf32>
    %600 = arith.addf %596, %599 : vector<2x1x7x128xf32>
    %c0_521 = arith.constant 0 : index
    %c4_522 = arith.constant 4 : index
    %c3_523 = arith.constant 3 : index
    %c0_524 = arith.constant 0 : index
    %601 = vector.load %arg6[%c0_521, %c4_522, %c3_523, %c0_524] : memref<2x7x11x128xf32, #tpu.memory_space<vmem>>, vector<2x1x7x128xf32>
    %602 = vector.broadcast %32 : vector<1x1x1x128xf32> to vector<2x1x7x128xf32>
    %603 = arith.mulf %601, %602 : vector<2x1x7x128xf32>
    %604 = arith.addf %600, %603 : vector<2x1x7x128xf32>
    %c0_525 = arith.constant 0 : index
    %c4_526 = arith.constant 4 : index
    %c4_527 = arith.constant 4 : index
    %c0_528 = arith.constant 0 : index
    %605 = vector.load %arg6[%c0_525, %c4_526, %c4_527, %c0_528] : memref<2x7x11x128xf32, #tpu.memory_space<vmem>>, vector<2x1x7x128xf32>
    %606 = vector.broadcast %35 : vector<1x1x1x128xf32> to vector<2x1x7x128xf32>
    %607 = arith.mulf %605, %606 : vector<2x1x7x128xf32>
    %608 = arith.addf %604, %607 : vector<2x1x7x128xf32>
    %c0_529 = arith.constant 0 : index
    %c5_530 = arith.constant 5 : index
    %c0_531 = arith.constant 0 : index
    %c0_532 = arith.constant 0 : index
    %609 = vector.load %arg6[%c0_529, %c5_530, %c0_531, %c0_532] : memref<2x7x11x128xf32, #tpu.memory_space<vmem>>, vector<2x1x7x128xf32>
    %610 = vector.broadcast %38 : vector<1x1x1x128xf32> to vector<2x1x7x128xf32>
    %611 = arith.mulf %609, %610 : vector<2x1x7x128xf32>
    %612 = arith.addf %608, %611 : vector<2x1x7x128xf32>
    %c0_533 = arith.constant 0 : index
    %c5_534 = arith.constant 5 : index
    %c1_535 = arith.constant 1 : index
    %c0_536 = arith.constant 0 : index
    %613 = vector.load %arg6[%c0_533, %c5_534, %c1_535, %c0_536] : memref<2x7x11x128xf32, #tpu.memory_space<vmem>>, vector<2x1x7x128xf32>
    %614 = vector.broadcast %41 : vector<1x1x1x128xf32> to vector<2x1x7x128xf32>
    %615 = arith.mulf %613, %614 : vector<2x1x7x128xf32>
    %616 = arith.addf %612, %615 : vector<2x1x7x128xf32>
    %c0_537 = arith.constant 0 : index
    %c5_538 = arith.constant 5 : index
    %c2_539 = arith.constant 2 : index
    %c0_540 = arith.constant 0 : index
    %617 = vector.load %arg6[%c0_537, %c5_538, %c2_539, %c0_540] : memref<2x7x11x128xf32, #tpu.memory_space<vmem>>, vector<2x1x7x128xf32>
    %618 = vector.broadcast %44 : vector<1x1x1x128xf32> to vector<2x1x7x128xf32>
    %619 = arith.mulf %617, %618 : vector<2x1x7x128xf32>
    %620 = arith.addf %616, %619 : vector<2x1x7x128xf32>
    %c0_541 = arith.constant 0 : index
    %c5_542 = arith.constant 5 : index
    %c3_543 = arith.constant 3 : index
    %c0_544 = arith.constant 0 : index
    %621 = vector.load %arg6[%c0_541, %c5_542, %c3_543, %c0_544] : memref<2x7x11x128xf32, #tpu.memory_space<vmem>>, vector<2x1x7x128xf32>
    %622 = vector.broadcast %47 : vector<1x1x1x128xf32> to vector<2x1x7x128xf32>
    %623 = arith.mulf %621, %622 : vector<2x1x7x128xf32>
    %624 = arith.addf %620, %623 : vector<2x1x7x128xf32>
    %c0_545 = arith.constant 0 : index
    %c5_546 = arith.constant 5 : index
    %c4_547 = arith.constant 4 : index
    %c0_548 = arith.constant 0 : index
    %625 = vector.load %arg6[%c0_545, %c5_546, %c4_547, %c0_548] : memref<2x7x11x128xf32, #tpu.memory_space<vmem>>, vector<2x1x7x128xf32>
    %626 = vector.broadcast %50 : vector<1x1x1x128xf32> to vector<2x1x7x128xf32>
    %627 = arith.mulf %625, %626 : vector<2x1x7x128xf32>
    %628 = arith.addf %624, %627 : vector<2x1x7x128xf32>
    %c0_549 = arith.constant 0 : index
    %c6_550 = arith.constant 6 : index
    %c0_551 = arith.constant 0 : index
    %c0_552 = arith.constant 0 : index
    %629 = vector.load %arg6[%c0_549, %c6_550, %c0_551, %c0_552] : memref<2x7x11x128xf32, #tpu.memory_space<vmem>>, vector<2x1x7x128xf32>
    %630 = vector.broadcast %53 : vector<1x1x1x128xf32> to vector<2x1x7x128xf32>
    %631 = arith.mulf %629, %630 : vector<2x1x7x128xf32>
    %632 = arith.addf %628, %631 : vector<2x1x7x128xf32>
    %c0_553 = arith.constant 0 : index
    %c6_554 = arith.constant 6 : index
    %c1_555 = arith.constant 1 : index
    %c0_556 = arith.constant 0 : index
    %633 = vector.load %arg6[%c0_553, %c6_554, %c1_555, %c0_556] : memref<2x7x11x128xf32, #tpu.memory_space<vmem>>, vector<2x1x7x128xf32>
    %634 = vector.broadcast %56 : vector<1x1x1x128xf32> to vector<2x1x7x128xf32>
    %635 = arith.mulf %633, %634 : vector<2x1x7x128xf32>
    %636 = arith.addf %632, %635 : vector<2x1x7x128xf32>
    %c0_557 = arith.constant 0 : index
    %c6_558 = arith.constant 6 : index
    %c2_559 = arith.constant 2 : index
    %c0_560 = arith.constant 0 : index
    %637 = vector.load %arg6[%c0_557, %c6_558, %c2_559, %c0_560] : memref<2x7x11x128xf32, #tpu.memory_space<vmem>>, vector<2x1x7x128xf32>
    %638 = vector.broadcast %59 : vector<1x1x1x128xf32> to vector<2x1x7x128xf32>
    %639 = arith.mulf %637, %638 : vector<2x1x7x128xf32>
    %640 = arith.addf %636, %639 : vector<2x1x7x128xf32>
    %c0_561 = arith.constant 0 : index
    %c6_562 = arith.constant 6 : index
    %c3_563 = arith.constant 3 : index
    %c0_564 = arith.constant 0 : index
    %641 = vector.load %arg6[%c0_561, %c6_562, %c3_563, %c0_564] : memref<2x7x11x128xf32, #tpu.memory_space<vmem>>, vector<2x1x7x128xf32>
    %642 = vector.broadcast %62 : vector<1x1x1x128xf32> to vector<2x1x7x128xf32>
    %643 = arith.mulf %641, %642 : vector<2x1x7x128xf32>
    %644 = arith.addf %640, %643 : vector<2x1x7x128xf32>
    %c0_565 = arith.constant 0 : index
    %c6_566 = arith.constant 6 : index
    %c4_567 = arith.constant 4 : index
    %c0_568 = arith.constant 0 : index
    %645 = vector.load %arg6[%c0_565, %c6_566, %c4_567, %c0_568] : memref<2x7x11x128xf32, #tpu.memory_space<vmem>>, vector<2x1x7x128xf32>
    %646 = vector.broadcast %65 : vector<1x1x1x128xf32> to vector<2x1x7x128xf32>
    %647 = arith.mulf %645, %646 : vector<2x1x7x128xf32>
    %648 = arith.addf %644, %647 : vector<2x1x7x128xf32>
    %c0_569 = arith.constant 0 : index
    %c5_570 = arith.constant 5 : index
    %c0_571 = arith.constant 0 : index
    %c0_572 = arith.constant 0 : index
    %649 = vector.load %arg7[%c0_569, %c5_570, %c0_571, %c0_572] : memref<2x7x7x128xf32, #tpu.memory_space<vmem>>, vector<2x1x7x128xf32>
    tpu.vector_store %arg7[%c0_569, %c5_570, %c0_571, %c0_572], %648 {strides = array<i32>} : memref<2x7x7x128xf32, #tpu.memory_space<vmem>>, vector<2x1x7x128xf32>,
    %cst_573 = arith.constant dense<0.000000e+00> : vector<128xf32>
    %650 = vector.multi_reduction <add>, %648, %cst_573 [0, 1, 2] : vector<2x1x7x128xf32> to vector<128xf32>
    %651 = vector.shape_cast %650 : vector<128xf32> to vector<1x1x1x128xf32>
    %652 = arith.addf %563, %651 : vector<1x1x1x128xf32>
    %653 = arith.mulf %648, %648 : vector<2x1x7x128xf32>
    %cst_574 = arith.constant dense<0.000000e+00> : vector<128xf32>
    %654 = vector.multi_reduction <add>, %653, %cst_574 [0, 1, 2] : vector<2x1x7x128xf32> to vector<128xf32>
    %655 = vector.shape_cast %654 : vector<128xf32> to vector<1x1x1x128xf32>
    %656 = arith.addf %567, %655 : vector<1x1x1x128xf32>
    %cst_575 = arith.constant 0.000000e+00 : f32
    %657 = vector.broadcast %cst_575 : f32 to vector<2x1x7x128xf32>
    %c0_576 = arith.constant 0 : index
    %c4_577 = arith.constant 4 : index
    %c0_578 = arith.constant 0 : index
    %c0_579 = arith.constant 0 : index
    %658 = vector.load %arg6[%c0_576, %c4_577, %c0_578, %c0_579] : memref<2x7x11x128xf32, #tpu.memory_space<vmem>>, vector<2x1x7x128xf32>
    %659 = vector.broadcast %8 : vector<1x1x1x128xf32> to vector<2x1x7x128xf32>
    %660 = arith.mulf %658, %659 : vector<2x1x7x128xf32>
    %661 = arith.addf %657, %660 : vector<2x1x7x128xf32>
    %c0_580 = arith.constant 0 : index
    %c4_581 = arith.constant 4 : index
    %c1_582 = arith.constant 1 : index
    %c0_583 = arith.constant 0 : index
    %662 = vector.load %arg6[%c0_580, %c4_581, %c1_582, %c0_583] : memref<2x7x11x128xf32, #tpu.memory_space<vmem>>, vector<2x1x7x128xf32>
    %663 = vector.broadcast %11 : vector<1x1x1x128xf32> to vector<2x1x7x128xf32>
    %664 = arith.mulf %662, %663 : vector<2x1x7x128xf32>
    %665 = arith.addf %661, %664 : vector<2x1x7x128xf32>
    %c0_584 = arith.constant 0 : index
    %c4_585 = arith.constant 4 : index
    %c2_586 = arith.constant 2 : index
    %c0_587 = arith.constant 0 : index
    %666 = vector.load %arg6[%c0_584, %c4_585, %c2_586, %c0_587] : memref<2x7x11x128xf32, #tpu.memory_space<vmem>>, vector<2x1x7x128xf32>
    %667 = vector.broadcast %14 : vector<1x1x1x128xf32> to vector<2x1x7x128xf32>
    %668 = arith.mulf %666, %667 : vector<2x1x7x128xf32>
    %669 = arith.addf %665, %668 : vector<2x1x7x128xf32>
    %c0_588 = arith.constant 0 : index
    %c4_589 = arith.constant 4 : index
    %c3_590 = arith.constant 3 : index
    %c0_591 = arith.constant 0 : index
    %670 = vector.load %arg6[%c0_588, %c4_589, %c3_590, %c0_591] : memref<2x7x11x128xf32, #tpu.memory_space<vmem>>, vector<2x1x7x128xf32>
    %671 = vector.broadcast %17 : vector<1x1x1x128xf32> to vector<2x1x7x128xf32>
    %672 = arith.mulf %670, %671 : vector<2x1x7x128xf32>
    %673 = arith.addf %669, %672 : vector<2x1x7x128xf32>
    %c0_592 = arith.constant 0 : index
    %c4_593 = arith.constant 4 : index
    %c4_594 = arith.constant 4 : index
    %c0_595 = arith.constant 0 : index
    %674 = vector.load %arg6[%c0_592, %c4_593, %c4_594, %c0_595] : memref<2x7x11x128xf32, #tpu.memory_space<vmem>>, vector<2x1x7x128xf32>
    %675 = vector.broadcast %20 : vector<1x1x1x128xf32> to vector<2x1x7x128xf32>
    %676 = arith.mulf %674, %675 : vector<2x1x7x128xf32>
    %677 = arith.addf %673, %676 : vector<2x1x7x128xf32>
    %c0_596 = arith.constant 0 : index
    %c5_597 = arith.constant 5 : index
    %c0_598 = arith.constant 0 : index
    %c0_599 = arith.constant 0 : index
    %678 = vector.load %arg6[%c0_596, %c5_597, %c0_598, %c0_599] : memref<2x7x11x128xf32, #tpu.memory_space<vmem>>, vector<2x1x7x128xf32>
    %679 = vector.broadcast %23 : vector<1x1x1x128xf32> to vector<2x1x7x128xf32>
    %680 = arith.mulf %678, %679 : vector<2x1x7x128xf32>
    %681 = arith.addf %677, %680 : vector<2x1x7x128xf32>
    %c0_600 = arith.constant 0 : index
    %c5_601 = arith.constant 5 : index
    %c1_602 = arith.constant 1 : index
    %c0_603 = arith.constant 0 : index
    %682 = vector.load %arg6[%c0_600, %c5_601, %c1_602, %c0_603] : memref<2x7x11x128xf32, #tpu.memory_space<vmem>>, vector<2x1x7x128xf32>
    %683 = vector.broadcast %26 : vector<1x1x1x128xf32> to vector<2x1x7x128xf32>
    %684 = arith.mulf %682, %683 : vector<2x1x7x128xf32>
    %685 = arith.addf %681, %684 : vector<2x1x7x128xf32>
    %c0_604 = arith.constant 0 : index
    %c5_605 = arith.constant 5 : index
    %c2_606 = arith.constant 2 : index
    %c0_607 = arith.constant 0 : index
    %686 = vector.load %arg6[%c0_604, %c5_605, %c2_606, %c0_607] : memref<2x7x11x128xf32, #tpu.memory_space<vmem>>, vector<2x1x7x128xf32>
    %687 = vector.broadcast %29 : vector<1x1x1x128xf32> to vector<2x1x7x128xf32>
    %688 = arith.mulf %686, %687 : vector<2x1x7x128xf32>
    %689 = arith.addf %685, %688 : vector<2x1x7x128xf32>
    %c0_608 = arith.constant 0 : index
    %c5_609 = arith.constant 5 : index
    %c3_610 = arith.constant 3 : index
    %c0_611 = arith.constant 0 : index
    %690 = vector.load %arg6[%c0_608, %c5_609, %c3_610, %c0_611] : memref<2x7x11x128xf32, #tpu.memory_space<vmem>>, vector<2x1x7x128xf32>
    %691 = vector.broadcast %32 : vector<1x1x1x128xf32> to vector<2x1x7x128xf32>
    %692 = arith.mulf %690, %691 : vector<2x1x7x128xf32>
    %693 = arith.addf %689, %692 : vector<2x1x7x128xf32>
    %c0_612 = arith.constant 0 : index
    %c5_613 = arith.constant 5 : index
    %c4_614 = arith.constant 4 : index
    %c0_615 = arith.constant 0 : index
    %694 = vector.load %arg6[%c0_612, %c5_613, %c4_614, %c0_615] : memref<2x7x11x128xf32, #tpu.memory_space<vmem>>, vector<2x1x7x128xf32>
    %695 = vector.broadcast %35 : vector<1x1x1x128xf32> to vector<2x1x7x128xf32>
    %696 = arith.mulf %694, %695 : vector<2x1x7x128xf32>
    %697 = arith.addf %693, %696 : vector<2x1x7x128xf32>
    %c0_616 = arith.constant 0 : index
    %c6_617 = arith.constant 6 : index
    %c0_618 = arith.constant 0 : index
    %c0_619 = arith.constant 0 : index
    %698 = vector.load %arg6[%c0_616, %c6_617, %c0_618, %c0_619] : memref<2x7x11x128xf32, #tpu.memory_space<vmem>>, vector<2x1x7x128xf32>
    %699 = vector.broadcast %38 : vector<1x1x1x128xf32> to vector<2x1x7x128xf32>
    %700 = arith.mulf %698, %699 : vector<2x1x7x128xf32>
    %701 = arith.addf %697, %700 : vector<2x1x7x128xf32>
    %c0_620 = arith.constant 0 : index
    %c6_621 = arith.constant 6 : index
    %c1_622 = arith.constant 1 : index
    %c0_623 = arith.constant 0 : index
    %702 = vector.load %arg6[%c0_620, %c6_621, %c1_622, %c0_623] : memref<2x7x11x128xf32, #tpu.memory_space<vmem>>, vector<2x1x7x128xf32>
    %703 = vector.broadcast %41 : vector<1x1x1x128xf32> to vector<2x1x7x128xf32>
    %704 = arith.mulf %702, %703 : vector<2x1x7x128xf32>
    %705 = arith.addf %701, %704 : vector<2x1x7x128xf32>
    %c0_624 = arith.constant 0 : index
    %c6_625 = arith.constant 6 : index
    %c2_626 = arith.constant 2 : index
    %c0_627 = arith.constant 0 : index
    %706 = vector.load %arg6[%c0_624, %c6_625, %c2_626, %c0_627] : memref<2x7x11x128xf32, #tpu.memory_space<vmem>>, vector<2x1x7x128xf32>
    %707 = vector.broadcast %44 : vector<1x1x1x128xf32> to vector<2x1x7x128xf32>
    %708 = arith.mulf %706, %707 : vector<2x1x7x128xf32>
    %709 = arith.addf %705, %708 : vector<2x1x7x128xf32>
    %c0_628 = arith.constant 0 : index
    %c6_629 = arith.constant 6 : index
    %c3_630 = arith.constant 3 : index
    %c0_631 = arith.constant 0 : index
    %710 = vector.load %arg6[%c0_628, %c6_629, %c3_630, %c0_631] : memref<2x7x11x128xf32, #tpu.memory_space<vmem>>, vector<2x1x7x128xf32>
    %711 = vector.broadcast %47 : vector<1x1x1x128xf32> to vector<2x1x7x128xf32>
    %712 = arith.mulf %710, %711 : vector<2x1x7x128xf32>
    %713 = arith.addf %709, %712 : vector<2x1x7x128xf32>
    %c0_632 = arith.constant 0 : index
    %c6_633 = arith.constant 6 : index
    %c4_634 = arith.constant 4 : index
    %c0_635 = arith.constant 0 : index
    %714 = vector.load %arg6[%c0_632, %c6_633, %c4_634, %c0_635] : memref<2x7x11x128xf32, #tpu.memory_space<vmem>>, vector<2x1x7x128xf32>
    %715 = vector.broadcast %50 : vector<1x1x1x128xf32> to vector<2x1x7x128xf32>
    %716 = arith.mulf %714, %715 : vector<2x1x7x128xf32>
    %717 = arith.addf %713, %716 : vector<2x1x7x128xf32>
    %c0_636 = arith.constant 0 : index
    %c6_637 = arith.constant 6 : index
    %c0_638 = arith.constant 0 : index
    %c0_639 = arith.constant 0 : index
    %718 = vector.load %arg7[%c0_636, %c6_637, %c0_638, %c0_639] : memref<2x7x7x128xf32, #tpu.memory_space<vmem>>, vector<2x1x7x128xf32>
    tpu.vector_store %arg7[%c0_636, %c6_637, %c0_638, %c0_639], %717 {strides = array<i32>} : memref<2x7x7x128xf32, #tpu.memory_space<vmem>>, vector<2x1x7x128xf32>,
    %cst_640 = arith.constant dense<0.000000e+00> : vector<128xf32>
    %719 = vector.multi_reduction <add>, %717, %cst_640 [0, 1, 2] : vector<2x1x7x128xf32> to vector<128xf32>
    %720 = vector.shape_cast %719 : vector<128xf32> to vector<1x1x1x128xf32>
    %721 = arith.addf %652, %720 : vector<1x1x1x128xf32>
    %722 = arith.mulf %717, %717 : vector<2x1x7x128xf32>
    %cst_641 = arith.constant dense<0.000000e+00> : vector<128xf32>
    %723 = vector.multi_reduction <add>, %722, %cst_641 [0, 1, 2] : vector<2x1x7x128xf32> to vector<128xf32>
    %724 = vector.shape_cast %723 : vector<128xf32> to vector<1x1x1x128xf32>
    %725 = arith.addf %656, %724 : vector<1x1x1x128xf32>
    %cst_642 = arith.constant 9.800000e+01 : f32
    %726 = vector.broadcast %cst_642 : f32 to vector<1x1x1x128xf32>
    %727 = arith.divf %721, %726 : vector<1x1x1x128xf32>
    %cst_643 = arith.constant 9.800000e+01 : f32
    %728 = vector.broadcast %cst_643 : f32 to vector<1x1x1x128xf32>
    %729 = arith.divf %725, %728 : vector<1x1x1x128xf32>
    %730 = arith.mulf %727, %727 : vector<1x1x1x128xf32>
    %731 = arith.subf %729, %730 : vector<1x1x1x128xf32>
    %cst_644 = arith.constant 0.000000e+00 : f32
    %732 = vector.broadcast %cst_644 : f32 to vector<1x1x1x128xf32>
    %733 = arith.maximumf %731, %732 : vector<1x1x1x128xf32>
    %cst_645 = arith.constant 1.000000e-03 : f32
    %734 = vector.broadcast %cst_645 : f32 to vector<1x1x1x128xf32>
    %735 = arith.addf %733, %734 : vector<1x1x1x128xf32>
    %736 = math.rsqrt %735 : vector<1x1x1x128xf32>
    %c0_646 = arith.constant 0 : index
    %c0_647 = arith.constant 0 : index
    %737 = vector.load %arg3[%c0_646, %c0_647] : memref<1x128xf32, #tpu.memory_space<vmem>>, vector<1x128xf32>
    %738 = vector.shape_cast %737 : vector<1x128xf32> to vector<1x1x1x128xf32>
    %c0_648 = arith.constant 0 : index
    %c0_649 = arith.constant 0 : index
    %739 = vector.load %arg4[%c0_648, %c0_649] : memref<1x128xf32, #tpu.memory_space<vmem>>, vector<1x128xf32>
    %740 = vector.shape_cast %739 : vector<1x128xf32> to vector<1x1x1x128xf32>
    %741 = arith.mulf %738, %736 : vector<1x1x1x128xf32>
    %742 = arith.mulf %727, %741 : vector<1x1x1x128xf32>
    %743 = arith.subf %740, %742 : vector<1x1x1x128xf32>
    %c0_650 = arith.constant 0 : index
    %c0_651 = arith.constant 0 : index
    %c0_652 = arith.constant 0 : index
    %c0_653 = arith.constant 0 : index
    %744 = vector.load %arg7[%c0_650, %c0_651, %c0_652, %c0_653] : memref<2x7x7x128xf32, #tpu.memory_space<vmem>>, vector<2x7x7x128xf32>
    %745 = vector.broadcast %741 : vector<1x1x1x128xf32> to vector<2x7x7x128xf32>
    %746 = arith.mulf %744, %745 : vector<2x7x7x128xf32>
    %747 = vector.broadcast %743 : vector<1x1x1x128xf32> to vector<2x7x7x128xf32>
    %748 = arith.addf %746, %747 : vector<2x7x7x128xf32>
    %c0_654 = arith.constant 0 : index
    %c0_655 = arith.constant 0 : index
    %c0_656 = arith.constant 0 : index
    %c0_657 = arith.constant 0 : index
    %749 = vector.load %arg5[%c0_654, %c0_655, %c0_656, %c0_657] : memref<2x7x7x128xf32, #tpu.memory_space<vmem>>, vector<2x7x7x128xf32>
    tpu.vector_store %arg5[%c0_654, %c0_655, %c0_656, %c0_657], %748 {strides = array<i32>} : memref<2x7x7x128xf32, #tpu.memory_space<vmem>>, vector<2x7x7x128xf32>,
    return
  }
  func.func @transform_0(%arg0: i32) -> (i32, i32, i32, i32) {
    %c0_i32 = arith.constant 0 : i32
    %c0_i32_0 = arith.constant 0 : i32
    %c0_i32_1 = arith.constant 0 : i32
    %c0_i32_2 = arith.constant 0 : i32
    return %c0_i32, %c0_i32_0, %c0_i32_1, %arg0 : i32, i32, i32, i32
  }
  func.func @transform_1(%arg0: i32) -> (i32, i32, i32) {
    %c0_i32 = arith.constant 0 : i32
    %c0_i32_0 = arith.constant 0 : i32
    %c0_i32_1 = arith.constant 0 : i32
    return %c0_i32, %c0_i32_0, %arg0 : i32, i32, i32
  }
  func.func @transform_2(%arg0: i32) -> (i32, i32) {
    %c0_i32 = arith.constant 0 : i32
    %c0_i32_0 = arith.constant 0 : i32
    return %c0_i32, %arg0 : i32, i32
  }
  func.func @transform_3(%arg0: i32) -> (i32, i32) {
    %c0_i32 = arith.constant 0 : i32
    %c0_i32_0 = arith.constant 0 : i32
    return %c0_i32, %arg0 : i32, i32
  }
  func.func @transform_4(%arg0: i32) -> (i32, i32, i32, i32) {
    %c0_i32 = arith.constant 0 : i32
    %c0_i32_0 = arith.constant 0 : i32
    %c0_i32_1 = arith.constant 0 : i32
    %c0_i32_2 = arith.constant 0 : i32
    return %c0_i32, %c0_i32_0, %c0_i32_1, %arg0 : i32, i32, i32, i32
  }
}

</mosaic_0001>

<llo_original>
// kernel: tpu_custom_call.1
$region0: #{tpu_custom_call.1}
  #allocation0 [shape = 'u32[]', space=smem, size = 0x4, offset = 0x4, fixed_abs, tag = 'smem constant byte address 0x4 - core index']
  #allocation1 [shape = 'u32[72,128]{1,0:T(1,128)}', space=vmem, size = 0x9000, scoped, tag = 'internal scratch']
  #allocation2 [shape = 'f32[2,7,11,128]{3,2,1,0:T(8,128)}', space=vmem, size = 0x1c000, scoped, tag = 'scratch operand']
  #allocation3 [shape = 'f32[2,7,7,128]{3,2,1,0:T(8,128)}', space=vmem, size = 0xe000, scoped, tag = 'scratch operand']
  %s0 = inlined_call_operand.vmem [shape: f32[2,7,7,256], index: 0, kind: input, shape index: {}]
  %s1 = inlined_call_operand.vmem [shape: f32[5,5,256], index: 1, kind: input, shape index: {}]
  %s2 = inlined_call_operand.vmem [shape: f32[1,256], index: 2, kind: input, shape index: {}]
  %s3 = inlined_call_operand.vmem [shape: f32[1,256], index: 3, kind: input, shape index: {}]
  %s4 = inlined_call_operand.vmem [shape: f32[2,7,7,256], index: 4, kind: output, shape index: {}]
  %s5 = sld [smem:[#allocation0]]
  $region159: #{tpu_custom_call.1} parent=0
    _
  %s7 = ssub.s32 1, %s5
  %s8 = scalar_select 0, %s7, %s5
  $region1: #{tpu_custom_call.1} parent=0
    #allocation4 [shape = 'u8[114688]{0}', space=vmem, size = 0x1c000, scoped, tag = 'input window, operand 0']
    #allocation5 [shape = 'u8[40960]{0}', space=vmem, size = 0xa000, scoped, tag = 'input window, operand 1']
    #allocation6 [shape = 'u8[114688]{0}', space=vmem, size = 0x1c000, scoped, tag = 'output window, operand 0']
    loop: start=0, step=1, limit=4
    $region2: #{tpu_custom_call.1} parent=1 // loop_pre_header
      _
    $region3: #{tpu_custom_call.1} parent=1 // loop_header
      %s10 = sphi 0, %s14
      %p11 = scmp.ge.s32.totalorder %s10, 4
      %s20 = sphi 0, %s22
      %s23 = sphi 0, %s20
      %s24 = sphi 0, %s23
      %s40 = sphi 0, %s24
      %s46 = sphi 0, %s48
      %s49 = sphi 0, %s46
      %s50 = sphi 0, %s49
      %s66 = sphi 0, %s50
      %s72 = sphi 0, %s74
      %s75 = sphi 0, %s72
      %s76 = sphi 0, %s75
      %s92 = sphi 0, %s76
      %s98 = sphi 0, %s100
      %s101 = sphi 0, %s98
      %s102 = sphi 0, %s101
      %s118 = sphi 0, %s102
      %s124 = sphi 0, %s126
      %s127 = sphi 0, %s124
      %s128 = sphi 0, %s127
      %s144 = sphi 0, %s128
    $region4: #{tpu_custom_call.1} parent=1 // loop_header_branch
      %13 = sbr.rel (%p11) target = $region8
    $region5: #{tpu_custom_call.1} parent=1 // loop_body
      %s15 = ssub.s32 %s10, 1
      %s16 = ssub.s32 %s10, 2
      %s17 = sadd.s32 %s10, 1
      %s18 = ssub.s32 %s10, %s17
      %p19 = scmp.eq.s32.totalorder %s18, 0
      %s21 = sadd.s32 %s20, 1
      %s22 = scalar_select %p19, %s20, %s21
      %p25 = pneg %p19
      %p26 = scmp.eq.s32.totalorder %s10, 1
      %p27 = por %p25, %p26
      %p28 = scmp.ne.s32.totalorder %s20, %s23
      %p29 = scmp.eq.s32.totalorder %s10, 0
      %p30 = por %p28, %p29
      %p31 = scmp.ne.s32.totalorder %s20, %s23
      %p32 = scmp.eq.s32.totalorder %s15, 1
      %p33 = por %p31, %p32
      %p34 = scmp.ne.s32.totalorder %s23, %s24
      %p35 = scmp.eq.s32.totalorder %s15, 0
      %p36 = por %p34, %p35
      %p37 = scmp.ne.s32.totalorder %s23, %s24
      %p38 = scmp.eq.s32.totalorder %s16, 1
      %p39 = por %p37, %p38
      %p41 = scmp.ne.s32.totalorder %s24, %s40
      %p42 = scmp.eq.s32.totalorder %s16, 0
      %p43 = por %p41, %p42
      %s44 = ssub.s32 %s10, %s17
      %p45 = scmp.eq.s32.totalorder %s44, 0
      %s47 = sadd.s32 %s46, 1
      %s48 = scalar_select %p45, %s46, %s47
      %p51 = pneg %p45
      %p52 = scmp.eq.s32.totalorder %s10, 1
      %p53 = por %p51, %p52
      %p54 = scmp.ne.s32.totalorder %s46, %s49
      %p55 = scmp.eq.s32.totalorder %s10, 0
      %p56 = por %p54, %p55
      %p57 = scmp.ne.s32.totalorder %s46, %s49
      %p58 = scmp.eq.s32.totalorder %s15, 1
      %p59 = por %p57, %p58
      %p60 = scmp.ne.s32.totalorder %s49, %s50
      %p61 = scmp.eq.s32.totalorder %s15, 0
      %p62 = por %p60, %p61
      %p63 = scmp.ne.s32.totalorder %s49, %s50
      %p64 = scmp.eq.s32.totalorder %s16, 1
      %p65 = por %p63, %p64
      %p67 = scmp.ne.s32.totalorder %s50, %s66
      %p68 = scmp.eq.s32.totalorder %s16, 0
      %p69 = por %p67, %p68
      %s70 = ssub.s32 %s10, %s17
      %p71 = scmp.eq.s32.totalorder %s70, 0
      %s73 = sadd.s32 %s72, 1
      %s74 = scalar_select %p71, %s72, %s73
      %p77 = pneg %p71
      %p78 = scmp.eq.s32.totalorder %s10, 1
      %p79 = por %p77, %p78
      %p80 = scmp.ne.s32.totalorder %s72, %s75
      %p81 = scmp.eq.s32.totalorder %s10, 0
      %p82 = por %p80, %p81
      %p83 = scmp.ne.s32.totalorder %s72, %s75
      %p84 = scmp.eq.s32.totalorder %s15, 1
      %p85 = por %p83, %p84
      %p86 = scmp.ne.s32.totalorder %s75, %s76
      %p87 = scmp.eq.s32.totalorder %s15, 0
      %p88 = por %p86, %p87
      %p89 = scmp.ne.s32.totalorder %s75, %s76
      %p90 = scmp.eq.s32.totalorder %s16, 1
      %p91 = por %p89, %p90
      %p93 = scmp.ne.s32.totalorder %s76, %s92
      %p94 = scmp.eq.s32.totalorder %s16, 0
      %p95 = por %p93, %p94
      %s96 = ssub.s32 %s10, %s17
      %p97 = scmp.eq.s32.totalorder %s96, 0
      %s99 = sadd.s32 %s98, 1
      %s100 = scalar_select %p97, %s98, %s99
      %p103 = pneg %p97
      %p104 = scmp.eq.s32.totalorder %s10, 1
      %p105 = por %p103, %p104
      %p106 = scmp.ne.s32.totalorder %s98, %s101
      %p107 = scmp.eq.s32.totalorder %s10, 0
      %p108 = por %p106, %p107
      %p109 = scmp.ne.s32.totalorder %s98, %s101
      %p110 = scmp.eq.s32.totalorder %s15, 1
      %p111 = por %p109, %p110
      %p112 = scmp.ne.s32.totalorder %s101, %s102
      %p113 = scmp.eq.s32.totalorder %s15, 0
      %p114 = por %p112, %p113
      %p115 = scmp.ne.s32.totalorder %s101, %s102
      %p116 = scmp.eq.s32.totalorder %s16, 1
      %p117 = por %p115, %p116
      %p119 = scmp.ne.s32.totalorder %s102, %s118
      %p120 = scmp.eq.s32.totalorder %s16, 0
      %p121 = por %p119, %p120
      %s122 = ssub.s32 %s10, %s17
      %p123 = scmp.eq.s32.totalorder %s122, 0
      %s125 = sadd.s32 %s124, 1
      %s126 = scalar_select %p123, %s124, %s125
      %p129 = pneg %p123
      %p130 = scmp.eq.s32.totalorder %s10, 1
      %p131 = por %p129, %p130
      %p132 = scmp.ne.s32.totalorder %s124, %s127
      %p133 = scmp.eq.s32.totalorder %s10, 0
      %p134 = por %p132, %p133
      %p135 = scmp.ne.s32.totalorder %s124, %s127
      %p136 = scmp.eq.s32.totalorder %s15, 1
      %p137 = por %p135, %p136
      %p138 = scmp.ne.s32.totalorder %s127, %s128
      %p139 = scmp.eq.s32.totalorder %s15, 0
      %p140 = por %p138, %p139
      %p141 = scmp.ne.s32.totalorder %s127, %s128
      %p142 = scmp.eq.s32.totalorder %s16, 1
      %p143 = por %p141, %p142
      %p145 = scmp.ne.s32.totalorder %s128, %s144
      %p146 = scmp.eq.s32.totalorder %s16, 0
      %p147 = por %p145, %p146
      %p148 = scmp.le.s32.totalorder 1, %s10
      %p149 = scmp.lt.s32.totalorder %s10, 3
      %p150 = pnand %p148, %p149
      %p151 = pneg %p150
      // Predicated region
      $region9: #{tpu_custom_call.1} parent=5 // pred_check
        _
      $region10: #{tpu_custom_call.1} parent=5 // pred_check_branch
        %153 = sbr.rel (%p150) target = $region12
      $region11: #{tpu_custom_call.1} parent=5 // pred_region
        %s154 = ssub.s32 %s10, 1
      $region12: #{tpu_custom_call.1} parent=5 // pred_fallthru
        _
      %p155 = scmp.lt.s32.totalorder %s10, 2
      // Predicated region
      $region13: #{tpu_custom_call.1} parent=5 // pred_check
        %p156 = pneg %p155
      $region14: #{tpu_custom_call.1} parent=5 // pred_check_branch
        %158 = sbr.rel (%p156) target = $region16
      $region15: #{tpu_custom_call.1} parent=5 // pred_region
        // Predicated region
        $region17: #{tpu_custom_call.1} parent=15 // pred_check
          %p159 = pneg %p30
        $region18: #{tpu_custom_call.1} parent=15 // pred_check_branch
          %161 = sbr.rel (%p159) target = $region20
        $region19: #{tpu_custom_call.1} parent=15 // pred_region
          %s162 = sand.u32 %s20, 1
          %s163 = sand.u32 %s20, 1
          %s164 = smul.addr %s163, 112
          %s165 = scalar_lea.vmem [#allocation4], %s164
          %s166 = smul.addr %s10, 8
          %s167 = scalar_lea.vmem %s0, %s166
          // Predicated region
          $region21: #{tpu_custom_call.1} parent=19 // pred_check
            _
          $region22: #{tpu_custom_call.1} parent=19 // pred_check_branch
            %169 = sbr.rel (0) target = $region24
          $region23: #{tpu_custom_call.1} parent=19 // pred_region
            // Predicated region
            $region25: #{tpu_custom_call.1} parent=23 // pred_check
              _
            $region26: #{tpu_custom_call.1} parent=23 // pred_check_branch
              %171 = sbr.rel (0) target = $region28
            $region27: #{tpu_custom_call.1} parent=23 // pred_region
              // Predicated region
              $region40: #{tpu_custom_call.1} parent=27 // pred_check
                _
              $region41: #{tpu_custom_call.1} parent=27 // pred_check_branch
                %213 = sbr.rel (0) target = $region43
              $region42: #{tpu_custom_call.1} parent=27 // pred_region
                loop: start=0, step=1, limit=1
                $region44: #{tpu_custom_call.1} parent=42 // loop_pre_header
                  _
                $region45: #{tpu_custom_call.1} parent=42 // loop_header
                  %s215 = sphi 0, %s219
                  %p216 = scmp.ge.s32.totalorder %s215, 1
                  %s220 = sphi %s167, %s167
                  %s221 = sphi %s165, %s165
                $region46: #{tpu_custom_call.1} parent=42 // loop_header_branch
                  %218 = sbr.rel (%p216) target = $region50
                $region47: #{tpu_custom_call.1} parent=42 // loop_body
                  %v222 = vld [vmem:[%s220] sm:$0xff]
                  %223 = vst [vmem:[%s221] sm:$0xff] %v222
                  %v224 = vld [vmem:[%s220 + $0x10] sm:$0xff]
                  %225 = vst [vmem:[%s221 + $0x8] sm:$0xff] %v224
                  %v226 = vld [vmem:[%s220 + $0x20] sm:$0xff]
                  %227 = vst [vmem:[%s221 + $0x10] sm:$0xff] %v226
                  %v228 = vld [vmem:[%s220 + $0x30] sm:$0xff]
                  %229 = vst [vmem:[%s221 + $0x18] sm:$0xff] %v228
                  %v230 = vld [vmem:[%s220 + $0x40] sm:$0xff]
                  %231 = vst [vmem:[%s221 + $0x20] sm:$0xff] %v230
                  %v232 = vld [vmem:[%s220 + $0x50] sm:$0xff]
                  %233 = vst [vmem:[%s221 + $0x28] sm:$0xff] %v232
                  %v234 = vld [vmem:[%s220 + $0x60] sm:$0xff]
                  %235 = vst [vmem:[%s221 + $0x30] sm:$0xff] %v234
                  %v236 = vld [vmem:[%s220 + $0x70] sm:$0xff]
                  %237 = vst [vmem:[%s221 + $0x38] sm:$0xff] %v236
                  %v238 = vld [vmem:[%s220 + $0x80] sm:$0xff]
                  %239 = vst [vmem:[%s221 + $0x40] sm:$0xff] %v238
                  %v240 = vld [vmem:[%s220 + $0x90] sm:$0xff]
                  %241 = vst [vmem:[%s221 + $0x48] sm:$0xff] %v240
                  %v242 = vld [vmem:[%s220 + $0xa0] sm:$0xff]
                  %243 = vst [vmem:[%s221 + $0x50] sm:$0xff] %v242
                  %v244 = vld [vmem:[%s220 + $0xb0] sm:$0xff]
                  %245 = vst [vmem:[%s221 + $0x58] sm:$0xff] %v244
                  %v246 = vld [vmem:[%s220 + $0xc0] sm:$0xff]
                  %247 = vst [vmem:[%s221 + $0x60] sm:$0xff] %v246
                  %v248 = vld [vmem:[%s220 + $0xd0] sm:$0xff]
                  %249 = vst [vmem:[%s221 + $0x68] sm:$0xff] %v248
                $region48: #{tpu_custom_call.1} parent=42 // loop_footer
                  %s219 = sadd.s32 1, %s215
                $region49: #{tpu_custom_call.1} parent=42 // loop_footer_branch
                  %214 = sbr.rel target = $region45
                $region50: #{tpu_custom_call.1} parent=42 // loop_exit
                  _
              $region43: #{tpu_custom_call.1} parent=27 // pred_fallthru
                _
              // Predicated region
              $region51: #{tpu_custom_call.1} parent=27 // pred_check
                _
              $region52: #{tpu_custom_call.1} parent=27 // pred_check_branch
                %251 = sbr.rel target = $region54
              $region53: #{tpu_custom_call.1} parent=27 // pred_region
                _
              $region54: #{tpu_custom_call.1} parent=27 // pred_fallthru
                _
            $region28: #{tpu_custom_call.1} parent=23 // pred_fallthru
              _
            // Predicated region
            $region29: #{tpu_custom_call.1} parent=23 // pred_check
              _
            $region30: #{tpu_custom_call.1} parent=23 // pred_check_branch
              %173 = sbr.rel target = $region32
            $region31: #{tpu_custom_call.1} parent=23 // pred_region
              %s175 = ssub.s32 256, 1
              loop: start=0, step=1, limit=1
              $region33: #{tpu_custom_call.1} parent=31 // loop_pre_header
                _
              $region34: #{tpu_custom_call.1} parent=31 // loop_header
                %s177 = sphi 0, %s181
                %p178 = scmp.ge.s32.totalorder %s177, 1
                %s182 = sphi %s167, %s167
                %s183 = sphi %s165, %s165
              $region35: #{tpu_custom_call.1} parent=31 // loop_header_branch
                %180 = sbr.rel (%p178) target = $region39
              $region36: #{tpu_custom_call.1} parent=31 // loop_body
                %v184 = vld [vmem:[%s182] sm:%s175]
                %185 = vst [vmem:[%s183] sm:%s175] %v184
                %v186 = vld [vmem:[%s182 + $0x10] sm:%s175]
                %187 = vst [vmem:[%s183 + $0x8] sm:%s175] %v186
                %v188 = vld [vmem:[%s182 + $0x20] sm:%s175]
                %189 = vst [vmem:[%s183 + $0x10] sm:%s175] %v188
                %v190 = vld [vmem:[%s182 + $0x30] sm:%s175]
                %191 = vst [vmem:[%s183 + $0x18] sm:%s175] %v190
                %v192 = vld [vmem:[%s182 + $0x40] sm:%s175]
                %193 = vst [vmem:[%s183 + $0x20] sm:%s175] %v192
                %v194 = vld [vmem:[%s182 + $0x50] sm:%s175]
                %195 = vst [vmem:[%s183 + $0x28] sm:%s175] %v194
                %v196 = vld [vmem:[%s182 + $0x60] sm:%s175]
                %197 = vst [vmem:[%s183 + $0x30] sm:%s175] %v196
                %v198 = vld [vmem:[%s182 + $0x70] sm:%s175]
                %199 = vst [vmem:[%s183 + $0x38] sm:%s175] %v198
                %v200 = vld [vmem:[%s182 + $0x80] sm:%s175]
                %201 = vst [vmem:[%s183 + $0x40] sm:%s175] %v200
                %v202 = vld [vmem:[%s182 + $0x90] sm:%s175]
                %203 = vst [vmem:[%s183 + $0x48] sm:%s175] %v202
                %v204 = vld [vmem:[%s182 + $0xa0] sm:%s175]
                %205 = vst [vmem:[%s183 + $0x50] sm:%s175] %v204
                %v206 = vld [vmem:[%s182 + $0xb0] sm:%s175]
                %207 = vst [vmem:[%s183 + $0x58] sm:%s175] %v206
                %v208 = vld [vmem:[%s182 + $0xc0] sm:%s175]
                %209 = vst [vmem:[%s183 + $0x60] sm:%s175] %v208
                %v210 = vld [vmem:[%s182 + $0xd0] sm:%s175]
                %211 = vst [vmem:[%s183 + $0x68] sm:%s175] %v210
              $region37: #{tpu_custom_call.1} parent=31 // loop_footer
                %s181 = sadd.s32 1, %s177
              $region38: #{tpu_custom_call.1} parent=31 // loop_footer_branch
                %176 = sbr.rel target = $region34
              $region39: #{tpu_custom_call.1} parent=31 // loop_exit
                _
            $region32: #{tpu_custom_call.1} parent=23 // pred_fallthru
              _
          $region24: #{tpu_custom_call.1} parent=19 // pred_fallthru
            _
          %252 = vnop
        $region20: #{tpu_custom_call.1} parent=15 // pred_fallthru
          _
        // Predicated region
        $region55: #{tpu_custom_call.1} parent=15 // pred_check
          %p253 = pneg %p56
        $region56: #{tpu_custom_call.1} parent=15 // pred_check_branch
          %255 = sbr.rel (%p253) target = $region58
        $region57: #{tpu_custom_call.1} parent=15 // pred_region
          %s256 = sand.u32 %s46, 1
          %s257 = sand.u32 %s46, 1
          %s258 = smul.addr %s257, 40
          %s259 = scalar_lea.vmem [#allocation5], %s258
          %s260 = smul.addr %s10, 8
          %s261 = scalar_lea.vmem %s1, %s260
          // Predicated region
          $region59: #{tpu_custom_call.1} parent=57 // pred_check
            _
          $region60: #{tpu_custom_call.1} parent=57 // pred_check_branch
            %263 = sbr.rel (0) target = $region62
          $region61: #{tpu_custom_call.1} parent=57 // pred_region
            // Predicated region
            $region63: #{tpu_custom_call.1} parent=61 // pred_check
              _
            $region64: #{tpu_custom_call.1} parent=61 // pred_check_branch
              %265 = sbr.rel (0) target = $region66
            $region65: #{tpu_custom_call.1} parent=61 // pred_region
              // Predicated region
              $region78: #{tpu_custom_call.1} parent=65 // pred_check
                _
              $region79: #{tpu_custom_call.1} parent=65 // pred_check_branch
                %289 = sbr.rel (0) target = $region81
              $region80: #{tpu_custom_call.1} parent=65 // pred_region
                loop: start=0, step=1, limit=1
                $region82: #{tpu_custom_call.1} parent=80 // loop_pre_header
                  _
                $region83: #{tpu_custom_call.1} parent=80 // loop_header
                  %s291 = sphi 0, %s295
                  %p292 = scmp.ge.s32.totalorder %s291, 1
                  %s296 = sphi %s261, %s261
                  %s297 = sphi %s259, %s259
                $region84: #{tpu_custom_call.1} parent=80 // loop_header_branch
                  %294 = sbr.rel (%p292) target = $region88
                $region85: #{tpu_custom_call.1} parent=80 // loop_body
                  %v298 = vld [vmem:[%s296] sm:$0xff]
                  %299 = vst [vmem:[%s297] sm:$0xff] %v298
                  %v300 = vld [vmem:[%s296 + $0x10] sm:$0xff]
                  %301 = vst [vmem:[%s297 + $0x8] sm:$0xff] %v300
                  %v302 = vld [vmem:[%s296 + $0x20] sm:$0xff]
                  %303 = vst [vmem:[%s297 + $0x10] sm:$0xff] %v302
                  %v304 = vld [vmem:[%s296 + $0x30] sm:$0xff]
                  %305 = vst [vmem:[%s297 + $0x18] sm:$0xff] %v304
                  %v306 = vld [vmem:[%s296 + $0x40] sm:$0xff]
                  %307 = vst [vmem:[%s297 + $0x20] sm:$0xff] %v306
                $region86: #{tpu_custom_call.1} parent=80 // loop_footer
                  %s295 = sadd.s32 1, %s291
                $region87: #{tpu_custom_call.1} parent=80 // loop_footer_branch
                  %290 = sbr.rel target = $region83
                $region88: #{tpu_custom_call.1} parent=80 // loop_exit
                  _
              $region81: #{tpu_custom_call.1} parent=65 // pred_fallthru
                _
              // Predicated region
              $region89: #{tpu_custom_call.1} parent=65 // pred_check
                _
              $region90: #{tpu_custom_call.1} parent=65 // pred_check_branch
                %309 = sbr.rel target = $region92
              $region91: #{tpu_custom_call.1} parent=65 // pred_region
                _
              $region92: #{tpu_custom_call.1} parent=65 // pred_fallthru
                _
            $region66: #{tpu_custom_call.1} parent=61 // pred_fallthru
              _
            // Predicated region
            $region67: #{tpu_custom_call.1} parent=61 // pred_check
              _
            $region68: #{tpu_custom_call.1} parent=61 // pred_check_branch
              %267 = sbr.rel target = $region70
            $region69: #{tpu_custom_call.1} parent=61 // pred_region
              %s269 = ssub.s32 256, 1
              loop: start=0, step=1, limit=1
              $region71: #{tpu_custom_call.1} parent=69 // loop_pre_header
                _
              $region72: #{tpu_custom_call.1} parent=69 // loop_header
                %s271 = sphi 0, %s275
                %p272 = scmp.ge.s32.totalorder %s271, 1
                %s276 = sphi %s261, %s261
                %s277 = sphi %s259, %s259
              $region73: #{tpu_custom_call.1} parent=69 // loop_header_branch
                %274 = sbr.rel (%p272) target = $region77
              $region74: #{tpu_custom_call.1} parent=69 // loop_body
                %v278 = vld [vmem:[%s276] sm:%s269]
                %279 = vst [vmem:[%s277] sm:%s269] %v278
                %v280 = vld [vmem:[%s276 + $0x10] sm:%s269]
                %281 = vst [vmem:[%s277 + $0x8] sm:%s269] %v280
                %v282 = vld [vmem:[%s276 + $0x20] sm:%s269]
                %283 = vst [vmem:[%s277 + $0x10] sm:%s269] %v282
                %v284 = vld [vmem:[%s276 + $0x30] sm:%s269]
                %285 = vst [vmem:[%s277 + $0x18] sm:%s269] %v284
                %v286 = vld [vmem:[%s276 + $0x40] sm:%s269]
                %287 = vst [vmem:[%s277 + $0x20] sm:%s269] %v286
              $region75: #{tpu_custom_call.1} parent=69 // loop_footer
                %s275 = sadd.s32 1, %s271
              $region76: #{tpu_custom_call.1} parent=69 // loop_footer_branch
                %270 = sbr.rel target = $region72
              $region77: #{tpu_custom_call.1} parent=69 // loop_exit
                _
            $region70: #{tpu_custom_call.1} parent=61 // pred_fallthru
              _
          $region62: #{tpu_custom_call.1} parent=57 // pred_fallthru
            _
          %310 = vnop
        $region58: #{tpu_custom_call.1} parent=15 // pred_fallthru
          _
        // Predicated region
        $region93: #{tpu_custom_call.1} parent=15 // pred_check
          %p311 = pneg %p82
        $region94: #{tpu_custom_call.1} parent=15 // pred_check_branch
          %313 = sbr.rel (%p311) target = $region96
        $region95: #{tpu_custom_call.1} parent=15 // pred_region
          %p314 = scmp.lt.s32.totalorder %s10, 1
          %s315 = scalar_select %p314, %s10, 1
          %s316 = scalar_lea.vmem %s2, %s315
        $region96: #{tpu_custom_call.1} parent=15 // pred_fallthru
          _
        // Predicated region
        $region97: #{tpu_custom_call.1} parent=15 // pred_check
          %p317 = pneg %p108
        $region98: #{tpu_custom_call.1} parent=15 // pred_check_branch
          %319 = sbr.rel (%p317) target = $region100
        $region99: #{tpu_custom_call.1} parent=15 // pred_region
          %p320 = scmp.lt.s32.totalorder %s10, 1
          %s321 = scalar_select %p320, %s10, 1
          %s322 = scalar_lea.vmem %s3, %s321
        $region100: #{tpu_custom_call.1} parent=15 // pred_fallthru
          _
      $region16: #{tpu_custom_call.1} parent=5 // pred_fallthru
        _
      %p323 = scmp.le.s32.totalorder 1, %s10
      %p324 = scmp.lt.s32.totalorder %s10, 3
      %p325 = pnand %p323, %p324
      %p326 = pneg %p325
      // Predicated region
      $region101: #{tpu_custom_call.1} parent=5 // pred_check
        _
      $region102: #{tpu_custom_call.1} parent=5 // pred_check_branch
        %328 = sbr.rel (%p325) target = $region104
      $region103: #{tpu_custom_call.1} parent=5 // pred_region
        %s329 = ssub.s32 %s10, 1
        %s330 = sand.u32 %s23, 1
        %s331 = sand.u32 %s23, 1
        %s332 = smul.addr %s331, 112
        %s333 = scalar_lea.vmem [#allocation4], %s332
        // Predicated region
        $region105: #{tpu_custom_call.1} parent=103 // pred_check
          %p334 = pneg %p36
        $region106: #{tpu_custom_call.1} parent=103 // pred_check_branch
          %336 = sbr.rel (%p334) target = $region108
        $region107: #{tpu_custom_call.1} parent=103 // pred_region
          _
        $region108: #{tpu_custom_call.1} parent=103 // pred_fallthru
          _
        %s337 = sand.u32 %s49, 1
        %s338 = sand.u32 %s49, 1
        %s339 = smul.addr %s338, 40
        %s340 = scalar_lea.vmem [#allocation5], %s339
        // Predicated region
        $region109: #{tpu_custom_call.1} parent=103 // pred_check
          %p341 = pneg %p62
        $region110: #{tpu_custom_call.1} parent=103 // pred_check_branch
          %343 = sbr.rel (%p341) target = $region112
        $region111: #{tpu_custom_call.1} parent=103 // pred_region
          _
        $region112: #{tpu_custom_call.1} parent=103 // pred_fallthru
          _
        %s344 = sand.u32 %s23, 1
        %s345 = sand.u32 %s23, 1
        %s346 = smul.addr %s345, 112
        %s347 = scalar_lea.vmem [#allocation4], %s346
        %p348 = pneg %p36
        %p349 = pneg %p33
        %s350 = sand.u32 %s49, 1
        %s351 = sand.u32 %s49, 1
        %s352 = smul.addr %s351, 40
        %s353 = scalar_lea.vmem [#allocation5], %s352
        %p354 = pneg %p62
        %p355 = pneg %p59
        %p356 = scmp.lt.s32.totalorder %s15, 1
        %s357 = scalar_select %p356, %s15, 1
        %s358 = scalar_lea.vmem %s2, %s357
        %p359 = pneg %p88
        %p360 = pneg %p85
        %p361 = scmp.lt.s32.totalorder %s15, 1
        %s362 = scalar_select %p361, %s15, 1
        %s363 = scalar_lea.vmem %s3, %s362
        %p364 = pneg %p114
        %p365 = pneg %p111
        %p366 = pneg %p140
        %p367 = pneg %p137
        %s368 = sand.u32 %s127, 1
        %s369 = sand.u32 %s127, 1
        %s370 = smul.addr %s369, 112
        %s371 = scalar_lea.vmem [#allocation6], %s370
        %p372 = scmp.lt.s32.totalorder %s15, 1
        %s373 = scalar_select %p372, %s15, 1
        %s374 = scalar_lea.vmem %s2, %s373
        %p375 = scmp.lt.s32.totalorder %s15, 1
        %s376 = scalar_select %p375, %s15, 1
        %s377 = scalar_lea.vmem %s3, %s376
        %378 = vst [vmem:[#allocation2] sm:$0x3] 0.0
        %379 = vst [vmem:[#allocation2 + $0x10] sm:$0x3] 0.0
        %380 = vst [vmem:[#allocation2 + $0x20] sm:$0x3] 0.0
        %381 = vst [vmem:[#allocation2 + $0x30] sm:$0x3] 0.0
        %382 = vst [vmem:[#allocation2 + $0x40] sm:$0x3] 0.0
        %383 = vst [vmem:[#allocation2 + $0x50] sm:$0x3] 0.0
        %384 = vst [vmem:[#allocation2 + $0x60] sm:$0x3] 0.0
        %385 = vst [vmem:[#allocation2 + $0x70] sm:$0x3] 0.0
        %386 = vst [vmem:[#allocation2 + $0x80] sm:$0x3] 0.0
        %387 = vst [vmem:[#allocation2 + $0x90] sm:$0x3] 0.0
        %388 = vst [vmem:[#allocation2 + $0xa0] sm:$0x3] 0.0
        %389 = vst [vmem:[#allocation2 + $0xb0] sm:$0x3] 0.0
        %390 = vst [vmem:[#allocation2 + $0xc0] sm:$0x3] 0.0
        %391 = vst [vmem:[#allocation2 + $0xd0] sm:$0x3] 0.0
        %392 = vst [vmem:[#allocation2 + $0x9] sm:$0x3] 0.0
        %393 = vst [vmem:[#allocation2 + $0x19] sm:$0x3] 0.0
        %394 = vst [vmem:[#allocation2 + $0x29] sm:$0x3] 0.0
        %395 = vst [vmem:[#allocation2 + $0x39] sm:$0x3] 0.0
        %396 = vst [vmem:[#allocation2 + $0x49] sm:$0x3] 0.0
        %397 = vst [vmem:[#allocation2 + $0x59] sm:$0x3] 0.0
        %398 = vst [vmem:[#allocation2 + $0x69] sm:$0x3] 0.0
        %399 = vst [vmem:[#allocation2 + $0x79] sm:$0x3] 0.0
        %400 = vst [vmem:[#allocation2 + $0x89] sm:$0x3] 0.0
        %401 = vst [vmem:[#allocation2 + $0x99] sm:$0x3] 0.0
        %402 = vst [vmem:[#allocation2 + $0xa9] sm:$0x3] 0.0
        %403 = vst [vmem:[#allocation2 + $0xb9] sm:$0x3] 0.0
        %404 = vst [vmem:[#allocation2 + $0xc9] sm:$0x3] 0.0
        %405 = vst [vmem:[#allocation2 + $0xd9] sm:$0x3] 0.0
        %v406 = vld [vmem:[%s333] sm:$0x7f]
        %v407 = vld [vmem:[%s333 + $0x8] sm:$0x7f]
        %v408 = vld [vmem:[%s333 + $0x10] sm:$0x7f]
        %v409 = vld [vmem:[%s333 + $0x18] sm:$0x7f]
        %v410 = vld [vmem:[%s333 + $0x20] sm:$0x7f]
        %v411 = vld [vmem:[%s333 + $0x28] sm:$0x7f]
        %v412 = vld [vmem:[%s333 + $0x30] sm:$0x7f]
        %v413 = vld [vmem:[%s333 + $0x38] sm:$0x7f]
        %v414 = vld [vmem:[%s333 + $0x40] sm:$0x7f]
        %v415 = vld [vmem:[%s333 + $0x48] sm:$0x7f]
        %v416 = vld [vmem:[%s333 + $0x50] sm:$0x7f]
        %v417 = vld [vmem:[%s333 + $0x58] sm:$0x7f]
        %v418 = vld [vmem:[%s333 + $0x60] sm:$0x7f]
        %v419 = vld [vmem:[%s333 + $0x68] sm:$0x7f]
        %420 = vst [vmem:[#allocation2 + $0x2] sm:$0x7f] %v406
        %421 = vst [vmem:[#allocation2 + $0x12] sm:$0x7f] %v407
        %422 = vst [vmem:[#allocation2 + $0x22] sm:$0x7f] %v408
        %423 = vst [vmem:[#allocation2 + $0x32] sm:$0x7f] %v409
        %424 = vst [vmem:[#allocation2 + $0x42] sm:$0x7f] %v410
        %425 = vst [vmem:[#allocation2 + $0x52] sm:$0x7f] %v411
        %426 = vst [vmem:[#allocation2 + $0x62] sm:$0x7f] %v412
        %427 = vst [vmem:[#allocation2 + $0x72] sm:$0x7f] %v413
        %428 = vst [vmem:[#allocation2 + $0x82] sm:$0x7f] %v414
        %429 = vst [vmem:[#allocation2 + $0x92] sm:$0x7f] %v415
        %430 = vst [vmem:[#allocation2 + $0xa2] sm:$0x7f] %v416
        %431 = vst [vmem:[#allocation2 + $0xb2] sm:$0x7f] %v417
        %432 = vst [vmem:[#allocation2 + $0xc2] sm:$0x7f] %v418
        %433 = vst [vmem:[#allocation2 + $0xd2] sm:$0x7f] %v419
        %v434 = vld [vmem:[%s340] sm:$0x1f]
        %v435 = vld [vmem:[%s340 + $0x8] sm:$0x1f]
        %v436 = vld [vmem:[%s340 + $0x10] sm:$0x1f]
        %v437 = vld [vmem:[%s340 + $0x18] sm:$0x1f]
        %v438 = vld [vmem:[%s340 + $0x20] sm:$0x1f]
        %v439 = vld [vmem:[#allocation2] sm:$0x7f]
        %v440 = vld [vmem:[#allocation2 + $0x70] sm:$0x7f]
        %v441 = vperm.slane %v436, 0
        %v442 = vmul.f32 %v439, %v441
        %v443 = vmul.f32 %v440, %v441
        %v444 = vadd.f32 %v442, 0.0
        %v445 = vadd.f32 %v443, 0.0
        %v446 = vld [vmem:[#allocation2 + $0x1] sm:$0x7f]
        %v447 = vld [vmem:[#allocation2 + $0x71] sm:$0x7f]
        %v448 = vperm.slane %v436, 1
        %v449 = vmul.f32 %v446, %v448
        %v450 = vmul.f32 %v447, %v448
        %v451 = vadd.f32 %v444, %v449
        %v452 = vadd.f32 %v445, %v450
        %v453 = vld [vmem:[#allocation2 + $0x2] sm:$0x7f]
        %v454 = vld [vmem:[#allocation2 + $0x72] sm:$0x7f]
        %v455 = vperm.slane %v436, 2
        %v456 = vmul.f32 %v453, %v455
        %v457 = vmul.f32 %v454, %v455
        %v458 = vadd.f32 %v451, %v456
        %v459 = vadd.f32 %v452, %v457
        %v460 = vld [vmem:[#allocation2 + $0x3] sm:$0x7f]
        %v461 = vld [vmem:[#allocation2 + $0x73] sm:$0x7f]
        %v462 = vperm.slane %v436, 3
        %v463 = vmul.f32 %v460, %v462
        %v464 = vmul.f32 %v461, %v462
        %v465 = vadd.f32 %v458, %v463
        %v466 = vadd.f32 %v459, %v464
        %v467 = vld [vmem:[#allocation2 + $0x4] sm:$0x7f]
        %v468 = vld [vmem:[#allocation2 + $0x74] sm:$0x7f]
        %v469 = vperm.slane %v436, 4
        %v470 = vmul.f32 %v467, %v469
        %v471 = vmul.f32 %v468, %v469
        %v472 = vadd.f32 %v465, %v470
        %v473 = vadd.f32 %v466, %v471
        %s474 = scalar_lea.vmem [#allocation2], 16
        %v475 = vld [vmem:[%s474] sm:$0x7f]
        %v476 = vld [vmem:[%s474 + $0x70] sm:$0x7f]
        %v477 = vperm.slane %v437, 0
        %v478 = vmul.f32 %v475, %v477
        %v479 = vmul.f32 %v476, %v477
        %v480 = vadd.f32 %v472, %v478
        %v481 = vadd.f32 %v473, %v479
        %v482 = vld [vmem:[%s474 + $0x1] sm:$0x7f]
        %v483 = vld [vmem:[%s474 + $0x71] sm:$0x7f]
        %v484 = vperm.slane %v437, 1
        %v485 = vmul.f32 %v482, %v484
        %v486 = vmul.f32 %v483, %v484
        %v487 = vadd.f32 %v480, %v485
        %v488 = vadd.f32 %v481, %v486
        %v489 = vld [vmem:[%s474 + $0x2] sm:$0x7f]
        %v490 = vld [vmem:[%s474 + $0x72] sm:$0x7f]
        %v491 = vperm.slane %v437, 2
        %v492 = vmul.f32 %v489, %v491
        %v493 = vmul.f32 %v490, %v491
        %v494 = vadd.f32 %v487, %v492
        %v495 = vadd.f32 %v488, %v493
        %v496 = vld [vmem:[%s474 + $0x3] sm:$0x7f]
        %v497 = vld [vmem:[%s474 + $0x73] sm:$0x7f]
        %v498 = vperm.slane %v437, 3
        %v499 = vmul.f32 %v496, %v498
        %v500 = vmul.f32 %v497, %v498
        %v501 = vadd.f32 %v494, %v499
        %v502 = vadd.f32 %v495, %v500
        %v503 = vld [vmem:[%s474 + $0x4] sm:$0x7f]
        %v504 = vld [vmem:[%s474 + $0x74] sm:$0x7f]
        %v505 = vperm.slane %v437, 4
        %v506 = vmul.f32 %v503, %v505
        %v507 = vmul.f32 %v504, %v505
        %v508 = vadd.f32 %v501, %v506
        %v509 = vadd.f32 %v502, %v507
        %s510 = scalar_lea.vmem [#allocation2], 32
        %v511 = vld [vmem:[%s510] sm:$0x7f]
        %v512 = vld [vmem:[%s510 + $0x70] sm:$0x7f]
        %v513 = vperm.slane %v438, 0
        %v514 = vmul.f32 %v511, %v513
        %v515 = vmul.f32 %v512, %v513
        %v516 = vadd.f32 %v508, %v514
        %v517 = vadd.f32 %v509, %v515
        %v518 = vld [vmem:[%s510 + $0x1] sm:$0x7f]
        %v519 = vld [vmem:[%s510 + $0x71] sm:$0x7f]
        %v520 = vperm.slane %v438, 1
        %v521 = vmul.f32 %v518, %v520
        %v522 = vmul.f32 %v519, %v520
        %v523 = vadd.f32 %v516, %v521
        %v524 = vadd.f32 %v517, %v522
        %v525 = vld [vmem:[%s510 + $0x2] sm:$0x7f]
        %v526 = vld [vmem:[%s510 + $0x72] sm:$0x7f]
        %v527 = vperm.slane %v438, 2
        %v528 = vmul.f32 %v525, %v527
        %v529 = vmul.f32 %v526, %v527
        %v530 = vadd.f32 %v523, %v528
        %v531 = vadd.f32 %v524, %v529
        %v532 = vld [vmem:[%s510 + $0x3] sm:$0x7f]
        %v533 = vld [vmem:[%s510 + $0x73] sm:$0x7f]
        %v534 = vperm.slane %v438, 3
        %v535 = vmul.f32 %v532, %v534
        %v536 = vmul.f32 %v533, %v534
        %v537 = vadd.f32 %v530, %v535
        %v538 = vadd.f32 %v531, %v536
        %v539 = vld [vmem:[%s510 + $0x4] sm:$0x7f]
        %v540 = vld [vmem:[%s510 + $0x74] sm:$0x7f]
        %v541 = vperm.slane %v438, 4
        %v542 = vmul.f32 %v539, %v541
        %v543 = vmul.f32 %v540, %v541
        %v544 = vadd.f32 %v537, %v542
        %v545 = vadd.f32 %v538, %v543
        %546 = vst [vmem:[#allocation3] sm:$0x7f] %v544
        %547 = vst [vmem:[#allocation3 + $0x38] sm:$0x7f] %v545
        %vm548 = vcmask 1046528
        %v549 = vsel %vm548, %v544, 0.0
        %v550 = vsel %vm548, %v545, 0.0
        %v551 = vadd.f32 %v549, %v550
        %v552 = vrot.slane %v551, 4
        %v553 = vadd.f32 %v551, %v552
        %v554 = vrot.slane %v553, 2
        %v555 = vadd.f32 %v553, %v554
        %v556 = vrot.slane %v555, 1
        %v557 = vadd.f32 %v555, %v556
        %v558 = vadd.f32 %v557, 0.0
        %v559 = vmul.f32 %v544, %v544
        %v560 = vmul.f32 %v545, %v545
        %v561 = vsel %vm548, %v559, 0.0
        %v562 = vsel %vm548, %v560, 0.0
        %v563 = vadd.f32 %v561, %v562
        %v564 = vrot.slane %v563, 4
        %v565 = vadd.f32 %v563, %v564
        %v566 = vrot.slane %v565, 2
        %v567 = vadd.f32 %v565, %v566
        %v568 = vrot.slane %v567, 1
        %v569 = vadd.f32 %v567, %v568
        %v570 = vadd.f32 %v569, 0.0
        %v571 = vld [vmem:[#allocation2] sm:$0x7f]
        %v572 = vld [vmem:[#allocation2 + $0x70] sm:$0x7f]
        %v573 = vperm.slane %v435, 0
        %v574 = vmul.f32 %v571, %v573
        %v575 = vmul.f32 %v572, %v573
        %v576 = vadd.f32 %v574, 0.0
        %v577 = vadd.f32 %v575, 0.0
        %v578 = vld [vmem:[#allocation2 + $0x1] sm:$0x7f]
        %v579 = vld [vmem:[#allocation2 + $0x71] sm:$0x7f]
        %v580 = vperm.slane %v435, 1
        %v581 = vmul.f32 %v578, %v580
        %v582 = vmul.f32 %v579, %v580
        %v583 = vadd.f32 %v576, %v581
        %v584 = vadd.f32 %v577, %v582
        %v585 = vld [vmem:[#allocation2 + $0x2] sm:$0x7f]
        %v586 = vld [vmem:[#allocation2 + $0x72] sm:$0x7f]
        %v587 = vperm.slane %v435, 2
        %v588 = vmul.f32 %v585, %v587
        %v589 = vmul.f32 %v586, %v587
        %v590 = vadd.f32 %v583, %v588
        %v591 = vadd.f32 %v584, %v589
        %v592 = vld [vmem:[#allocation2 + $0x3] sm:$0x7f]
        %v593 = vld [vmem:[#allocation2 + $0x73] sm:$0x7f]
        %v594 = vperm.slane %v435, 3
        %v595 = vmul.f32 %v592, %v594
        %v596 = vmul.f32 %v593, %v594
        %v597 = vadd.f32 %v590, %v595
        %v598 = vadd.f32 %v591, %v596
        %v599 = vld [vmem:[#allocation2 + $0x4] sm:$0x7f]
        %v600 = vld [vmem:[#allocation2 + $0x74] sm:$0x7f]
        %v601 = vperm.slane %v435, 4
        %v602 = vmul.f32 %v599, %v601
        %v603 = vmul.f32 %v600, %v601
        %v604 = vadd.f32 %v597, %v602
        %v605 = vadd.f32 %v598, %v603
        %v606 = vld [vmem:[%s474] sm:$0x7f]
        %v607 = vld [vmem:[%s474 + $0x70] sm:$0x7f]
        %v608 = vmul.f32 %v606, %v441
        %v609 = vmul.f32 %v607, %v441
        %v610 = vadd.f32 %v604, %v608
        %v611 = vadd.f32 %v605, %v609
        %v612 = vld [vmem:[%s474 + $0x1] sm:$0x7f]
        %v613 = vld [vmem:[%s474 + $0x71] sm:$0x7f]
        %v614 = vmul.f32 %v612, %v448
        %v615 = vmul.f32 %v613, %v448
        %v616 = vadd.f32 %v610, %v614
        %v617 = vadd.f32 %v611, %v615
        %v618 = vld [vmem:[%s474 + $0x2] sm:$0x7f]
        %v619 = vld [vmem:[%s474 + $0x72] sm:$0x7f]
        %v620 = vmul.f32 %v618, %v455
        %v621 = vmul.f32 %v619, %v455
        %v622 = vadd.f32 %v616, %v620
        %v623 = vadd.f32 %v617, %v621
        %v624 = vld [vmem:[%s474 + $0x3] sm:$0x7f]
        %v625 = vld [vmem:[%s474 + $0x73] sm:$0x7f]
        %v626 = vmul.f32 %v624, %v462
        %v627 = vmul.f32 %v625, %v462
        %v628 = vadd.f32 %v622, %v626
        %v629 = vadd.f32 %v623, %v627
        %v630 = vld [vmem:[%s474 + $0x4] sm:$0x7f]
        %v631 = vld [vmem:[%s474 + $0x74] sm:$0x7f]
        %v632 = vmul.f32 %v630, %v469
        %v633 = vmul.f32 %v631, %v469
        %v634 = vadd.f32 %v628, %v632
        %v635 = vadd.f32 %v629, %v633
        %v636 = vld [vmem:[%s510] sm:$0x7f]
        %v637 = vld [vmem:[%s510 + $0x70] sm:$0x7f]
        %v638 = vmul.f32 %v636, %v477
        %v639 = vmul.f32 %v637, %v477
        %v640 = vadd.f32 %v634, %v638
        %v641 = vadd.f32 %v635, %v639
        %v642 = vld [vmem:[%s510 + $0x1] sm:$0x7f]
        %v643 = vld [vmem:[%s510 + $0x71] sm:$0x7f]
        %v644 = vmul.f32 %v642, %v484
        %v645 = vmul.f32 %v643, %v484
        %v646 = vadd.f32 %v640, %v644
        %v647 = vadd.f32 %v641, %v645
        %v648 = vld [vmem:[%s510 + $0x2] sm:$0x7f]
        %v649 = vld [vmem:[%s510 + $0x72] sm:$0x7f]
        %v650 = vmul.f32 %v648, %v491
        %v651 = vmul.f32 %v649, %v491
        %v652 = vadd.f32 %v646, %v650
        %v653 = vadd.f32 %v647, %v651
        %v654 = vld [vmem:[%s510 + $0x3] sm:$0x7f]
        %v655 = vld [vmem:[%s510 + $0x73] sm:$0x7f]
        %v656 = vmul.f32 %v654, %v498
        %v657 = vmul.f32 %v655, %v498
        %v658 = vadd.f32 %v652, %v656
        %v659 = vadd.f32 %v653, %v657
        %v660 = vld [vmem:[%s510 + $0x4] sm:$0x7f]
        %v661 = vld [vmem:[%s510 + $0x74] sm:$0x7f]
        %v662 = vmul.f32 %v660, %v505
        %v663 = vmul.f32 %v661, %v505
        %v664 = vadd.f32 %v658, %v662
        %v665 = vadd.f32 %v659, %v663
        %s666 = scalar_lea.vmem [#allocation2], 48
        %v667 = vld [vmem:[%s666] sm:$0x7f]
        %v668 = vld [vmem:[%s666 + $0x70] sm:$0x7f]
        %v669 = vmul.f32 %v667, %v513
        %v670 = vmul.f32 %v668, %v513
        %v671 = vadd.f32 %v664, %v669
        %v672 = vadd.f32 %v665, %v670
        %v673 = vld [vmem:[%s666 + $0x1] sm:$0x7f]
        %v674 = vld [vmem:[%s666 + $0x71] sm:$0x7f]
        %v675 = vmul.f32 %v673, %v520
        %v676 = vmul.f32 %v674, %v520
        %v677 = vadd.f32 %v671, %v675
        %v678 = vadd.f32 %v672, %v676
        %v679 = vld [vmem:[%s666 + $0x2] sm:$0x7f]
        %v680 = vld [vmem:[%s666 + $0x72] sm:$0x7f]
        %v681 = vmul.f32 %v679, %v527
        %v682 = vmul.f32 %v680, %v527
        %v683 = vadd.f32 %v677, %v681
        %v684 = vadd.f32 %v678, %v682
        %v685 = vld [vmem:[%s666 + $0x3] sm:$0x7f]
        %v686 = vld [vmem:[%s666 + $0x73] sm:$0x7f]
        %v687 = vmul.f32 %v685, %v534
        %v688 = vmul.f32 %v686, %v534
        %v689 = vadd.f32 %v683, %v687
        %v690 = vadd.f32 %v684, %v688
        %v691 = vld [vmem:[%s666 + $0x4] sm:$0x7f]
        %v692 = vld [vmem:[%s666 + $0x74] sm:$0x7f]
        %v693 = vmul.f32 %v691, %v541
        %v694 = vmul.f32 %v692, %v541
        %v695 = vadd.f32 %v689, %v693
        %v696 = vadd.f32 %v690, %v694
        %s697 = scalar_lea.vmem [#allocation3], 8
        %698 = vst [vmem:[%s697] sm:$0x7f] %v695
        %699 = vst [vmem:[%s697 + $0x38] sm:$0x7f] %v696
        %v700 = vsel %vm548, %v695, 0.0
        %v701 = vsel %vm548, %v696, 0.0
        %v702 = vadd.f32 %v700, %v701
        %v703 = vrot.slane %v702, 4
        %v704 = vadd.f32 %v702, %v703
        %v705 = vrot.slane %v704, 2
        %v706 = vadd.f32 %v704, %v705
        %v707 = vrot.slane %v706, 1
        %v708 = vadd.f32 %v706, %v707
        %v709 = vadd.f32 %v558, %v708
        %v710 = vmul.f32 %v695, %v695
        %v711 = vmul.f32 %v696, %v696
        %v712 = vsel %vm548, %v710, 0.0
        %v713 = vsel %vm548, %v711, 0.0
        %v714 = vadd.f32 %v712, %v713
        %v715 = vrot.slane %v714, 4
        %v716 = vadd.f32 %v714, %v715
        %v717 = vrot.slane %v716, 2
        %v718 = vadd.f32 %v716, %v717
        %v719 = vrot.slane %v718, 1
        %v720 = vadd.f32 %v718, %v719
        %v721 = vadd.f32 %v570, %v720
        %v722 = vld [vmem:[#allocation2] sm:$0x7f]
        %v723 = vld [vmem:[#allocation2 + $0x70] sm:$0x7f]
        %v724 = vperm.slane %v434, 0
        %v725 = vmul.f32 %v722, %v724
        %v726 = vmul.f32 %v723, %v724
        %v727 = vadd.f32 %v725, 0.0
        %v728 = vadd.f32 %v726, 0.0
        %v729 = vld [vmem:[#allocation2 + $0x1] sm:$0x7f]
        %v730 = vld [vmem:[#allocation2 + $0x71] sm:$0x7f]
        %v731 = vperm.slane %v434, 1
        %v732 = vmul.f32 %v729, %v731
        %v733 = vmul.f32 %v730, %v731
        %v734 = vadd.f32 %v727, %v732
        %v735 = vadd.f32 %v728, %v733
        %v736 = vld [vmem:[#allocation2 + $0x2] sm:$0x7f]
        %v737 = vld [vmem:[#allocation2 + $0x72] sm:$0x7f]
        %v738 = vperm.slane %v434, 2
        %v739 = vmul.f32 %v736, %v738
        %v740 = vmul.f32 %v737, %v738
        %v741 = vadd.f32 %v734, %v739
        %v742 = vadd.f32 %v735, %v740
        %v743 = vld [vmem:[#allocation2 + $0x3] sm:$0x7f]
        %v744 = vld [vmem:[#allocation2 + $0x73] sm:$0x7f]
        %v745 = vperm.slane %v434, 3
        %v746 = vmul.f32 %v743, %v745
        %v747 = vmul.f32 %v744, %v745
        %v748 = vadd.f32 %v741, %v746
        %v749 = vadd.f32 %v742, %v747
        %v750 = vld [vmem:[#allocation2 + $0x4] sm:$0x7f]
        %v751 = vld [vmem:[#allocation2 + $0x74] sm:$0x7f]
        %v752 = vperm.slane %v434, 4
        %v753 = vmul.f32 %v750, %v752
        %v754 = vmul.f32 %v751, %v752
        %v755 = vadd.f32 %v748, %v753
        %v756 = vadd.f32 %v749, %v754
        %v757 = vld [vmem:[%s474] sm:$0x7f]
        %v758 = vld [vmem:[%s474 + $0x70] sm:$0x7f]
        %v759 = vmul.f32 %v757, %v573
        %v760 = vmul.f32 %v758, %v573
        %v761 = vadd.f32 %v755, %v759
        %v762 = vadd.f32 %v756, %v760
        %v763 = vld [vmem:[%s474 + $0x1] sm:$0x7f]
        %v764 = vld [vmem:[%s474 + $0x71] sm:$0x7f]
        %v765 = vmul.f32 %v763, %v580
        %v766 = vmul.f32 %v764, %v580
        %v767 = vadd.f32 %v761, %v765
        %v768 = vadd.f32 %v762, %v766
        %v769 = vld [vmem:[%s474 + $0x2] sm:$0x7f]
        %v770 = vld [vmem:[%s474 + $0x72] sm:$0x7f]
        %v771 = vmul.f32 %v769, %v587
        %v772 = vmul.f32 %v770, %v587
        %v773 = vadd.f32 %v767, %v771
        %v774 = vadd.f32 %v768, %v772
        %v775 = vld [vmem:[%s474 + $0x3] sm:$0x7f]
        %v776 = vld [vmem:[%s474 + $0x73] sm:$0x7f]
        %v777 = vmul.f32 %v775, %v594
        %v778 = vmul.f32 %v776, %v594
        %v779 = vadd.f32 %v773, %v777
        %v780 = vadd.f32 %v774, %v778
        %v781 = vld [vmem:[%s474 + $0x4] sm:$0x7f]
        %v782 = vld [vmem:[%s474 + $0x74] sm:$0x7f]
        %v783 = vmul.f32 %v781, %v601
        %v784 = vmul.f32 %v782, %v601
        %v785 = vadd.f32 %v779, %v783
        %v786 = vadd.f32 %v780, %v784
        %v787 = vld [vmem:[%s510] sm:$0x7f]
        %v788 = vld [vmem:[%s510 + $0x70] sm:$0x7f]
        %v789 = vmul.f32 %v787, %v441
        %v790 = vmul.f32 %v788, %v441
        %v791 = vadd.f32 %v785, %v789
        %v792 = vadd.f32 %v786, %v790
        %v793 = vld [vmem:[%s510 + $0x1] sm:$0x7f]
        %v794 = vld [vmem:[%s510 + $0x71] sm:$0x7f]
        %v795 = vmul.f32 %v793, %v448
        %v796 = vmul.f32 %v794, %v448
        %v797 = vadd.f32 %v791, %v795
        %v798 = vadd.f32 %v792, %v796
        %v799 = vld [vmem:[%s510 + $0x2] sm:$0x7f]
        %v800 = vld [vmem:[%s510 + $0x72] sm:$0x7f]
        %v801 = vmul.f32 %v799, %v455
        %v802 = vmul.f32 %v800, %v455
        %v803 = vadd.f32 %v797, %v801
        %v804 = vadd.f32 %v798, %v802
        %v805 = vld [vmem:[%s510 + $0x3] sm:$0x7f]
        %v806 = vld [vmem:[%s510 + $0x73] sm:$0x7f]
        %v807 = vmul.f32 %v805, %v462
        %v808 = vmul.f32 %v806, %v462
        %v809 = vadd.f32 %v803, %v807
        %v810 = vadd.f32 %v804, %v808
        %v811 = vld [vmem:[%s510 + $0x4] sm:$0x7f]
        %v812 = vld [vmem:[%s510 + $0x74] sm:$0x7f]
        %v813 = vmul.f32 %v811, %v469
        %v814 = vmul.f32 %v812, %v469
        %v815 = vadd.f32 %v809, %v813
        %v816 = vadd.f32 %v810, %v814
        %v817 = vld [vmem:[%s666] sm:$0x7f]
        %v818 = vld [vmem:[%s666 + $0x70] sm:$0x7f]
        %v819 = vmul.f32 %v817, %v477
        %v820 = vmul.f32 %v818, %v477
        %v821 = vadd.f32 %v815, %v819
        %v822 = vadd.f32 %v816, %v820
        %v823 = vld [vmem:[%s666 + $0x1] sm:$0x7f]
        %v824 = vld [vmem:[%s666 + $0x71] sm:$0x7f]
        %v825 = vmul.f32 %v823, %v484
        %v826 = vmul.f32 %v824, %v484
        %v827 = vadd.f32 %v821, %v825
        %v828 = vadd.f32 %v822, %v826
        %v829 = vld [vmem:[%s666 + $0x2] sm:$0x7f]
        %v830 = vld [vmem:[%s666 + $0x72] sm:$0x7f]
        %v831 = vmul.f32 %v829, %v491
        %v832 = vmul.f32 %v830, %v491
        %v833 = vadd.f32 %v827, %v831
        %v834 = vadd.f32 %v828, %v832
        %v835 = vld [vmem:[%s666 + $0x3] sm:$0x7f]
        %v836 = vld [vmem:[%s666 + $0x73] sm:$0x7f]
        %v837 = vmul.f32 %v835, %v498
        %v838 = vmul.f32 %v836, %v498
        %v839 = vadd.f32 %v833, %v837
        %v840 = vadd.f32 %v834, %v838
        %v841 = vld [vmem:[%s666 + $0x4] sm:$0x7f]
        %v842 = vld [vmem:[%s666 + $0x74] sm:$0x7f]
        %v843 = vmul.f32 %v841, %v505
        %v844 = vmul.f32 %v842, %v505
        %v845 = vadd.f32 %v839, %v843
        %v846 = vadd.f32 %v840, %v844
        %s847 = scalar_lea.vmem [#allocation2], 64
        %v848 = vld [vmem:[%s847] sm:$0x7f]
        %v849 = vld [vmem:[%s847 + $0x70] sm:$0x7f]
        %v850 = vmul.f32 %v848, %v513
        %v851 = vmul.f32 %v849, %v513
        %v852 = vadd.f32 %v845, %v850
        %v853 = vadd.f32 %v846, %v851
        %v854 = vld [vmem:[%s847 + $0x1] sm:$0x7f]
        %v855 = vld [vmem:[%s847 + $0x71] sm:$0x7f]
        %v856 = vmul.f32 %v854, %v520
        %v857 = vmul.f32 %v855, %v520
        %v858 = vadd.f32 %v852, %v856
        %v859 = vadd.f32 %v853, %v857
        %v860 = vld [vmem:[%s847 + $0x2] sm:$0x7f]
        %v861 = vld [vmem:[%s847 + $0x72] sm:$0x7f]
        %v862 = vmul.f32 %v860, %v527
        %v863 = vmul.f32 %v861, %v527
        %v864 = vadd.f32 %v858, %v862
        %v865 = vadd.f32 %v859, %v863
        %v866 = vld [vmem:[%s847 + $0x3] sm:$0x7f]
        %v867 = vld [vmem:[%s847 + $0x73] sm:$0x7f]
        %v868 = vmul.f32 %v866, %v534
        %v869 = vmul.f32 %v867, %v534
        %v870 = vadd.f32 %v864, %v868
        %v871 = vadd.f32 %v865, %v869
        %v872 = vld [vmem:[%s847 + $0x4] sm:$0x7f]
        %v873 = vld [vmem:[%s847 + $0x74] sm:$0x7f]
        %v874 = vmul.f32 %v872, %v541
        %v875 = vmul.f32 %v873, %v541
        %v876 = vadd.f32 %v870, %v874
        %v877 = vadd.f32 %v871, %v875
        %s878 = scalar_lea.vmem [#allocation3], 16
        %879 = vst [vmem:[%s878] sm:$0x7f] %v876
        %880 = vst [vmem:[%s878 + $0x38] sm:$0x7f] %v877
        %v881 = vsel %vm548, %v876, 0.0
        %v882 = vsel %vm548, %v877, 0.0
        %v883 = vadd.f32 %v881, %v882
        %v884 = vrot.slane %v883, 4
        %v885 = vadd.f32 %v883, %v884
        %v886 = vrot.slane %v885, 2
        %v887 = vadd.f32 %v885, %v886
        %v888 = vrot.slane %v887, 1
        %v889 = vadd.f32 %v887, %v888
        %v890 = vadd.f32 %v709, %v889
        %v891 = vmul.f32 %v876, %v876
        %v892 = vmul.f32 %v877, %v877
        %v893 = vsel %vm548, %v891, 0.0
        %v894 = vsel %vm548, %v892, 0.0
        %v895 = vadd.f32 %v893, %v894
        %v896 = vrot.slane %v895, 4
        %v897 = vadd.f32 %v895, %v896
        %v898 = vrot.slane %v897, 2
        %v899 = vadd.f32 %v897, %v898
        %v900 = vrot.slane %v899, 1
        %v901 = vadd.f32 %v899, %v900
        %v902 = vadd.f32 %v721, %v901
        %v903 = vld [vmem:[%s474] sm:$0x7f]
        %v904 = vld [vmem:[%s474 + $0x70] sm:$0x7f]
        %v905 = vmul.f32 %v903, %v724
        %v906 = vmul.f32 %v904, %v724
        %v907 = vadd.f32 %v905, 0.0
        %v908 = vadd.f32 %v906, 0.0
        %v909 = vld [vmem:[%s474 + $0x1] sm:$0x7f]
        %v910 = vld [vmem:[%s474 + $0x71] sm:$0x7f]
        %v911 = vmul.f32 %v909, %v731
        %v912 = vmul.f32 %v910, %v731
        %v913 = vadd.f32 %v907, %v911
        %v914 = vadd.f32 %v908, %v912
        %v915 = vld [vmem:[%s474 + $0x2] sm:$0x7f]
        %v916 = vld [vmem:[%s474 + $0x72] sm:$0x7f]
        %v917 = vmul.f32 %v915, %v738
        %v918 = vmul.f32 %v916, %v738
        %v919 = vadd.f32 %v913, %v917
        %v920 = vadd.f32 %v914, %v918
        %v921 = vld [vmem:[%s474 + $0x3] sm:$0x7f]
        %v922 = vld [vmem:[%s474 + $0x73] sm:$0x7f]
        %v923 = vmul.f32 %v921, %v745
        %v924 = vmul.f32 %v922, %v745
        %v925 = vadd.f32 %v919, %v923
        %v926 = vadd.f32 %v920, %v924
        %v927 = vld [vmem:[%s474 + $0x4] sm:$0x7f]
        %v928 = vld [vmem:[%s474 + $0x74] sm:$0x7f]
        %v929 = vmul.f32 %v927, %v752
        %v930 = vmul.f32 %v928, %v752
        %v931 = vadd.f32 %v925, %v929
        %v932 = vadd.f32 %v926, %v930
        %v933 = vld [vmem:[%s510] sm:$0x7f]
        %v934 = vld [vmem:[%s510 + $0x70] sm:$0x7f]
        %v935 = vmul.f32 %v933, %v573
        %v936 = vmul.f32 %v934, %v573
        %v937 = vadd.f32 %v931, %v935
        %v938 = vadd.f32 %v932, %v936
        %v939 = vld [vmem:[%s510 + $0x1] sm:$0x7f]
        %v940 = vld [vmem:[%s510 + $0x71] sm:$0x7f]
        %v941 = vmul.f32 %v939, %v580
        %v942 = vmul.f32 %v940, %v580
        %v943 = vadd.f32 %v937, %v941
        %v944 = vadd.f32 %v938, %v942
        %v945 = vld [vmem:[%s510 + $0x2] sm:$0x7f]
        %v946 = vld [vmem:[%s510 + $0x72] sm:$0x7f]
        %v947 = vmul.f32 %v945, %v587
        %v948 = vmul.f32 %v946, %v587
        %v949 = vadd.f32 %v943, %v947
        %v950 = vadd.f32 %v944, %v948
        %v951 = vld [vmem:[%s510 + $0x3] sm:$0x7f]
        %v952 = vld [vmem:[%s510 + $0x73] sm:$0x7f]
        %v953 = vmul.f32 %v951, %v594
        %v954 = vmul.f32 %v952, %v594
        %v955 = vadd.f32 %v949, %v953
        %v956 = vadd.f32 %v950, %v954
        %v957 = vld [vmem:[%s510 + $0x4] sm:$0x7f]
        %v958 = vld [vmem:[%s510 + $0x74] sm:$0x7f]
        %v959 = vmul.f32 %v957, %v601
        %v960 = vmul.f32 %v958, %v601
        %v961 = vadd.f32 %v955, %v959
        %v962 = vadd.f32 %v956, %v960
        %v963 = vld [vmem:[%s666] sm:$0x7f]
        %v964 = vld [vmem:[%s666 + $0x70] sm:$0x7f]
        %v965 = vmul.f32 %v963, %v441
        %v966 = vmul.f32 %v964, %v441
        %v967 = vadd.f32 %v961, %v965
        %v968 = vadd.f32 %v962, %v966
        %v969 = vld [vmem:[%s666 + $0x1] sm:$0x7f]
        %v970 = vld [vmem:[%s666 + $0x71] sm:$0x7f]
        %v971 = vmul.f32 %v969, %v448
        %v972 = vmul.f32 %v970, %v448
        %v973 = vadd.f32 %v967, %v971
        %v974 = vadd.f32 %v968, %v972
        %v975 = vld [vmem:[%s666 + $0x2] sm:$0x7f]
        %v976 = vld [vmem:[%s666 + $0x72] sm:$0x7f]
        %v977 = vmul.f32 %v975, %v455
        %v978 = vmul.f32 %v976, %v455
        %v979 = vadd.f32 %v973, %v977
        %v980 = vadd.f32 %v974, %v978
        %v981 = vld [vmem:[%s666 + $0x3] sm:$0x7f]
        %v982 = vld [vmem:[%s666 + $0x73] sm:$0x7f]
        %v983 = vmul.f32 %v981, %v462
        %v984 = vmul.f32 %v982, %v462
        %v985 = vadd.f32 %v979, %v983
        %v986 = vadd.f32 %v980, %v984
        %v987 = vld [vmem:[%s666 + $0x4] sm:$0x7f]
        %v988 = vld [vmem:[%s666 + $0x74] sm:$0x7f]
        %v989 = vmul.f32 %v987, %v469
        %v990 = vmul.f32 %v988, %v469
        %v991 = vadd.f32 %v985, %v989
        %v992 = vadd.f32 %v986, %v990
        %v993 = vld [vmem:[%s847] sm:$0x7f]
        %v994 = vld [vmem:[%s847 + $0x70] sm:$0x7f]
        %v995 = vmul.f32 %v993, %v477
        %v996 = vmul.f32 %v994, %v477
        %v997 = vadd.f32 %v991, %v995
        %v998 = vadd.f32 %v992, %v996
        %v999 = vld [vmem:[%s847 + $0x1] sm:$0x7f]
        %v1000 = vld [vmem:[%s847 + $0x71] sm:$0x7f]
        %v1001 = vmul.f32 %v999, %v484
        %v1002 = vmul.f32 %v1000, %v484
        %v1003 = vadd.f32 %v997, %v1001
        %v1004 = vadd.f32 %v998, %v1002
        %v1005 = vld [vmem:[%s847 + $0x2] sm:$0x7f]
        %v1006 = vld [vmem:[%s847 + $0x72] sm:$0x7f]
        %v1007 = vmul.f32 %v1005, %v491
        %v1008 = vmul.f32 %v1006, %v491
        %v1009 = vadd.f32 %v1003, %v1007
        %v1010 = vadd.f32 %v1004, %v1008
        %v1011 = vld [vmem:[%s847 + $0x3] sm:$0x7f]
        %v1012 = vld [vmem:[%s847 + $0x73] sm:$0x7f]
        %v1013 = vmul.f32 %v1011, %v498
        %v1014 = vmul.f32 %v1012, %v498
        %v1015 = vadd.f32 %v1009, %v1013
        %v1016 = vadd.f32 %v1010, %v1014
        %v1017 = vld [vmem:[%s847 + $0x4] sm:$0x7f]
        %v1018 = vld [vmem:[%s847 + $0x74] sm:$0x7f]
        %v1019 = vmul.f32 %v1017, %v505
        %v1020 = vmul.f32 %v1018, %v505
        %v1021 = vadd.f32 %v1015, %v1019
        %v1022 = vadd.f32 %v1016, %v1020
        %s1023 = scalar_lea.vmem [#allocation2], 80
        %v1024 = vld [vmem:[%s1023] sm:$0x7f]
        %v1025 = vld [vmem:[%s1023 + $0x70] sm:$0x7f]
        %v1026 = vmul.f32 %v1024, %v513
        %v1027 = vmul.f32 %v1025, %v513
        %v1028 = vadd.f32 %v1021, %v1026
        %v1029 = vadd.f32 %v1022, %v1027
        %v1030 = vld [vmem:[%s1023 + $0x1] sm:$0x7f]
        %v1031 = vld [vmem:[%s1023 + $0x71] sm:$0x7f]
        %v1032 = vmul.f32 %v1030, %v520
        %v1033 = vmul.f32 %v1031, %v520
        %v1034 = vadd.f32 %v1028, %v1032
        %v1035 = vadd.f32 %v1029, %v1033
        %v1036 = vld [vmem:[%s1023 + $0x2] sm:$0x7f]
        %v1037 = vld [vmem:[%s1023 + $0x72] sm:$0x7f]
        %v1038 = vmul.f32 %v1036, %v527
        %v1039 = vmul.f32 %v1037, %v527
        %v1040 = vadd.f32 %v1034, %v1038
        %v1041 = vadd.f32 %v1035, %v1039
        %v1042 = vld [vmem:[%s1023 + $0x3] sm:$0x7f]
        %v1043 = vld [vmem:[%s1023 + $0x73] sm:$0x7f]
        %v1044 = vmul.f32 %v1042, %v534
        %v1045 = vmul.f32 %v1043, %v534
        %v1046 = vadd.f32 %v1040, %v1044
        %v1047 = vadd.f32 %v1041, %v1045
        %v1048 = vld [vmem:[%s1023 + $0x4] sm:$0x7f]
        %v1049 = vld [vmem:[%s1023 + $0x74] sm:$0x7f]
        %v1050 = vmul.f32 %v1048, %v541
        %v1051 = vmul.f32 %v1049, %v541
        %v1052 = vadd.f32 %v1046, %v1050
        %v1053 = vadd.f32 %v1047, %v1051
        %s1054 = scalar_lea.vmem [#allocation3], 24
        %1055 = vst [vmem:[%s1054] sm:$0x7f] %v1052
        %1056 = vst [vmem:[%s1054 + $0x38] sm:$0x7f] %v1053
        %v1057 = vsel %vm548, %v1052, 0.0
        %v1058 = vsel %vm548, %v1053, 0.0
        %v1059 = vadd.f32 %v1057, %v1058
        %v1060 = vrot.slane %v1059, 4
        %v1061 = vadd.f32 %v1059, %v1060
        %v1062 = vrot.slane %v1061, 2
        %v1063 = vadd.f32 %v1061, %v1062
        %v1064 = vrot.slane %v1063, 1
        %v1065 = vadd.f32 %v1063, %v1064
        %v1066 = vadd.f32 %v890, %v1065
        %v1067 = vmul.f32 %v1052, %v1052
        %v1068 = vmul.f32 %v1053, %v1053
        %v1069 = vsel %vm548, %v1067, 0.0
        %v1070 = vsel %vm548, %v1068, 0.0
        %v1071 = vadd.f32 %v1069, %v1070
        %v1072 = vrot.slane %v1071, 4
        %v1073 = vadd.f32 %v1071, %v1072
        %v1074 = vrot.slane %v1073, 2
        %v1075 = vadd.f32 %v1073, %v1074
        %v1076 = vrot.slane %v1075, 1
        %v1077 = vadd.f32 %v1075, %v1076
        %v1078 = vadd.f32 %v902, %v1077
        %v1079 = vld [vmem:[%s510] sm:$0x7f]
        %v1080 = vld [vmem:[%s510 + $0x70] sm:$0x7f]
        %v1081 = vmul.f32 %v1079, %v724
        %v1082 = vmul.f32 %v1080, %v724
        %v1083 = vadd.f32 %v1081, 0.0
        %v1084 = vadd.f32 %v1082, 0.0
        %v1085 = vld [vmem:[%s510 + $0x1] sm:$0x7f]
        %v1086 = vld [vmem:[%s510 + $0x71] sm:$0x7f]
        %v1087 = vmul.f32 %v1085, %v731
        %v1088 = vmul.f32 %v1086, %v731
        %v1089 = vadd.f32 %v1083, %v1087
        %v1090 = vadd.f32 %v1084, %v1088
        %v1091 = vld [vmem:[%s510 + $0x2] sm:$0x7f]
        %v1092 = vld [vmem:[%s510 + $0x72] sm:$0x7f]
        %v1093 = vmul.f32 %v1091, %v738
        %v1094 = vmul.f32 %v1092, %v738
        %v1095 = vadd.f32 %v1089, %v1093
        %v1096 = vadd.f32 %v1090, %v1094
        %v1097 = vld [vmem:[%s510 + $0x3] sm:$0x7f]
        %v1098 = vld [vmem:[%s510 + $0x73] sm:$0x7f]
        %v1099 = vmul.f32 %v1097, %v745
        %v1100 = vmul.f32 %v1098, %v745
        %v1101 = vadd.f32 %v1095, %v1099
        %v1102 = vadd.f32 %v1096, %v1100
        %v1103 = vld [vmem:[%s510 + $0x4] sm:$0x7f]
        %v1104 = vld [vmem:[%s510 + $0x74] sm:$0x7f]
        %v1105 = vmul.f32 %v1103, %v752
        %v1106 = vmul.f32 %v1104, %v752
        %v1107 = vadd.f32 %v1101, %v1105
        %v1108 = vadd.f32 %v1102, %v1106
        %v1109 = vld [vmem:[%s666] sm:$0x7f]
        %v1110 = vld [vmem:[%s666 + $0x70] sm:$0x7f]
        %v1111 = vmul.f32 %v1109, %v573
        %v1112 = vmul.f32 %v1110, %v573
        %v1113 = vadd.f32 %v1107, %v1111
        %v1114 = vadd.f32 %v1108, %v1112
        %v1115 = vld [vmem:[%s666 + $0x1] sm:$0x7f]
        %v1116 = vld [vmem:[%s666 + $0x71] sm:$0x7f]
        %v1117 = vmul.f32 %v1115, %v580
        %v1118 = vmul.f32 %v1116, %v580
        %v1119 = vadd.f32 %v1113, %v1117
        %v1120 = vadd.f32 %v1114, %v1118
        %v1121 = vld [vmem:[%s666 + $0x2] sm:$0x7f]
        %v1122 = vld [vmem:[%s666 + $0x72] sm:$0x7f]
        %v1123 = vmul.f32 %v1121, %v587
        %v1124 = vmul.f32 %v1122, %v587
        %v1125 = vadd.f32 %v1119, %v1123
        %v1126 = vadd.f32 %v1120, %v1124
        %v1127 = vld [vmem:[%s666 + $0x3] sm:$0x7f]
        %v1128 = vld [vmem:[%s666 + $0x73] sm:$0x7f]
        %v1129 = vmul.f32 %v1127, %v594
        %v1130 = vmul.f32 %v1128, %v594
        %v1131 = vadd.f32 %v1125, %v1129
        %v1132 = vadd.f32 %v1126, %v1130
        %v1133 = vld [vmem:[%s666 + $0x4] sm:$0x7f]
        %v1134 = vld [vmem:[%s666 + $0x74] sm:$0x7f]
        %v1135 = vmul.f32 %v1133, %v601
        %v1136 = vmul.f32 %v1134, %v601
        %v1137 = vadd.f32 %v1131, %v1135
        %v1138 = vadd.f32 %v1132, %v1136
        %v1139 = vld [vmem:[%s847] sm:$0x7f]
        %v1140 = vld [vmem:[%s847 + $0x70] sm:$0x7f]
        %v1141 = vmul.f32 %v1139, %v441
        %v1142 = vmul.f32 %v1140, %v441
        %v1143 = vadd.f32 %v1137, %v1141
        %v1144 = vadd.f32 %v1138, %v1142
        %v1145 = vld [vmem:[%s847 + $0x1] sm:$0x7f]
        %v1146 = vld [vmem:[%s847 + $0x71] sm:$0x7f]
        %v1147 = vmul.f32 %v1145, %v448
        %v1148 = vmul.f32 %v1146, %v448
        %v1149 = vadd.f32 %v1143, %v1147
        %v1150 = vadd.f32 %v1144, %v1148
        %v1151 = vld [vmem:[%s847 + $0x2] sm:$0x7f]
        %v1152 = vld [vmem:[%s847 + $0x72] sm:$0x7f]
        %v1153 = vmul.f32 %v1151, %v455
        %v1154 = vmul.f32 %v1152, %v455
        %v1155 = vadd.f32 %v1149, %v1153
        %v1156 = vadd.f32 %v1150, %v1154
        %v1157 = vld [vmem:[%s847 + $0x3] sm:$0x7f]
        %v1158 = vld [vmem:[%s847 + $0x73] sm:$0x7f]
        %v1159 = vmul.f32 %v1157, %v462
        %v1160 = vmul.f32 %v1158, %v462
        %v1161 = vadd.f32 %v1155, %v1159
        %v1162 = vadd.f32 %v1156, %v1160
        %v1163 = vld [vmem:[%s847 + $0x4] sm:$0x7f]
        %v1164 = vld [vmem:[%s847 + $0x74] sm:$0x7f]
        %v1165 = vmul.f32 %v1163, %v469
        %v1166 = vmul.f32 %v1164, %v469
        %v1167 = vadd.f32 %v1161, %v1165
        %v1168 = vadd.f32 %v1162, %v1166
        %v1169 = vld [vmem:[%s1023] sm:$0x7f]
        %v1170 = vld [vmem:[%s1023 + $0x70] sm:$0x7f]
        %v1171 = vmul.f32 %v1169, %v477
        %v1172 = vmul.f32 %v1170, %v477
        %v1173 = vadd.f32 %v1167, %v1171
        %v1174 = vadd.f32 %v1168, %v1172
        %v1175 = vld [vmem:[%s1023 + $0x1] sm:$0x7f]
        %v1176 = vld [vmem:[%s1023 + $0x71] sm:$0x7f]
        %v1177 = vmul.f32 %v1175, %v484
        %v1178 = vmul.f32 %v1176, %v484
        %v1179 = vadd.f32 %v1173, %v1177
        %v1180 = vadd.f32 %v1174, %v1178
        %v1181 = vld [vmem:[%s1023 + $0x2] sm:$0x7f]
        %v1182 = vld [vmem:[%s1023 + $0x72] sm:$0x7f]
        %v1183 = vmul.f32 %v1181, %v491
        %v1184 = vmul.f32 %v1182, %v491
        %v1185 = vadd.f32 %v1179, %v1183
        %v1186 = vadd.f32 %v1180, %v1184
        %v1187 = vld [vmem:[%s1023 + $0x3] sm:$0x7f]
        %v1188 = vld [vmem:[%s1023 + $0x73] sm:$0x7f]
        %v1189 = vmul.f32 %v1187, %v498
        %v1190 = vmul.f32 %v1188, %v498
        %v1191 = vadd.f32 %v1185, %v1189
        %v1192 = vadd.f32 %v1186, %v1190
        %v1193 = vld [vmem:[%s1023 + $0x4] sm:$0x7f]
        %v1194 = vld [vmem:[%s1023 + $0x74] sm:$0x7f]
        %v1195 = vmul.f32 %v1193, %v505
        %v1196 = vmul.f32 %v1194, %v505
        %v1197 = vadd.f32 %v1191, %v1195
        %v1198 = vadd.f32 %v1192, %v1196
        %s1199 = scalar_lea.vmem [#allocation2], 96
        %v1200 = vld [vmem:[%s1199] sm:$0x7f]
        %v1201 = vld [vmem:[%s1199 + $0x70] sm:$0x7f]
        %v1202 = vmul.f32 %v1200, %v513
        %v1203 = vmul.f32 %v1201, %v513
        %v1204 = vadd.f32 %v1197, %v1202
        %v1205 = vadd.f32 %v1198, %v1203
        %v1206 = vld [vmem:[%s1199 + $0x1] sm:$0x7f]
        %v1207 = vld [vmem:[%s1199 + $0x71] sm:$0x7f]
        %v1208 = vmul.f32 %v1206, %v520
        %v1209 = vmul.f32 %v1207, %v520
        %v1210 = vadd.f32 %v1204, %v1208
        %v1211 = vadd.f32 %v1205, %v1209
        %v1212 = vld [vmem:[%s1199 + $0x2] sm:$0x7f]
        %v1213 = vld [vmem:[%s1199 + $0x72] sm:$0x7f]
        %v1214 = vmul.f32 %v1212, %v527
        %v1215 = vmul.f32 %v1213, %v527
        %v1216 = vadd.f32 %v1210, %v1214
        %v1217 = vadd.f32 %v1211, %v1215
        %v1218 = vld [vmem:[%s1199 + $0x3] sm:$0x7f]
        %v1219 = vld [vmem:[%s1199 + $0x73] sm:$0x7f]
        %v1220 = vmul.f32 %v1218, %v534
        %v1221 = vmul.f32 %v1219, %v534
        %v1222 = vadd.f32 %v1216, %v1220
        %v1223 = vadd.f32 %v1217, %v1221
        %v1224 = vld [vmem:[%s1199 + $0x4] sm:$0x7f]
        %v1225 = vld [vmem:[%s1199 + $0x74] sm:$0x7f]
        %v1226 = vmul.f32 %v1224, %v541
        %v1227 = vmul.f32 %v1225, %v541
        %v1228 = vadd.f32 %v1222, %v1226
        %v1229 = vadd.f32 %v1223, %v1227
        %s1230 = scalar_lea.vmem [#allocation3], 32
        %1231 = vst [vmem:[%s1230] sm:$0x7f] %v1228
        %1232 = vst [vmem:[%s1230 + $0x38] sm:$0x7f] %v1229
        %v1233 = vsel %vm548, %v1228, 0.0
        %v1234 = vsel %vm548, %v1229, 0.0
        %v1235 = vadd.f32 %v1233, %v1234
        %v1236 = vrot.slane %v1235, 4
        %v1237 = vadd.f32 %v1235, %v1236
        %v1238 = vrot.slane %v1237, 2
        %v1239 = vadd.f32 %v1237, %v1238
        %v1240 = vrot.slane %v1239, 1
        %v1241 = vadd.f32 %v1239, %v1240
        %v1242 = vadd.f32 %v1066, %v1241
        %v1243 = vmul.f32 %v1228, %v1228
        %v1244 = vmul.f32 %v1229, %v1229
        %v1245 = vsel %vm548, %v1243, 0.0
        %v1246 = vsel %vm548, %v1244, 0.0
        %v1247 = vadd.f32 %v1245, %v1246
        %v1248 = vrot.slane %v1247, 4
        %v1249 = vadd.f32 %v1247, %v1248
        %v1250 = vrot.slane %v1249, 2
        %v1251 = vadd.f32 %v1249, %v1250
        %v1252 = vrot.slane %v1251, 1
        %v1253 = vadd.f32 %v1251, %v1252
        %v1254 = vadd.f32 %v1078, %v1253
        %v1255 = vld [vmem:[%s666] sm:$0x7f]
        %v1256 = vld [vmem:[%s666 + $0x70] sm:$0x7f]
        %v1257 = vmul.f32 %v1255, %v724
        %v1258 = vmul.f32 %v1256, %v724
        %v1259 = vadd.f32 %v1257, 0.0
        %v1260 = vadd.f32 %v1258, 0.0
        %v1261 = vld [vmem:[%s666 + $0x1] sm:$0x7f]
        %v1262 = vld [vmem:[%s666 + $0x71] sm:$0x7f]
        %v1263 = vmul.f32 %v1261, %v731
        %v1264 = vmul.f32 %v1262, %v731
        %v1265 = vadd.f32 %v1259, %v1263
        %v1266 = vadd.f32 %v1260, %v1264
        %v1267 = vld [vmem:[%s666 + $0x2] sm:$0x7f]
        %v1268 = vld [vmem:[%s666 + $0x72] sm:$0x7f]
        %v1269 = vmul.f32 %v1267, %v738
        %v1270 = vmul.f32 %v1268, %v738
        %v1271 = vadd.f32 %v1265, %v1269
        %v1272 = vadd.f32 %v1266, %v1270
        %v1273 = vld [vmem:[%s666 + $0x3] sm:$0x7f]
        %v1274 = vld [vmem:[%s666 + $0x73] sm:$0x7f]
        %v1275 = vmul.f32 %v1273, %v745
        %v1276 = vmul.f32 %v1274, %v745
        %v1277 = vadd.f32 %v1271, %v1275
        %v1278 = vadd.f32 %v1272, %v1276
        %v1279 = vld [vmem:[%s666 + $0x4] sm:$0x7f]
        %v1280 = vld [vmem:[%s666 + $0x74] sm:$0x7f]
        %v1281 = vmul.f32 %v1279, %v752
        %v1282 = vmul.f32 %v1280, %v752
        %v1283 = vadd.f32 %v1277, %v1281
        %v1284 = vadd.f32 %v1278, %v1282
        %v1285 = vld [vmem:[%s847] sm:$0x7f]
        %v1286 = vld [vmem:[%s847 + $0x70] sm:$0x7f]
        %v1287 = vmul.f32 %v1285, %v573
        %v1288 = vmul.f32 %v1286, %v573
        %v1289 = vadd.f32 %v1283, %v1287
        %v1290 = vadd.f32 %v1284, %v1288
        %v1291 = vld [vmem:[%s847 + $0x1] sm:$0x7f]
        %v1292 = vld [vmem:[%s847 + $0x71] sm:$0x7f]
        %v1293 = vmul.f32 %v1291, %v580
        %v1294 = vmul.f32 %v1292, %v580
        %v1295 = vadd.f32 %v1289, %v1293
        %v1296 = vadd.f32 %v1290, %v1294
        %v1297 = vld [vmem:[%s847 + $0x2] sm:$0x7f]
        %v1298 = vld [vmem:[%s847 + $0x72] sm:$0x7f]
        %v1299 = vmul.f32 %v1297, %v587
        %v1300 = vmul.f32 %v1298, %v587
        %v1301 = vadd.f32 %v1295, %v1299
        %v1302 = vadd.f32 %v1296, %v1300
        %v1303 = vld [vmem:[%s847 + $0x3] sm:$0x7f]
        %v1304 = vld [vmem:[%s847 + $0x73] sm:$0x7f]
        %v1305 = vmul.f32 %v1303, %v594
        %v1306 = vmul.f32 %v1304, %v594
        %v1307 = vadd.f32 %v1301, %v1305
        %v1308 = vadd.f32 %v1302, %v1306
        %v1309 = vld [vmem:[%s847 + $0x4] sm:$0x7f]
        %v1310 = vld [vmem:[%s847 + $0x74] sm:$0x7f]
        %v1311 = vmul.f32 %v1309, %v601
        %v1312 = vmul.f32 %v1310, %v601
        %v1313 = vadd.f32 %v1307, %v1311
        %v1314 = vadd.f32 %v1308, %v1312
        %v1315 = vld [vmem:[%s1023] sm:$0x7f]
        %v1316 = vld [vmem:[%s1023 + $0x70] sm:$0x7f]
        %v1317 = vmul.f32 %v1315, %v441
        %v1318 = vmul.f32 %v1316, %v441
        %v1319 = vadd.f32 %v1313, %v1317
        %v1320 = vadd.f32 %v1314, %v1318
        %v1321 = vld [vmem:[%s1023 + $0x1] sm:$0x7f]
        %v1322 = vld [vmem:[%s1023 + $0x71] sm:$0x7f]
        %v1323 = vmul.f32 %v1321, %v448
        %v1324 = vmul.f32 %v1322, %v448
        %v1325 = vadd.f32 %v1319, %v1323
        %v1326 = vadd.f32 %v1320, %v1324
        %v1327 = vld [vmem:[%s1023 + $0x2] sm:$0x7f]
        %v1328 = vld [vmem:[%s1023 + $0x72] sm:$0x7f]
        %v1329 = vmul.f32 %v1327, %v455
        %v1330 = vmul.f32 %v1328, %v455
        %v1331 = vadd.f32 %v1325, %v1329
        %v1332 = vadd.f32 %v1326, %v1330
        %v1333 = vld [vmem:[%s1023 + $0x3] sm:$0x7f]
        %v1334 = vld [vmem:[%s1023 + $0x73] sm:$0x7f]
        %v1335 = vmul.f32 %v1333, %v462
        %v1336 = vmul.f32 %v1334, %v462
        %v1337 = vadd.f32 %v1331, %v1335
        %v1338 = vadd.f32 %v1332, %v1336
        %v1339 = vld [vmem:[%s1023 + $0x4] sm:$0x7f]
        %v1340 = vld [vmem:[%s1023 + $0x74] sm:$0x7f]
        %v1341 = vmul.f32 %v1339, %v469
        %v1342 = vmul.f32 %v1340, %v469
        %v1343 = vadd.f32 %v1337, %v1341
        %v1344 = vadd.f32 %v1338, %v1342
        %v1345 = vld [vmem:[%s1199] sm:$0x7f]
        %v1346 = vld [vmem:[%s1199 + $0x70] sm:$0x7f]
        %v1347 = vmul.f32 %v1345, %v477
        %v1348 = vmul.f32 %v1346, %v477
        %v1349 = vadd.f32 %v1343, %v1347
        %v1350 = vadd.f32 %v1344, %v1348
        %v1351 = vld [vmem:[%s1199 + $0x1] sm:$0x7f]
        %v1352 = vld [vmem:[%s1199 + $0x71] sm:$0x7f]
        %v1353 = vmul.f32 %v1351, %v484
        %v1354 = vmul.f32 %v1352, %v484
        %v1355 = vadd.f32 %v1349, %v1353
        %v1356 = vadd.f32 %v1350, %v1354
        %v1357 = vld [vmem:[%s1199 + $0x2] sm:$0x7f]
        %v1358 = vld [vmem:[%s1199 + $0x72] sm:$0x7f]
        %v1359 = vmul.f32 %v1357, %v491
        %v1360 = vmul.f32 %v1358, %v491
        %v1361 = vadd.f32 %v1355, %v1359
        %v1362 = vadd.f32 %v1356, %v1360
        %v1363 = vld [vmem:[%s1199 + $0x3] sm:$0x7f]
        %v1364 = vld [vmem:[%s1199 + $0x73] sm:$0x7f]
        %v1365 = vmul.f32 %v1363, %v498
        %v1366 = vmul.f32 %v1364, %v498
        %v1367 = vadd.f32 %v1361, %v1365
        %v1368 = vadd.f32 %v1362, %v1366
        %v1369 = vld [vmem:[%s1199 + $0x4] sm:$0x7f]
        %v1370 = vld [vmem:[%s1199 + $0x74] sm:$0x7f]
        %v1371 = vmul.f32 %v1369, %v505
        %v1372 = vmul.f32 %v1370, %v505
        %v1373 = vadd.f32 %v1367, %v1371
        %v1374 = vadd.f32 %v1368, %v1372
        %s1375 = scalar_lea.vmem [#allocation3], 40
        %1376 = vst [vmem:[%s1375] sm:$0x7f] %v1373
        %1377 = vst [vmem:[%s1375 + $0x38] sm:$0x7f] %v1374
        %v1378 = vsel %vm548, %v1373, 0.0
        %v1379 = vsel %vm548, %v1374, 0.0
        %v1380 = vadd.f32 %v1378, %v1379
        %v1381 = vrot.slane %v1380, 4
        %v1382 = vadd.f32 %v1380, %v1381
        %v1383 = vrot.slane %v1382, 2
        %v1384 = vadd.f32 %v1382, %v1383
        %v1385 = vrot.slane %v1384, 1
        %v1386 = vadd.f32 %v1384, %v1385
        %v1387 = vadd.f32 %v1242, %v1386
        %v1388 = vmul.f32 %v1373, %v1373
        %v1389 = vmul.f32 %v1374, %v1374
        %v1390 = vsel %vm548, %v1388, 0.0
        %v1391 = vsel %vm548, %v1389, 0.0
        %v1392 = vadd.f32 %v1390, %v1391
        %v1393 = vrot.slane %v1392, 4
        %v1394 = vadd.f32 %v1392, %v1393
        %v1395 = vrot.slane %v1394, 2
        %v1396 = vadd.f32 %v1394, %v1395
        %v1397 = vrot.slane %v1396, 1
        %v1398 = vadd.f32 %v1396, %v1397
        %v1399 = vadd.f32 %v1254, %v1398
        %v1400 = vld [vmem:[%s847] sm:$0x7f]
        %v1401 = vld [vmem:[%s847 + $0x70] sm:$0x7f]
        %v1402 = vmul.f32 %v1400, %v724
        %v1403 = vmul.f32 %v1401, %v724
        %v1404 = vadd.f32 %v1402, 0.0
        %v1405 = vadd.f32 %v1403, 0.0
        %v1406 = vld [vmem:[%s847 + $0x1] sm:$0x7f]
        %v1407 = vld [vmem:[%s847 + $0x71] sm:$0x7f]
        %v1408 = vmul.f32 %v1406, %v731
        %v1409 = vmul.f32 %v1407, %v731
        %v1410 = vadd.f32 %v1404, %v1408
        %v1411 = vadd.f32 %v1405, %v1409
        %v1412 = vld [vmem:[%s847 + $0x2] sm:$0x7f]
        %v1413 = vld [vmem:[%s847 + $0x72] sm:$0x7f]
        %v1414 = vmul.f32 %v1412, %v738
        %v1415 = vmul.f32 %v1413, %v738
        %v1416 = vadd.f32 %v1410, %v1414
        %v1417 = vadd.f32 %v1411, %v1415
        %v1418 = vld [vmem:[%s847 + $0x3] sm:$0x7f]
        %v1419 = vld [vmem:[%s847 + $0x73] sm:$0x7f]
        %v1420 = vmul.f32 %v1418, %v745
        %v1421 = vmul.f32 %v1419, %v745
        %v1422 = vadd.f32 %v1416, %v1420
        %v1423 = vadd.f32 %v1417, %v1421
        %v1424 = vld [vmem:[%s847 + $0x4] sm:$0x7f]
        %v1425 = vld [vmem:[%s847 + $0x74] sm:$0x7f]
        %v1426 = vmul.f32 %v1424, %v752
        %v1427 = vmul.f32 %v1425, %v752
        %v1428 = vadd.f32 %v1422, %v1426
        %v1429 = vadd.f32 %v1423, %v1427
        %v1430 = vld [vmem:[%s1023] sm:$0x7f]
        %v1431 = vld [vmem:[%s1023 + $0x70] sm:$0x7f]
        %v1432 = vmul.f32 %v1430, %v573
        %v1433 = vmul.f32 %v1431, %v573
        %v1434 = vadd.f32 %v1428, %v1432
        %v1435 = vadd.f32 %v1429, %v1433
        %v1436 = vld [vmem:[%s1023 + $0x1] sm:$0x7f]
        %v1437 = vld [vmem:[%s1023 + $0x71] sm:$0x7f]
        %v1438 = vmul.f32 %v1436, %v580
        %v1439 = vmul.f32 %v1437, %v580
        %v1440 = vadd.f32 %v1434, %v1438
        %v1441 = vadd.f32 %v1435, %v1439
        %v1442 = vld [vmem:[%s1023 + $0x2] sm:$0x7f]
        %v1443 = vld [vmem:[%s1023 + $0x72] sm:$0x7f]
        %v1444 = vmul.f32 %v1442, %v587
        %v1445 = vmul.f32 %v1443, %v587
        %v1446 = vadd.f32 %v1440, %v1444
        %v1447 = vadd.f32 %v1441, %v1445
        %v1448 = vld [vmem:[%s1023 + $0x3] sm:$0x7f]
        %v1449 = vld [vmem:[%s1023 + $0x73] sm:$0x7f]
        %v1450 = vmul.f32 %v1448, %v594
        %v1451 = vmul.f32 %v1449, %v594
        %v1452 = vadd.f32 %v1446, %v1450
        %v1453 = vadd.f32 %v1447, %v1451
        %v1454 = vld [vmem:[%s1023 + $0x4] sm:$0x7f]
        %v1455 = vld [vmem:[%s1023 + $0x74] sm:$0x7f]
        %v1456 = vmul.f32 %v1454, %v601
        %v1457 = vmul.f32 %v1455, %v601
        %v1458 = vadd.f32 %v1452, %v1456
        %v1459 = vadd.f32 %v1453, %v1457
        %v1460 = vld [vmem:[%s1199] sm:$0x7f]
        %v1461 = vld [vmem:[%s1199 + $0x70] sm:$0x7f]
        %v1462 = vmul.f32 %v1460, %v441
        %v1463 = vmul.f32 %v1461, %v441
        %v1464 = vadd.f32 %v1458, %v1462
        %v1465 = vadd.f32 %v1459, %v1463
        %v1466 = vld [vmem:[%s1199 + $0x1] sm:$0x7f]
        %v1467 = vld [vmem:[%s1199 + $0x71] sm:$0x7f]
        %v1468 = vmul.f32 %v1466, %v448
        %v1469 = vmul.f32 %v1467, %v448
        %v1470 = vadd.f32 %v1464, %v1468
        %v1471 = vadd.f32 %v1465, %v1469
        %v1472 = vld [vmem:[%s1199 + $0x2] sm:$0x7f]
        %v1473 = vld [vmem:[%s1199 + $0x72] sm:$0x7f]
        %v1474 = vmul.f32 %v1472, %v455
        %v1475 = vmul.f32 %v1473, %v455
        %v1476 = vadd.f32 %v1470, %v1474
        %v1477 = vadd.f32 %v1471, %v1475
        %v1478 = vld [vmem:[%s1199 + $0x3] sm:$0x7f]
        %v1479 = vld [vmem:[%s1199 + $0x73] sm:$0x7f]
        %v1480 = vmul.f32 %v1478, %v462
        %v1481 = vmul.f32 %v1479, %v462
        %v1482 = vadd.f32 %v1476, %v1480
        %v1483 = vadd.f32 %v1477, %v1481
        %v1484 = vld [vmem:[%s1199 + $0x4] sm:$0x7f]
        %v1485 = vld [vmem:[%s1199 + $0x74] sm:$0x7f]
        %v1486 = vmul.f32 %v1484, %v469
        %v1487 = vmul.f32 %v1485, %v469
        %v1488 = vadd.f32 %v1482, %v1486
        %v1489 = vadd.f32 %v1483, %v1487
        %s1490 = scalar_lea.vmem [#allocation3], 48
        %1491 = vst [vmem:[%s1490] sm:$0x7f] %v1488
        %1492 = vst [vmem:[%s1490 + $0x38] sm:$0x7f] %v1489
        %v1493 = vsel %vm548, %v1488, 0.0
        %v1494 = vsel %vm548, %v1489, 0.0
        %v1495 = vadd.f32 %v1493, %v1494
        %v1496 = vrot.slane %v1495, 4
        %v1497 = vadd.f32 %v1495, %v1496
        %v1498 = vrot.slane %v1497, 2
        %v1499 = vadd.f32 %v1497, %v1498
        %v1500 = vrot.slane %v1499, 1
        %v1501 = vadd.f32 %v1499, %v1500
        %v1502 = vadd.f32 %v1387, %v1501
        %v1503 = vmul.f32 %v1488, %v1488
        %v1504 = vmul.f32 %v1489, %v1489
        %v1505 = vsel %vm548, %v1503, 0.0
        %v1506 = vsel %vm548, %v1504, 0.0
        %v1507 = vadd.f32 %v1505, %v1506
        %v1508 = vrot.slane %v1507, 4
        %v1509 = vadd.f32 %v1507, %v1508
        %v1510 = vrot.slane %v1509, 2
        %v1511 = vadd.f32 %v1509, %v1510
        %v1512 = vrot.slane %v1511, 1
        %v1513 = vadd.f32 %v1511, %v1512
        %v1514 = vadd.f32 %v1399, %v1513
        %v1515 = vrcp.pop 98.0
        %v1516 = vmul.f32 98.0, %v1515
        %v1517 = vsub.f32 1.0, %v1516
        %v1518 = vmul.f32 %v1515, %v1517
        %v1519 = vadd.f32 %v1515, %v1518
        %vm1520 = vweird.f32 %v1515
        %v1521 = vsel %vm1520, %v1515, %v1519
        %v1522 = vmul.f32 %v1502, %v1521
        %v1523 = vmul.f32 %v1514, %v1521
        %v1524 = vmul.f32 %v1522, %v1522
        %v1525 = vsub.f32 %v1523, %v1524
        %v1526 = vmax.f32 %v1525, 0.0
        %v1527 = vadd.f32 %v1526, 0.001
        %v1528 = vrsqrt.pop %v1527
        %v1529 = vmul.f32 %v1528, %v1527
        %v1530 = vmul.f32 %v1529, %v1528
        %v1531 = vmul.f32 0.5, %v1530
        %v1532 = vsub.f32 1.5, %v1531
        %v1533 = vmul.f32 %v1528, %v1532
        %vm1534 = vweird.f32 %v1527
        %vm1535 = vweird.f32 %v1528
        %vm1536 = vmor %vm1534, %vm1535
        %v1537 = vsel %vm1536, %v1528, %v1533
        %v1538 = vld [vmem:[%s374] sm:$0x1]
        %v1539 = vld [vmem:[%s377] sm:$0x1]
        %v1540 = vmul.f32 %v1538, %v1537
        %v1541 = vmul.f32 %v1522, %v1540
        %v1542 = vsub.f32 %v1539, %v1541
        %v1543 = vld [vmem:[#allocation3] sm:$0x7f]
        %v1544 = vld [vmem:[#allocation3 + $0x8] sm:$0x7f]
        %v1545 = vld [vmem:[#allocation3 + $0x10] sm:$0x7f]
        %v1546 = vld [vmem:[#allocation3 + $0x18] sm:$0x7f]
        %v1547 = vld [vmem:[#allocation3 + $0x20] sm:$0x7f]
        %v1548 = vld [vmem:[#allocation3 + $0x28] sm:$0x7f]
        %v1549 = vld [vmem:[#allocation3 + $0x30] sm:$0x7f]
        %v1550 = vld [vmem:[#allocation3 + $0x38] sm:$0x7f]
        %v1551 = vld [vmem:[#allocation3 + $0x40] sm:$0x7f]
        %v1552 = vld [vmem:[#allocation3 + $0x48] sm:$0x7f]
        %v1553 = vld [vmem:[#allocation3 + $0x50] sm:$0x7f]
        %v1554 = vld [vmem:[#allocation3 + $0x58] sm:$0x7f]
        %v1555 = vld [vmem:[#allocation3 + $0x60] sm:$0x7f]
        %v1556 = vld [vmem:[#allocation3 + $0x68] sm:$0x7f]
        %v1558 = vperm.slane %v1540, 0
        %v1560 = vmul.f32 %v1543, %v1558
        %v1561 = vmul.f32 %v1544, %v1558
        %v1562 = vmul.f32 %v1545, %v1558
        %v1563 = vmul.f32 %v1546, %v1558
        %v1564 = vmul.f32 %v1547, %v1558
        %v1565 = vmul.f32 %v1548, %v1558
        %v1566 = vmul.f32 %v1549, %v1558
        %v1567 = vmul.f32 %v1550, %v1558
        %v1568 = vmul.f32 %v1551, %v1558
        %v1569 = vmul.f32 %v1552, %v1558
        %v1570 = vmul.f32 %v1553, %v1558
        %v1571 = vmul.f32 %v1554, %v1558
        %v1572 = vmul.f32 %v1555, %v1558
        %v1573 = vmul.f32 %v1556, %v1558
        %v1575 = vperm.slane %v1542, 0
        %v1577 = vadd.f32 %v1560, %v1575
        %v1578 = vadd.f32 %v1561, %v1575
        %v1579 = vadd.f32 %v1562, %v1575
        %v1580 = vadd.f32 %v1563, %v1575
        %v1581 = vadd.f32 %v1564, %v1575
        %v1582 = vadd.f32 %v1565, %v1575
        %v1583 = vadd.f32 %v1566, %v1575
        %v1584 = vadd.f32 %v1567, %v1575
        %v1585 = vadd.f32 %v1568, %v1575
        %v1586 = vadd.f32 %v1569, %v1575
        %v1587 = vadd.f32 %v1570, %v1575
        %v1588 = vadd.f32 %v1571, %v1575
        %v1589 = vadd.f32 %v1572, %v1575
        %v1590 = vadd.f32 %v1573, %v1575
        %1591 = vst [vmem:[%s371] sm:$0x7f] %v1577
        %1592 = vst [vmem:[%s371 + $0x8] sm:$0x7f] %v1578
        %1593 = vst [vmem:[%s371 + $0x10] sm:$0x7f] %v1579
        %1594 = vst [vmem:[%s371 + $0x18] sm:$0x7f] %v1580
        %1595 = vst [vmem:[%s371 + $0x20] sm:$0x7f] %v1581
        %1596 = vst [vmem:[%s371 + $0x28] sm:$0x7f] %v1582
        %1597 = vst [vmem:[%s371 + $0x30] sm:$0x7f] %v1583
        %1598 = vst [vmem:[%s371 + $0x38] sm:$0x7f] %v1584
        %1599 = vst [vmem:[%s371 + $0x40] sm:$0x7f] %v1585
        %1600 = vst [vmem:[%s371 + $0x48] sm:$0x7f] %v1586
        %1601 = vst [vmem:[%s371 + $0x50] sm:$0x7f] %v1587
        %1602 = vst [vmem:[%s371 + $0x58] sm:$0x7f] %v1588
        %1603 = vst [vmem:[%s371 + $0x60] sm:$0x7f] %v1589
        %1604 = vst [vmem:[%s371 + $0x68] sm:$0x7f] %v1590
        %s1605 = sand.u32 %s127, 1
        %s1606 = sand.u32 %s127, 1
        %s1607 = smul.addr %s1606, 112
        %s1608 = scalar_lea.vmem [#allocation6], %s1607
        // Predicated region
        $region113: #{tpu_custom_call.1} parent=103 // pred_check
          %p1609 = pneg %p137
        $region114: #{tpu_custom_call.1} parent=103 // pred_check_branch
          %1611 = sbr.rel (%p1609) target = $region116
        $region115: #{tpu_custom_call.1} parent=103 // pred_region
          %s1612 = smul.addr %s15, 8
          %s1613 = scalar_lea.vmem %s4, %s1612
          // Predicated region
          $region117: #{tpu_custom_call.1} parent=115 // pred_check
            _
          $region118: #{tpu_custom_call.1} parent=115 // pred_check_branch
            %1615 = sbr.rel (0) target = $region120
          $region119: #{tpu_custom_call.1} parent=115 // pred_region
            // Predicated region
            $region121: #{tpu_custom_call.1} parent=119 // pred_check
              _
            $region122: #{tpu_custom_call.1} parent=119 // pred_check_branch
              %1617 = sbr.rel (0) target = $region124
            $region123: #{tpu_custom_call.1} parent=119 // pred_region
              // Predicated region
              $region136: #{tpu_custom_call.1} parent=123 // pred_check
                _
              $region137: #{tpu_custom_call.1} parent=123 // pred_check_branch
                %1659 = sbr.rel (0) target = $region139
              $region138: #{tpu_custom_call.1} parent=123 // pred_region
                loop: start=0, step=1, limit=1
                $region140: #{tpu_custom_call.1} parent=138 // loop_pre_header
                  _
                $region141: #{tpu_custom_call.1} parent=138 // loop_header
                  %s1661 = sphi 0, %s1665
                  %p1662 = scmp.ge.s32.totalorder %s1661, 1
                  %s1666 = sphi %s1608, %s1608
                  %s1667 = sphi %s1613, %s1613
                $region142: #{tpu_custom_call.1} parent=138 // loop_header_branch
                  %1664 = sbr.rel (%p1662) target = $region146
                $region143: #{tpu_custom_call.1} parent=138 // loop_body
                  %v1668 = vld [vmem:[%s1666] sm:$0xff]
                  %1669 = vst [vmem:[%s1667] sm:$0xff] %v1668
                  %v1670 = vld [vmem:[%s1666 + $0x8] sm:$0xff]
                  %1671 = vst [vmem:[%s1667 + $0x10] sm:$0xff] %v1670
                  %v1672 = vld [vmem:[%s1666 + $0x10] sm:$0xff]
                  %1673 = vst [vmem:[%s1667 + $0x20] sm:$0xff] %v1672
                  %v1674 = vld [vmem:[%s1666 + $0x18] sm:$0xff]
                  %1675 = vst [vmem:[%s1667 + $0x30] sm:$0xff] %v1674
                  %v1676 = vld [vmem:[%s1666 + $0x20] sm:$0xff]
                  %1677 = vst [vmem:[%s1667 + $0x40] sm:$0xff] %v1676
                  %v1678 = vld [vmem:[%s1666 + $0x28] sm:$0xff]
                  %1679 = vst [vmem:[%s1667 + $0x50] sm:$0xff] %v1678
                  %v1680 = vld [vmem:[%s1666 + $0x30] sm:$0xff]
                  %1681 = vst [vmem:[%s1667 + $0x60] sm:$0xff] %v1680
                  %v1682 = vld [vmem:[%s1666 + $0x38] sm:$0xff]
                  %1683 = vst [vmem:[%s1667 + $0x70] sm:$0xff] %v1682
                  %v1684 = vld [vmem:[%s1666 + $0x40] sm:$0xff]
                  %1685 = vst [vmem:[%s1667 + $0x80] sm:$0xff] %v1684
                  %v1686 = vld [vmem:[%s1666 + $0x48] sm:$0xff]
                  %1687 = vst [vmem:[%s1667 + $0x90] sm:$0xff] %v1686
                  %v1688 = vld [vmem:[%s1666 + $0x50] sm:$0xff]
                  %1689 = vst [vmem:[%s1667 + $0xa0] sm:$0xff] %v1688
                  %v1690 = vld [vmem:[%s1666 + $0x58] sm:$0xff]
                  %1691 = vst [vmem:[%s1667 + $0xb0] sm:$0xff] %v1690
                  %v1692 = vld [vmem:[%s1666 + $0x60] sm:$0xff]
                  %1693 = vst [vmem:[%s1667 + $0xc0] sm:$0xff] %v1692
                  %v1694 = vld [vmem:[%s1666 + $0x68] sm:$0xff]
                  %1695 = vst [vmem:[%s1667 + $0xd0] sm:$0xff] %v1694
                $region144: #{tpu_custom_call.1} parent=138 // loop_footer
                  %s1665 = sadd.s32 1, %s1661
                $region145: #{tpu_custom_call.1} parent=138 // loop_footer_branch
                  %1660 = sbr.rel target = $region141
                $region146: #{tpu_custom_call.1} parent=138 // loop_exit
                  _
              $region139: #{tpu_custom_call.1} parent=123 // pred_fallthru
                _
              // Predicated region
              $region147: #{tpu_custom_call.1} parent=123 // pred_check
                _
              $region148: #{tpu_custom_call.1} parent=123 // pred_check_branch
                %1697 = sbr.rel target = $region150
              $region149: #{tpu_custom_call.1} parent=123 // pred_region
                _
              $region150: #{tpu_custom_call.1} parent=123 // pred_fallthru
                _
            $region124: #{tpu_custom_call.1} parent=119 // pred_fallthru
              _
            // Predicated region
            $region125: #{tpu_custom_call.1} parent=119 // pred_check
              _
            $region126: #{tpu_custom_call.1} parent=119 // pred_check_branch
              %1619 = sbr.rel target = $region128
            $region127: #{tpu_custom_call.1} parent=119 // pred_region
              %s1621 = ssub.s32 256, 1
              loop: start=0, step=1, limit=1
              $region129: #{tpu_custom_call.1} parent=127 // loop_pre_header
                _
              $region130: #{tpu_custom_call.1} parent=127 // loop_header
                %s1623 = sphi 0, %s1627
                %p1624 = scmp.ge.s32.totalorder %s1623, 1
                %s1628 = sphi %s1608, %s1608
                %s1629 = sphi %s1613, %s1613
              $region131: #{tpu_custom_call.1} parent=127 // loop_header_branch
                %1626 = sbr.rel (%p1624) target = $region135
              $region132: #{tpu_custom_call.1} parent=127 // loop_body
                %v1630 = vld [vmem:[%s1628] sm:%s1621]
                %1631 = vst [vmem:[%s1629] sm:%s1621] %v1630
                %v1632 = vld [vmem:[%s1628 + $0x8] sm:%s1621]
                %1633 = vst [vmem:[%s1629 + $0x10] sm:%s1621] %v1632
                %v1634 = vld [vmem:[%s1628 + $0x10] sm:%s1621]
                %1635 = vst [vmem:[%s1629 + $0x20] sm:%s1621] %v1634
                %v1636 = vld [vmem:[%s1628 + $0x18] sm:%s1621]
                %1637 = vst [vmem:[%s1629 + $0x30] sm:%s1621] %v1636
                %v1638 = vld [vmem:[%s1628 + $0x20] sm:%s1621]
                %1639 = vst [vmem:[%s1629 + $0x40] sm:%s1621] %v1638
                %v1640 = vld [vmem:[%s1628 + $0x28] sm:%s1621]
                %1641 = vst [vmem:[%s1629 + $0x50] sm:%s1621] %v1640
                %v1642 = vld [vmem:[%s1628 + $0x30] sm:%s1621]
                %1643 = vst [vmem:[%s1629 + $0x60] sm:%s1621] %v1642
                %v1644 = vld [vmem:[%s1628 + $0x38] sm:%s1621]
                %1645 = vst [vmem:[%s1629 + $0x70] sm:%s1621] %v1644
                %v1646 = vld [vmem:[%s1628 + $0x40] sm:%s1621]
                %1647 = vst [vmem:[%s1629 + $0x80] sm:%s1621] %v1646
                %v1648 = vld [vmem:[%s1628 + $0x48] sm:%s1621]
                %1649 = vst [vmem:[%s1629 + $0x90] sm:%s1621] %v1648
                %v1650 = vld [vmem:[%s1628 + $0x50] sm:%s1621]
                %1651 = vst [vmem:[%s1629 + $0xa0] sm:%s1621] %v1650
                %v1652 = vld [vmem:[%s1628 + $0x58] sm:%s1621]
                %1653 = vst [vmem:[%s1629 + $0xb0] sm:%s1621] %v1652
                %v1654 = vld [vmem:[%s1628 + $0x60] sm:%s1621]
                %1655 = vst [vmem:[%s1629 + $0xc0] sm:%s1621] %v1654
                %v1656 = vld [vmem:[%s1628 + $0x68] sm:%s1621]
                %1657 = vst [vmem:[%s1629 + $0xd0] sm:%s1621] %v1656
              $region133: #{tpu_custom_call.1} parent=127 // loop_footer
                %s1627 = sadd.s32 1, %s1623
              $region134: #{tpu_custom_call.1} parent=127 // loop_footer_branch
                %1622 = sbr.rel target = $region130
              $region135: #{tpu_custom_call.1} parent=127 // loop_exit
                _
            $region128: #{tpu_custom_call.1} parent=119 // pred_fallthru
              _
          $region120: #{tpu_custom_call.1} parent=115 // pred_fallthru
            _
          %1698 = vnop
        $region116: #{tpu_custom_call.1} parent=103 // pred_fallthru
          _
      $region104: #{tpu_custom_call.1} parent=5 // pred_fallthru
        _
      %p1699 = scmp.le.s32.totalorder 2, %s10
      // Predicated region
      $region151: #{tpu_custom_call.1} parent=5 // pred_check
        %p1700 = pneg %p1699
      $region152: #{tpu_custom_call.1} parent=5 // pred_check_branch
        %1702 = sbr.rel (%p1700) target = $region154
      $region153: #{tpu_custom_call.1} parent=5 // pred_region
        %s1703 = ssub.s32 %s10, 2
        // Predicated region
        $region155: #{tpu_custom_call.1} parent=153 // pred_check
          %p1704 = pneg %p143
        $region156: #{tpu_custom_call.1} parent=153 // pred_check_branch
          %1706 = sbr.rel (%p1704) target = $region158
        $region157: #{tpu_custom_call.1} parent=153 // pred_region
          %s1707 = sand.u32 %s128, 1
          %s1708 = sand.u32 %s128, 1
          %s1709 = smul.addr %s1708, 112
          %s1710 = scalar_lea.vmem [#allocation6], %s1709
        $region158: #{tpu_custom_call.1} parent=153 // pred_fallthru
          _
      $region154: #{tpu_custom_call.1} parent=5 // pred_fallthru
        _
    $region6: #{tpu_custom_call.1} parent=1 // loop_footer
      %s14 = sadd.s32 1, %s10
    $region7: #{tpu_custom_call.1} parent=1 // loop_footer_branch
      %9 = sbr.rel target = $region3
    $region8: #{tpu_custom_call.1} parent=1 // loop_exit
      _

</llo_original>
